<compile_context>
chip_gen: v6e
topology: v6e:2x2x1
jax: 0.10.0
libtpu: 0.0.40
codegen_flags: <defaults>
</compile_context>

<pallas_src>
import functools

import numpy as np
import jax
import jax.numpy as jnp
from jax import lax
from jax.experimental import pallas as pl
from jax.experimental.pallas import tpu as pltpu


# ----------------------------------------------------------------------------
# Pallas kernel: full conv2d (stride 1) for one batch element, packed layout.
#
#   x_ref  : VMEM f32[1, Cin, H, W]          raw (unpadded) input planes
#   wl_ref : VMEM f32[Cin*K*K, Cout*Wp]      weight lane-table:
#            wl[(i*K+kh)*K+kw, o*Wp + c] = weight[o, i, kh, kw]  (c in [0,Wp))
#   o_ref  : VMEM f32[1, Ho, Cout*Wo]        packed output, lane-dense
# ----------------------------------------------------------------------------
def _conv2d_packed_kernel(x_ref, wl_ref, o_ref, *, cin, cout, ksize, H, W, pad):
    f32 = jnp.float32
    Hp, Wp = H + 2 * pad, W + 2 * pad
    Ho, Wo = Hp - ksize + 1, Wp - ksize + 1
    LW = cout * Wp                      # packed lane width (chunk stride = Wp)

    # One partial-sum accumulator per kw offset.  S[kw][y, o*Wp + c] ends up
    # holding sum_{i,kh} weight[o,i,kh,kw] * xpad[i, y+kh, c]; the kw lane
    # shift is applied only in the epilogue extraction below.
    S = [jnp.zeros((Ho, LW), f32) for _ in range(ksize)]

    for i in range(cin):
        # Build the zero-padded plane for channel i, tiled `cout` times along
        # the lane axis, entirely in registers (in-kernel padding, no jnp.pad).
        xpl = x_ref[0, i, :, :]                                     # (H, W)
        if pad > 0:
            zc = jnp.zeros((H, pad), f32)
            chunk = jnp.concatenate([zc, xpl, zc], axis=1)          # (H, Wp)
        else:
            chunk = xpl
        row = jnp.concatenate([chunk] * cout, axis=1)               # (H, LW)
        if pad > 0:
            zr = jnp.zeros((pad, LW), f32)
            plane = jnp.concatenate([zr, row, zr], axis=0)          # (Hp, LW)
        else:
            plane = row

        for kh in range(ksize):
            # One aligned row block per (i, kh); reused for all kw taps.
            xrow = plane[kh:kh + Ho, :]                             # (Ho, LW)
            for kw in range(ksize):
                t = (i * ksize + kh) * ksize + kw
                wv = wl_ref[t:t + 1, :]                             # (1, LW)
                S[kw] = S[kw] + xrow * wv                           # VPU FMA

    # Epilogue: fold the kw lane shift into small static slices and repack to
    # a lane-dense (Ho, cout*Wo) block (chunk stride Wp -> Wo).
    pieces = []
    for o in range(cout):
        p_o = S[0][:, o * Wp: o * Wp + Wo]
        for kw in range(1, ksize):
            p_o = p_o + S[kw][:, o * Wp + kw: o * Wp + kw + Wo]
        pieces.append(p_o)
    o_ref[0, :, :] = jnp.concatenate(pieces, axis=1)                # (Ho, cout*Wo)


# ----------------------------------------------------------------------------
# Wrapper
# ----------------------------------------------------------------------------
def gabor_layer_forward(x, weight, *, stride=1, padding=0):
    """x: f32[N, Cin, H, W], weight: f32[Cout, Cin, K, K] -> f32[N, Cout, Ho, Wo]."""
    if stride != 1:
        # TODO(synk): stride > 1 not implemented in the Pallas path (module default is 1).
        raise NotImplementedError("Pallas GaborLayer kernel supports stride=1 only.")

    N, Cin, H, W = x.shape
    Cout, Cin2, K, K2 = weight.shape
    assert Cin == Cin2 and K == K2

    p = padding
    Hp, Wp = H + 2 * p, W + 2 * p
    Ho, Wo = Hp - K + 1, Wp - K + 1
    LW = Cout * Wp

    # Weight lane-table (tiny parameter glue in plain JAX):
    #   wl[(i*K+kh)*K+kw, o*Wp + c] = weight[o, i, kh, kw]   for c in [0, Wp)
    wl = jnp.repeat(
        jnp.transpose(weight, (1, 2, 3, 0)).reshape(Cin * K * K, Cout),
        Wp, axis=-1).astype(jnp.float32)                            # (Cin*K*K, LW)

    kern = functools.partial(_conv2d_packed_kernel,
                             cin=Cin, cout=Cout, ksize=K, H=H, W=W, pad=p)

    out_packed = pl.pallas_call(
        kern,
        out_shape=jax.ShapeDtypeStruct((N, Ho, Cout * Wo), jnp.float32),
        grid=(N,),                                   # fused grid: one step per batch element
        in_specs=[
            pl.BlockSpec((1, Cin, H, W), lambda n: (n, 0, 0, 0)),   # raw input planes
            pl.BlockSpec((Cin * K * K, LW), lambda n: (0, 0)),      # weight lane-table (grid-invariant)
        ],
        out_specs=pl.BlockSpec((1, Ho, Cout * Wo), lambda n: (n, 0, 0)),  # lane-dense packed output
        compiler_params=pltpu.CompilerParams(
            dimension_semantics=("parallel",)),      # lets v7x split the batch across its 2 TCs
    )(x.astype(jnp.float32), wl)

    # Layout plumbing back to NCHW: (N, Ho, Cout*Wo) -> (N, Cout, Ho, Wo).
    return out_packed.reshape(N, Ho, Cout, Wo).transpose(0, 2, 1, 3)


# ----------------------------------------------------------------------------
# Reference (pure JAX) conv2d for a sanity check
# ----------------------------------------------------------------------------
def reference_forward(x, weight, stride=1, padding=0):
    return lax.conv_general_dilated(
        x, weight,
        window_strides=(stride, stride),
        padding=[(padding, padding), (padding, padding)],
        dimension_numbers=("NCHW", "OIHW", "NCHW"),
        precision=lax.Precision.HIGHEST)


if __name__ == "__main__":
    # GaborLayer(in_channels=4, out_channels=8, kernel_size=5, stride=1, padding=2)
    IN_CHANNELS, OUT_CHANNELS, KSIZE, PAD = 4, 8, 5, 2

    key = jax.random.PRNGKey(0)
    k_w, k_x = jax.random.split(key)

    # reset_parameters(): weight ~ U(-0.1, 0.1)
    weight = jax.random.uniform(k_w, (OUT_CHANNELS, IN_CHANNELS, KSIZE, KSIZE),
                                jnp.float32, -0.1, 0.1)
    x = jax.random.normal(k_x, (2, IN_CHANNELS, 16, 16), jnp.float32)

    fwd = jax.jit(gabor_layer_forward, static_argnames=("stride", "padding"))
    out = jax.block_until_ready(fwd(x, weight, stride=1, padding=PAD))

    ref = jax.block_until_ready(reference_forward(x, weight, stride=1, padding=PAD))

    assert out.shape == ref.shape == (2, OUT_CHANNELS, 16, 16)
    np.testing.assert_allclose(np.asarray(out), np.asarray(ref), rtol=1e-5, atol=1e-5)

    print("KERNEL_OK")
</pallas_src>

<mosaic_0001>
module attributes {stable_mosaic.version = 11 : i64} {
  func.func @_conv2d_packed_kernel(%arg0: i32, %arg1: memref<1x4x16x16xf32, #tpu.memory_space<vmem>>, %arg2: memref<100x160xf32, #tpu.memory_space<vmem>>, %arg3: memref<1x16x128xf32, #tpu.memory_space<vmem>>) attributes {dimension_semantics = [#tpu.dimension_semantics<parallel>], iteration_bounds = array<i64: 2>, scalar_prefetch = 0 : i64, scratch_operands = 0 : i64, tpu.core_type = #tpu.core_type<tc>, window_params = [{transform_indices = @transform_0, window_bounds = array<i64: 1, 4, 16, 16>}, {pipeline_mode = #tpu.pipeline_mode<synchronous>, transform_indices = @transform_1, window_bounds = array<i64: 100, 160>}, {transform_indices = @transform_2, window_bounds = array<i64: 1, 16, 128>}]} {
    %cst = arith.constant 0.000000e+00 : f32
    %0 = vector.broadcast %cst : f32 to vector<16x160xf32>
    %cst_0 = arith.constant 0.000000e+00 : f32
    %1 = vector.broadcast %cst_0 : f32 to vector<16x160xf32>
    %cst_1 = arith.constant 0.000000e+00 : f32
    %2 = vector.broadcast %cst_1 : f32 to vector<16x160xf32>
    %cst_2 = arith.constant 0.000000e+00 : f32
    %3 = vector.broadcast %cst_2 : f32 to vector<16x160xf32>
    %cst_3 = arith.constant 0.000000e+00 : f32
    %4 = vector.broadcast %cst_3 : f32 to vector<16x160xf32>
    %c0 = arith.constant 0 : index
    %c0_4 = arith.constant 0 : index
    %c0_5 = arith.constant 0 : index
    %c0_6 = arith.constant 0 : index
    %5 = vector.load %arg1[%c0, %c0_4, %c0_5, %c0_6] : memref<1x4x16x16xf32, #tpu.memory_space<vmem>>, vector<1x1x16x16xf32>
    %6 = vector.shape_cast %5 : vector<1x1x16x16xf32> to vector<16x16xf32>
    %cst_7 = arith.constant 0.000000e+00 : f32
    %7 = vector.broadcast %cst_7 : f32 to vector<16x2xf32>
    %8 = tpu.concatenate %7, %6, %7 in 1 : vector<16x2xf32>, vector<16x16xf32>, vector<16x2xf32> -> vector<16x20xf32>
    %9 = tpu.concatenate %8, %8, %8, %8, %8, %8, %8, %8 in 1 : vector<16x20xf32>, vector<16x20xf32>, vector<16x20xf32>, vector<16x20xf32>, vector<16x20xf32>, vector<16x20xf32>, vector<16x20xf32>, vector<16x20xf32> -> vector<16x160xf32>
    %cst_8 = arith.constant 0.000000e+00 : f32
    %10 = vector.broadcast %cst_8 : f32 to vector<2x160xf32>
    %11 = tpu.concatenate %10, %9, %10 in 0 : vector<2x160xf32>, vector<16x160xf32>, vector<2x160xf32> -> vector<20x160xf32>
    %12 = vector.extract_strided_slice %11 {offsets = [0, 0], sizes = [16, 160], strides = [1, 1]} : vector<20x160xf32> to vector<16x160xf32>
    %c0_9 = arith.constant 0 : index
    %c0_10 = arith.constant 0 : index
    %13 = vector.load %arg2[%c0_9, %c0_10] : memref<100x160xf32, #tpu.memory_space<vmem>>, vector<1x160xf32>
    %14 = vector.broadcast %13 : vector<1x160xf32> to vector<16x160xf32>
    %15 = arith.mulf %12, %14 : vector<16x160xf32>
    %16 = arith.addf %0, %15 : vector<16x160xf32>
    %c1 = arith.constant 1 : index
    %c0_11 = arith.constant 0 : index
    %17 = vector.load %arg2[%c1, %c0_11] : memref<100x160xf32, #tpu.memory_space<vmem>>, vector<1x160xf32>
    %18 = vector.broadcast %17 : vector<1x160xf32> to vector<16x160xf32>
    %19 = arith.mulf %12, %18 : vector<16x160xf32>
    %20 = arith.addf %1, %19 : vector<16x160xf32>
    %c2 = arith.constant 2 : index
    %c0_12 = arith.constant 0 : index
    %21 = vector.load %arg2[%c2, %c0_12] : memref<100x160xf32, #tpu.memory_space<vmem>>, vector<1x160xf32>
    %22 = vector.broadcast %21 : vector<1x160xf32> to vector<16x160xf32>
    %23 = arith.mulf %12, %22 : vector<16x160xf32>
    %24 = arith.addf %2, %23 : vector<16x160xf32>
    %c3 = arith.constant 3 : index
    %c0_13 = arith.constant 0 : index
    %25 = vector.load %arg2[%c3, %c0_13] : memref<100x160xf32, #tpu.memory_space<vmem>>, vector<1x160xf32>
    %26 = vector.broadcast %25 : vector<1x160xf32> to vector<16x160xf32>
    %27 = arith.mulf %12, %26 : vector<16x160xf32>
    %28 = arith.addf %3, %27 : vector<16x160xf32>
    %c4 = arith.constant 4 : index
    %c0_14 = arith.constant 0 : index
    %29 = vector.load %arg2[%c4, %c0_14] : memref<100x160xf32, #tpu.memory_space<vmem>>, vector<1x160xf32>
    %30 = vector.broadcast %29 : vector<1x160xf32> to vector<16x160xf32>
    %31 = arith.mulf %12, %30 : vector<16x160xf32>
    %32 = arith.addf %4, %31 : vector<16x160xf32>
    %33 = vector.extract_strided_slice %11 {offsets = [1, 0], sizes = [16, 160], strides = [1, 1]} : vector<20x160xf32> to vector<16x160xf32>
    %c5 = arith.constant 5 : index
    %c0_15 = arith.constant 0 : index
    %34 = vector.load %arg2[%c5, %c0_15] : memref<100x160xf32, #tpu.memory_space<vmem>>, vector<1x160xf32>
    %35 = vector.broadcast %34 : vector<1x160xf32> to vector<16x160xf32>
    %36 = arith.mulf %33, %35 : vector<16x160xf32>
    %37 = arith.addf %16, %36 : vector<16x160xf32>
    %c6 = arith.constant 6 : index
    %c0_16 = arith.constant 0 : index
    %38 = vector.load %arg2[%c6, %c0_16] : memref<100x160xf32, #tpu.memory_space<vmem>>, vector<1x160xf32>
    %39 = vector.broadcast %38 : vector<1x160xf32> to vector<16x160xf32>
    %40 = arith.mulf %33, %39 : vector<16x160xf32>
    %41 = arith.addf %20, %40 : vector<16x160xf32>
    %c7 = arith.constant 7 : index
    %c0_17 = arith.constant 0 : index
    %42 = vector.load %arg2[%c7, %c0_17] : memref<100x160xf32, #tpu.memory_space<vmem>>, vector<1x160xf32>
    %43 = vector.broadcast %42 : vector<1x160xf32> to vector<16x160xf32>
    %44 = arith.mulf %33, %43 : vector<16x160xf32>
    %45 = arith.addf %24, %44 : vector<16x160xf32>
    %c8 = arith.constant 8 : index
    %c0_18 = arith.constant 0 : index
    %46 = vector.load %arg2[%c8, %c0_18] : memref<100x160xf32, #tpu.memory_space<vmem>>, vector<1x160xf32>
    %47 = vector.broadcast %46 : vector<1x160xf32> to vector<16x160xf32>
    %48 = arith.mulf %33, %47 : vector<16x160xf32>
    %49 = arith.addf %28, %48 : vector<16x160xf32>
    %c9 = arith.constant 9 : index
    %c0_19 = arith.constant 0 : index
    %50 = vector.load %arg2[%c9, %c0_19] : memref<100x160xf32, #tpu.memory_space<vmem>>, vector<1x160xf32>
    %51 = vector.broadcast %50 : vector<1x160xf32> to vector<16x160xf32>
    %52 = arith.mulf %33, %51 : vector<16x160xf32>
    %53 = arith.addf %32, %52 : vector<16x160xf32>
    %54 = vector.extract_strided_slice %11 {offsets = [2, 0], sizes = [16, 160], strides = [1, 1]} : vector<20x160xf32> to vector<16x160xf32>
    %c10 = arith.constant 10 : index
    %c0_20 = arith.constant 0 : index
    %55 = vector.load %arg2[%c10, %c0_20] : memref<100x160xf32, #tpu.memory_space<vmem>>, vector<1x160xf32>
    %56 = vector.broadcast %55 : vector<1x160xf32> to vector<16x160xf32>
    %57 = arith.mulf %54, %56 : vector<16x160xf32>
    %58 = arith.addf %37, %57 : vector<16x160xf32>
    %c11 = arith.constant 11 : index
    %c0_21 = arith.constant 0 : index
    %59 = vector.load %arg2[%c11, %c0_21] : memref<100x160xf32, #tpu.memory_space<vmem>>, vector<1x160xf32>
    %60 = vector.broadcast %59 : vector<1x160xf32> to vector<16x160xf32>
    %61 = arith.mulf %54, %60 : vector<16x160xf32>
    %62 = arith.addf %41, %61 : vector<16x160xf32>
    %c12 = arith.constant 12 : index
    %c0_22 = arith.constant 0 : index
    %63 = vector.load %arg2[%c12, %c0_22] : memref<100x160xf32, #tpu.memory_space<vmem>>, vector<1x160xf32>
    %64 = vector.broadcast %63 : vector<1x160xf32> to vector<16x160xf32>
    %65 = arith.mulf %54, %64 : vector<16x160xf32>
    %66 = arith.addf %45, %65 : vector<16x160xf32>
    %c13 = arith.constant 13 : index
    %c0_23 = arith.constant 0 : index
    %67 = vector.load %arg2[%c13, %c0_23] : memref<100x160xf32, #tpu.memory_space<vmem>>, vector<1x160xf32>
    %68 = vector.broadcast %67 : vector<1x160xf32> to vector<16x160xf32>
    %69 = arith.mulf %54, %68 : vector<16x160xf32>
    %70 = arith.addf %49, %69 : vector<16x160xf32>
    %c14 = arith.constant 14 : index
    %c0_24 = arith.constant 0 : index
    %71 = vector.load %arg2[%c14, %c0_24] : memref<100x160xf32, #tpu.memory_space<vmem>>, vector<1x160xf32>
    %72 = vector.broadcast %71 : vector<1x160xf32> to vector<16x160xf32>
    %73 = arith.mulf %54, %72 : vector<16x160xf32>
    %74 = arith.addf %53, %73 : vector<16x160xf32>
    %75 = vector.extract_strided_slice %11 {offsets = [3, 0], sizes = [16, 160], strides = [1, 1]} : vector<20x160xf32> to vector<16x160xf32>
    %c15 = arith.constant 15 : index
    %c0_25 = arith.constant 0 : index
    %76 = vector.load %arg2[%c15, %c0_25] : memref<100x160xf32, #tpu.memory_space<vmem>>, vector<1x160xf32>
    %77 = vector.broadcast %76 : vector<1x160xf32> to vector<16x160xf32>
    %78 = arith.mulf %75, %77 : vector<16x160xf32>
    %79 = arith.addf %58, %78 : vector<16x160xf32>
    %c16 = arith.constant 16 : index
    %c0_26 = arith.constant 0 : index
    %80 = vector.load %arg2[%c16, %c0_26] : memref<100x160xf32, #tpu.memory_space<vmem>>, vector<1x160xf32>
    %81 = vector.broadcast %80 : vector<1x160xf32> to vector<16x160xf32>
    %82 = arith.mulf %75, %81 : vector<16x160xf32>
    %83 = arith.addf %62, %82 : vector<16x160xf32>
    %c17 = arith.constant 17 : index
    %c0_27 = arith.constant 0 : index
    %84 = vector.load %arg2[%c17, %c0_27] : memref<100x160xf32, #tpu.memory_space<vmem>>, vector<1x160xf32>
    %85 = vector.broadcast %84 : vector<1x160xf32> to vector<16x160xf32>
    %86 = arith.mulf %75, %85 : vector<16x160xf32>
    %87 = arith.addf %66, %86 : vector<16x160xf32>
    %c18 = arith.constant 18 : index
    %c0_28 = arith.constant 0 : index
    %88 = vector.load %arg2[%c18, %c0_28] : memref<100x160xf32, #tpu.memory_space<vmem>>, vector<1x160xf32>
    %89 = vector.broadcast %88 : vector<1x160xf32> to vector<16x160xf32>
    %90 = arith.mulf %75, %89 : vector<16x160xf32>
    %91 = arith.addf %70, %90 : vector<16x160xf32>
    %c19 = arith.constant 19 : index
    %c0_29 = arith.constant 0 : index
    %92 = vector.load %arg2[%c19, %c0_29] : memref<100x160xf32, #tpu.memory_space<vmem>>, vector<1x160xf32>
    %93 = vector.broadcast %92 : vector<1x160xf32> to vector<16x160xf32>
    %94 = arith.mulf %75, %93 : vector<16x160xf32>
    %95 = arith.addf %74, %94 : vector<16x160xf32>
    %96 = vector.extract_strided_slice %11 {offsets = [4, 0], sizes = [16, 160], strides = [1, 1]} : vector<20x160xf32> to vector<16x160xf32>
    %c20 = arith.constant 20 : index
    %c0_30 = arith.constant 0 : index
    %97 = vector.load %arg2[%c20, %c0_30] : memref<100x160xf32, #tpu.memory_space<vmem>>, vector<1x160xf32>
    %98 = vector.broadcast %97 : vector<1x160xf32> to vector<16x160xf32>
    %99 = arith.mulf %96, %98 : vector<16x160xf32>
    %100 = arith.addf %79, %99 : vector<16x160xf32>
    %c21 = arith.constant 21 : index
    %c0_31 = arith.constant 0 : index
    %101 = vector.load %arg2[%c21, %c0_31] : memref<100x160xf32, #tpu.memory_space<vmem>>, vector<1x160xf32>
    %102 = vector.broadcast %101 : vector<1x160xf32> to vector<16x160xf32>
    %103 = arith.mulf %96, %102 : vector<16x160xf32>
    %104 = arith.addf %83, %103 : vector<16x160xf32>
    %c22 = arith.constant 22 : index
    %c0_32 = arith.constant 0 : index
    %105 = vector.load %arg2[%c22, %c0_32] : memref<100x160xf32, #tpu.memory_space<vmem>>, vector<1x160xf32>
    %106 = vector.broadcast %105 : vector<1x160xf32> to vector<16x160xf32>
    %107 = arith.mulf %96, %106 : vector<16x160xf32>
    %108 = arith.addf %87, %107 : vector<16x160xf32>
    %c23 = arith.constant 23 : index
    %c0_33 = arith.constant 0 : index
    %109 = vector.load %arg2[%c23, %c0_33] : memref<100x160xf32, #tpu.memory_space<vmem>>, vector<1x160xf32>
    %110 = vector.broadcast %109 : vector<1x160xf32> to vector<16x160xf32>
    %111 = arith.mulf %96, %110 : vector<16x160xf32>
    %112 = arith.addf %91, %111 : vector<16x160xf32>
    %c24 = arith.constant 24 : index
    %c0_34 = arith.constant 0 : index
    %113 = vector.load %arg2[%c24, %c0_34] : memref<100x160xf32, #tpu.memory_space<vmem>>, vector<1x160xf32>
    %114 = vector.broadcast %113 : vector<1x160xf32> to vector<16x160xf32>
    %115 = arith.mulf %96, %114 : vector<16x160xf32>
    %116 = arith.addf %95, %115 : vector<16x160xf32>
    %c0_35 = arith.constant 0 : index
    %c1_36 = arith.constant 1 : index
    %c0_37 = arith.constant 0 : index
    %c0_38 = arith.constant 0 : index
    %117 = vector.load %arg1[%c0_35, %c1_36, %c0_37, %c0_38] : memref<1x4x16x16xf32, #tpu.memory_space<vmem>>, vector<1x1x16x16xf32>
    %118 = vector.shape_cast %117 : vector<1x1x16x16xf32> to vector<16x16xf32>
    %cst_39 = arith.constant 0.000000e+00 : f32
    %119 = vector.broadcast %cst_39 : f32 to vector<16x2xf32>
    %120 = tpu.concatenate %119, %118, %119 in 1 : vector<16x2xf32>, vector<16x16xf32>, vector<16x2xf32> -> vector<16x20xf32>
    %121 = tpu.concatenate %120, %120, %120, %120, %120, %120, %120, %120 in 1 : vector<16x20xf32>, vector<16x20xf32>, vector<16x20xf32>, vector<16x20xf32>, vector<16x20xf32>, vector<16x20xf32>, vector<16x20xf32>, vector<16x20xf32> -> vector<16x160xf32>
    %cst_40 = arith.constant 0.000000e+00 : f32
    %122 = vector.broadcast %cst_40 : f32 to vector<2x160xf32>
    %123 = tpu.concatenate %122, %121, %122 in 0 : vector<2x160xf32>, vector<16x160xf32>, vector<2x160xf32> -> vector<20x160xf32>
    %124 = vector.extract_strided_slice %123 {offsets = [0, 0], sizes = [16, 160], strides = [1, 1]} : vector<20x160xf32> to vector<16x160xf32>
    %c25 = arith.constant 25 : index
    %c0_41 = arith.constant 0 : index
    %125 = vector.load %arg2[%c25, %c0_41] : memref<100x160xf32, #tpu.memory_space<vmem>>, vector<1x160xf32>
    %126 = vector.broadcast %125 : vector<1x160xf32> to vector<16x160xf32>
    %127 = arith.mulf %124, %126 : vector<16x160xf32>
    %128 = arith.addf %100, %127 : vector<16x160xf32>
    %c26 = arith.constant 26 : index
    %c0_42 = arith.constant 0 : index
    %129 = vector.load %arg2[%c26, %c0_42] : memref<100x160xf32, #tpu.memory_space<vmem>>, vector<1x160xf32>
    %130 = vector.broadcast %129 : vector<1x160xf32> to vector<16x160xf32>
    %131 = arith.mulf %124, %130 : vector<16x160xf32>
    %132 = arith.addf %104, %131 : vector<16x160xf32>
    %c27 = arith.constant 27 : index
    %c0_43 = arith.constant 0 : index
    %133 = vector.load %arg2[%c27, %c0_43] : memref<100x160xf32, #tpu.memory_space<vmem>>, vector<1x160xf32>
    %134 = vector.broadcast %133 : vector<1x160xf32> to vector<16x160xf32>
    %135 = arith.mulf %124, %134 : vector<16x160xf32>
    %136 = arith.addf %108, %135 : vector<16x160xf32>
    %c28 = arith.constant 28 : index
    %c0_44 = arith.constant 0 : index
    %137 = vector.load %arg2[%c28, %c0_44] : memref<100x160xf32, #tpu.memory_space<vmem>>, vector<1x160xf32>
    %138 = vector.broadcast %137 : vector<1x160xf32> to vector<16x160xf32>
    %139 = arith.mulf %124, %138 : vector<16x160xf32>
    %140 = arith.addf %112, %139 : vector<16x160xf32>
    %c29 = arith.constant 29 : index
    %c0_45 = arith.constant 0 : index
    %141 = vector.load %arg2[%c29, %c0_45] : memref<100x160xf32, #tpu.memory_space<vmem>>, vector<1x160xf32>
    %142 = vector.broadcast %141 : vector<1x160xf32> to vector<16x160xf32>
    %143 = arith.mulf %124, %142 : vector<16x160xf32>
    %144 = arith.addf %116, %143 : vector<16x160xf32>
    %145 = vector.extract_strided_slice %123 {offsets = [1, 0], sizes = [16, 160], strides = [1, 1]} : vector<20x160xf32> to vector<16x160xf32>
    %c30 = arith.constant 30 : index
    %c0_46 = arith.constant 0 : index
    %146 = vector.load %arg2[%c30, %c0_46] : memref<100x160xf32, #tpu.memory_space<vmem>>, vector<1x160xf32>
    %147 = vector.broadcast %146 : vector<1x160xf32> to vector<16x160xf32>
    %148 = arith.mulf %145, %147 : vector<16x160xf32>
    %149 = arith.addf %128, %148 : vector<16x160xf32>
    %c31 = arith.constant 31 : index
    %c0_47 = arith.constant 0 : index
    %150 = vector.load %arg2[%c31, %c0_47] : memref<100x160xf32, #tpu.memory_space<vmem>>, vector<1x160xf32>
    %151 = vector.broadcast %150 : vector<1x160xf32> to vector<16x160xf32>
    %152 = arith.mulf %145, %151 : vector<16x160xf32>
    %153 = arith.addf %132, %152 : vector<16x160xf32>
    %c32 = arith.constant 32 : index
    %c0_48 = arith.constant 0 : index
    %154 = vector.load %arg2[%c32, %c0_48] : memref<100x160xf32, #tpu.memory_space<vmem>>, vector<1x160xf32>
    %155 = vector.broadcast %154 : vector<1x160xf32> to vector<16x160xf32>
    %156 = arith.mulf %145, %155 : vector<16x160xf32>
    %157 = arith.addf %136, %156 : vector<16x160xf32>
    %c33 = arith.constant 33 : index
    %c0_49 = arith.constant 0 : index
    %158 = vector.load %arg2[%c33, %c0_49] : memref<100x160xf32, #tpu.memory_space<vmem>>, vector<1x160xf32>
    %159 = vector.broadcast %158 : vector<1x160xf32> to vector<16x160xf32>
    %160 = arith.mulf %145, %159 : vector<16x160xf32>
    %161 = arith.addf %140, %160 : vector<16x160xf32>
    %c34 = arith.constant 34 : index
    %c0_50 = arith.constant 0 : index
    %162 = vector.load %arg2[%c34, %c0_50] : memref<100x160xf32, #tpu.memory_space<vmem>>, vector<1x160xf32>
    %163 = vector.broadcast %162 : vector<1x160xf32> to vector<16x160xf32>
    %164 = arith.mulf %145, %163 : vector<16x160xf32>
    %165 = arith.addf %144, %164 : vector<16x160xf32>
    %166 = vector.extract_strided_slice %123 {offsets = [2, 0], sizes = [16, 160], strides = [1, 1]} : vector<20x160xf32> to vector<16x160xf32>
    %c35 = arith.constant 35 : index
    %c0_51 = arith.constant 0 : index
    %167 = vector.load %arg2[%c35, %c0_51] : memref<100x160xf32, #tpu.memory_space<vmem>>, vector<1x160xf32>
    %168 = vector.broadcast %167 : vector<1x160xf32> to vector<16x160xf32>
    %169 = arith.mulf %166, %168 : vector<16x160xf32>
    %170 = arith.addf %149, %169 : vector<16x160xf32>
    %c36 = arith.constant 36 : index
    %c0_52 = arith.constant 0 : index
    %171 = vector.load %arg2[%c36, %c0_52] : memref<100x160xf32, #tpu.memory_space<vmem>>, vector<1x160xf32>
    %172 = vector.broadcast %171 : vector<1x160xf32> to vector<16x160xf32>
    %173 = arith.mulf %166, %172 : vector<16x160xf32>
    %174 = arith.addf %153, %173 : vector<16x160xf32>
    %c37 = arith.constant 37 : index
    %c0_53 = arith.constant 0 : index
    %175 = vector.load %arg2[%c37, %c0_53] : memref<100x160xf32, #tpu.memory_space<vmem>>, vector<1x160xf32>
    %176 = vector.broadcast %175 : vector<1x160xf32> to vector<16x160xf32>
    %177 = arith.mulf %166, %176 : vector<16x160xf32>
    %178 = arith.addf %157, %177 : vector<16x160xf32>
    %c38 = arith.constant 38 : index
    %c0_54 = arith.constant 0 : index
    %179 = vector.load %arg2[%c38, %c0_54] : memref<100x160xf32, #tpu.memory_space<vmem>>, vector<1x160xf32>
    %180 = vector.broadcast %179 : vector<1x160xf32> to vector<16x160xf32>
    %181 = arith.mulf %166, %180 : vector<16x160xf32>
    %182 = arith.addf %161, %181 : vector<16x160xf32>
    %c39 = arith.constant 39 : index
    %c0_55 = arith.constant 0 : index
    %183 = vector.load %arg2[%c39, %c0_55] : memref<100x160xf32, #tpu.memory_space<vmem>>, vector<1x160xf32>
    %184 = vector.broadcast %183 : vector<1x160xf32> to vector<16x160xf32>
    %185 = arith.mulf %166, %184 : vector<16x160xf32>
    %186 = arith.addf %165, %185 : vector<16x160xf32>
    %187 = vector.extract_strided_slice %123 {offsets = [3, 0], sizes = [16, 160], strides = [1, 1]} : vector<20x160xf32> to vector<16x160xf32>
    %c40 = arith.constant 40 : index
    %c0_56 = arith.constant 0 : index
    %188 = vector.load %arg2[%c40, %c0_56] : memref<100x160xf32, #tpu.memory_space<vmem>>, vector<1x160xf32>
    %189 = vector.broadcast %188 : vector<1x160xf32> to vector<16x160xf32>
    %190 = arith.mulf %187, %189 : vector<16x160xf32>
    %191 = arith.addf %170, %190 : vector<16x160xf32>
    %c41 = arith.constant 41 : index
    %c0_57 = arith.constant 0 : index
    %192 = vector.load %arg2[%c41, %c0_57] : memref<100x160xf32, #tpu.memory_space<vmem>>, vector<1x160xf32>
    %193 = vector.broadcast %192 : vector<1x160xf32> to vector<16x160xf32>
    %194 = arith.mulf %187, %193 : vector<16x160xf32>
    %195 = arith.addf %174, %194 : vector<16x160xf32>
    %c42 = arith.constant 42 : index
    %c0_58 = arith.constant 0 : index
    %196 = vector.load %arg2[%c42, %c0_58] : memref<100x160xf32, #tpu.memory_space<vmem>>, vector<1x160xf32>
    %197 = vector.broadcast %196 : vector<1x160xf32> to vector<16x160xf32>
    %198 = arith.mulf %187, %197 : vector<16x160xf32>
    %199 = arith.addf %178, %198 : vector<16x160xf32>
    %c43 = arith.constant 43 : index
    %c0_59 = arith.constant 0 : index
    %200 = vector.load %arg2[%c43, %c0_59] : memref<100x160xf32, #tpu.memory_space<vmem>>, vector<1x160xf32>
    %201 = vector.broadcast %200 : vector<1x160xf32> to vector<16x160xf32>
    %202 = arith.mulf %187, %201 : vector<16x160xf32>
    %203 = arith.addf %182, %202 : vector<16x160xf32>
    %c44 = arith.constant 44 : index
    %c0_60 = arith.constant 0 : index
    %204 = vector.load %arg2[%c44, %c0_60] : memref<100x160xf32, #tpu.memory_space<vmem>>, vector<1x160xf32>
    %205 = vector.broadcast %204 : vector<1x160xf32> to vector<16x160xf32>
    %206 = arith.mulf %187, %205 : vector<16x160xf32>
    %207 = arith.addf %186, %206 : vector<16x160xf32>
    %208 = vector.extract_strided_slice %123 {offsets = [4, 0], sizes = [16, 160], strides = [1, 1]} : vector<20x160xf32> to vector<16x160xf32>
    %c45 = arith.constant 45 : index
    %c0_61 = arith.constant 0 : index
    %209 = vector.load %arg2[%c45, %c0_61] : memref<100x160xf32, #tpu.memory_space<vmem>>, vector<1x160xf32>
    %210 = vector.broadcast %209 : vector<1x160xf32> to vector<16x160xf32>
    %211 = arith.mulf %208, %210 : vector<16x160xf32>
    %212 = arith.addf %191, %211 : vector<16x160xf32>
    %c46 = arith.constant 46 : index
    %c0_62 = arith.constant 0 : index
    %213 = vector.load %arg2[%c46, %c0_62] : memref<100x160xf32, #tpu.memory_space<vmem>>, vector<1x160xf32>
    %214 = vector.broadcast %213 : vector<1x160xf32> to vector<16x160xf32>
    %215 = arith.mulf %208, %214 : vector<16x160xf32>
    %216 = arith.addf %195, %215 : vector<16x160xf32>
    %c47 = arith.constant 47 : index
    %c0_63 = arith.constant 0 : index
    %217 = vector.load %arg2[%c47, %c0_63] : memref<100x160xf32, #tpu.memory_space<vmem>>, vector<1x160xf32>
    %218 = vector.broadcast %217 : vector<1x160xf32> to vector<16x160xf32>
    %219 = arith.mulf %208, %218 : vector<16x160xf32>
    %220 = arith.addf %199, %219 : vector<16x160xf32>
    %c48 = arith.constant 48 : index
    %c0_64 = arith.constant 0 : index
    %221 = vector.load %arg2[%c48, %c0_64] : memref<100x160xf32, #tpu.memory_space<vmem>>, vector<1x160xf32>
    %222 = vector.broadcast %221 : vector<1x160xf32> to vector<16x160xf32>
    %223 = arith.mulf %208, %222 : vector<16x160xf32>
    %224 = arith.addf %203, %223 : vector<16x160xf32>
    %c49 = arith.constant 49 : index
    %c0_65 = arith.constant 0 : index
    %225 = vector.load %arg2[%c49, %c0_65] : memref<100x160xf32, #tpu.memory_space<vmem>>, vector<1x160xf32>
    %226 = vector.broadcast %225 : vector<1x160xf32> to vector<16x160xf32>
    %227 = arith.mulf %208, %226 : vector<16x160xf32>
    %228 = arith.addf %207, %227 : vector<16x160xf32>
    %c0_66 = arith.constant 0 : index
    %c2_67 = arith.constant 2 : index
    %c0_68 = arith.constant 0 : index
    %c0_69 = arith.constant 0 : index
    %229 = vector.load %arg1[%c0_66, %c2_67, %c0_68, %c0_69] : memref<1x4x16x16xf32, #tpu.memory_space<vmem>>, vector<1x1x16x16xf32>
    %230 = vector.shape_cast %229 : vector<1x1x16x16xf32> to vector<16x16xf32>
    %cst_70 = arith.constant 0.000000e+00 : f32
    %231 = vector.broadcast %cst_70 : f32 to vector<16x2xf32>
    %232 = tpu.concatenate %231, %230, %231 in 1 : vector<16x2xf32>, vector<16x16xf32>, vector<16x2xf32> -> vector<16x20xf32>
    %233 = tpu.concatenate %232, %232, %232, %232, %232, %232, %232, %232 in 1 : vector<16x20xf32>, vector<16x20xf32>, vector<16x20xf32>, vector<16x20xf32>, vector<16x20xf32>, vector<16x20xf32>, vector<16x20xf32>, vector<16x20xf32> -> vector<16x160xf32>
    %cst_71 = arith.constant 0.000000e+00 : f32
    %234 = vector.broadcast %cst_71 : f32 to vector<2x160xf32>
    %235 = tpu.concatenate %234, %233, %234 in 0 : vector<2x160xf32>, vector<16x160xf32>, vector<2x160xf32> -> vector<20x160xf32>
    %236 = vector.extract_strided_slice %235 {offsets = [0, 0], sizes = [16, 160], strides = [1, 1]} : vector<20x160xf32> to vector<16x160xf32>
    %c50 = arith.constant 50 : index
    %c0_72 = arith.constant 0 : index
    %237 = vector.load %arg2[%c50, %c0_72] : memref<100x160xf32, #tpu.memory_space<vmem>>, vector<1x160xf32>
    %238 = vector.broadcast %237 : vector<1x160xf32> to vector<16x160xf32>
    %239 = arith.mulf %236, %238 : vector<16x160xf32>
    %240 = arith.addf %212, %239 : vector<16x160xf32>
    %c51 = arith.constant 51 : index
    %c0_73 = arith.constant 0 : index
    %241 = vector.load %arg2[%c51, %c0_73] : memref<100x160xf32, #tpu.memory_space<vmem>>, vector<1x160xf32>
    %242 = vector.broadcast %241 : vector<1x160xf32> to vector<16x160xf32>
    %243 = arith.mulf %236, %242 : vector<16x160xf32>
    %244 = arith.addf %216, %243 : vector<16x160xf32>
    %c52 = arith.constant 52 : index
    %c0_74 = arith.constant 0 : index
    %245 = vector.load %arg2[%c52, %c0_74] : memref<100x160xf32, #tpu.memory_space<vmem>>, vector<1x160xf32>
    %246 = vector.broadcast %245 : vector<1x160xf32> to vector<16x160xf32>
    %247 = arith.mulf %236, %246 : vector<16x160xf32>
    %248 = arith.addf %220, %247 : vector<16x160xf32>
    %c53 = arith.constant 53 : index
    %c0_75 = arith.constant 0 : index
    %249 = vector.load %arg2[%c53, %c0_75] : memref<100x160xf32, #tpu.memory_space<vmem>>, vector<1x160xf32>
    %250 = vector.broadcast %249 : vector<1x160xf32> to vector<16x160xf32>
    %251 = arith.mulf %236, %250 : vector<16x160xf32>
    %252 = arith.addf %224, %251 : vector<16x160xf32>
    %c54 = arith.constant 54 : index
    %c0_76 = arith.constant 0 : index
    %253 = vector.load %arg2[%c54, %c0_76] : memref<100x160xf32, #tpu.memory_space<vmem>>, vector<1x160xf32>
    %254 = vector.broadcast %253 : vector<1x160xf32> to vector<16x160xf32>
    %255 = arith.mulf %236, %254 : vector<16x160xf32>
    %256 = arith.addf %228, %255 : vector<16x160xf32>
    %257 = vector.extract_strided_slice %235 {offsets = [1, 0], sizes = [16, 160], strides = [1, 1]} : vector<20x160xf32> to vector<16x160xf32>
    %c55 = arith.constant 55 : index
    %c0_77 = arith.constant 0 : index
    %258 = vector.load %arg2[%c55, %c0_77] : memref<100x160xf32, #tpu.memory_space<vmem>>, vector<1x160xf32>
    %259 = vector.broadcast %258 : vector<1x160xf32> to vector<16x160xf32>
    %260 = arith.mulf %257, %259 : vector<16x160xf32>
    %261 = arith.addf %240, %260 : vector<16x160xf32>
    %c56 = arith.constant 56 : index
    %c0_78 = arith.constant 0 : index
    %262 = vector.load %arg2[%c56, %c0_78] : memref<100x160xf32, #tpu.memory_space<vmem>>, vector<1x160xf32>
    %263 = vector.broadcast %262 : vector<1x160xf32> to vector<16x160xf32>
    %264 = arith.mulf %257, %263 : vector<16x160xf32>
    %265 = arith.addf %244, %264 : vector<16x160xf32>
    %c57 = arith.constant 57 : index
    %c0_79 = arith.constant 0 : index
    %266 = vector.load %arg2[%c57, %c0_79] : memref<100x160xf32, #tpu.memory_space<vmem>>, vector<1x160xf32>
    %267 = vector.broadcast %266 : vector<1x160xf32> to vector<16x160xf32>
    %268 = arith.mulf %257, %267 : vector<16x160xf32>
    %269 = arith.addf %248, %268 : vector<16x160xf32>
    %c58 = arith.constant 58 : index
    %c0_80 = arith.constant 0 : index
    %270 = vector.load %arg2[%c58, %c0_80] : memref<100x160xf32, #tpu.memory_space<vmem>>, vector<1x160xf32>
    %271 = vector.broadcast %270 : vector<1x160xf32> to vector<16x160xf32>
    %272 = arith.mulf %257, %271 : vector<16x160xf32>
    %273 = arith.addf %252, %272 : vector<16x160xf32>
    %c59 = arith.constant 59 : index
    %c0_81 = arith.constant 0 : index
    %274 = vector.load %arg2[%c59, %c0_81] : memref<100x160xf32, #tpu.memory_space<vmem>>, vector<1x160xf32>
    %275 = vector.broadcast %274 : vector<1x160xf32> to vector<16x160xf32>
    %276 = arith.mulf %257, %275 : vector<16x160xf32>
    %277 = arith.addf %256, %276 : vector<16x160xf32>
    %278 = vector.extract_strided_slice %235 {offsets = [2, 0], sizes = [16, 160], strides = [1, 1]} : vector<20x160xf32> to vector<16x160xf32>
    %c60 = arith.constant 60 : index
    %c0_82 = arith.constant 0 : index
    %279 = vector.load %arg2[%c60, %c0_82] : memref<100x160xf32, #tpu.memory_space<vmem>>, vector<1x160xf32>
    %280 = vector.broadcast %279 : vector<1x160xf32> to vector<16x160xf32>
    %281 = arith.mulf %278, %280 : vector<16x160xf32>
    %282 = arith.addf %261, %281 : vector<16x160xf32>
    %c61 = arith.constant 61 : index
    %c0_83 = arith.constant 0 : index
    %283 = vector.load %arg2[%c61, %c0_83] : memref<100x160xf32, #tpu.memory_space<vmem>>, vector<1x160xf32>
    %284 = vector.broadcast %283 : vector<1x160xf32> to vector<16x160xf32>
    %285 = arith.mulf %278, %284 : vector<16x160xf32>
    %286 = arith.addf %265, %285 : vector<16x160xf32>
    %c62 = arith.constant 62 : index
    %c0_84 = arith.constant 0 : index
    %287 = vector.load %arg2[%c62, %c0_84] : memref<100x160xf32, #tpu.memory_space<vmem>>, vector<1x160xf32>
    %288 = vector.broadcast %287 : vector<1x160xf32> to vector<16x160xf32>
    %289 = arith.mulf %278, %288 : vector<16x160xf32>
    %290 = arith.addf %269, %289 : vector<16x160xf32>
    %c63 = arith.constant 63 : index
    %c0_85 = arith.constant 0 : index
    %291 = vector.load %arg2[%c63, %c0_85] : memref<100x160xf32, #tpu.memory_space<vmem>>, vector<1x160xf32>
    %292 = vector.broadcast %291 : vector<1x160xf32> to vector<16x160xf32>
    %293 = arith.mulf %278, %292 : vector<16x160xf32>
    %294 = arith.addf %273, %293 : vector<16x160xf32>
    %c64 = arith.constant 64 : index
    %c0_86 = arith.constant 0 : index
    %295 = vector.load %arg2[%c64, %c0_86] : memref<100x160xf32, #tpu.memory_space<vmem>>, vector<1x160xf32>
    %296 = vector.broadcast %295 : vector<1x160xf32> to vector<16x160xf32>
    %297 = arith.mulf %278, %296 : vector<16x160xf32>
    %298 = arith.addf %277, %297 : vector<16x160xf32>
    %299 = vector.extract_strided_slice %235 {offsets = [3, 0], sizes = [16, 160], strides = [1, 1]} : vector<20x160xf32> to vector<16x160xf32>
    %c65 = arith.constant 65 : index
    %c0_87 = arith.constant 0 : index
    %300 = vector.load %arg2[%c65, %c0_87] : memref<100x160xf32, #tpu.memory_space<vmem>>, vector<1x160xf32>
    %301 = vector.broadcast %300 : vector<1x160xf32> to vector<16x160xf32>
    %302 = arith.mulf %299, %301 : vector<16x160xf32>
    %303 = arith.addf %282, %302 : vector<16x160xf32>
    %c66 = arith.constant 66 : index
    %c0_88 = arith.constant 0 : index
    %304 = vector.load %arg2[%c66, %c0_88] : memref<100x160xf32, #tpu.memory_space<vmem>>, vector<1x160xf32>
    %305 = vector.broadcast %304 : vector<1x160xf32> to vector<16x160xf32>
    %306 = arith.mulf %299, %305 : vector<16x160xf32>
    %307 = arith.addf %286, %306 : vector<16x160xf32>
    %c67 = arith.constant 67 : index
    %c0_89 = arith.constant 0 : index
    %308 = vector.load %arg2[%c67, %c0_89] : memref<100x160xf32, #tpu.memory_space<vmem>>, vector<1x160xf32>
    %309 = vector.broadcast %308 : vector<1x160xf32> to vector<16x160xf32>
    %310 = arith.mulf %299, %309 : vector<16x160xf32>
    %311 = arith.addf %290, %310 : vector<16x160xf32>
    %c68 = arith.constant 68 : index
    %c0_90 = arith.constant 0 : index
    %312 = vector.load %arg2[%c68, %c0_90] : memref<100x160xf32, #tpu.memory_space<vmem>>, vector<1x160xf32>
    %313 = vector.broadcast %312 : vector<1x160xf32> to vector<16x160xf32>
    %314 = arith.mulf %299, %313 : vector<16x160xf32>
    %315 = arith.addf %294, %314 : vector<16x160xf32>
    %c69 = arith.constant 69 : index
    %c0_91 = arith.constant 0 : index
    %316 = vector.load %arg2[%c69, %c0_91] : memref<100x160xf32, #tpu.memory_space<vmem>>, vector<1x160xf32>
    %317 = vector.broadcast %316 : vector<1x160xf32> to vector<16x160xf32>
    %318 = arith.mulf %299, %317 : vector<16x160xf32>
    %319 = arith.addf %298, %318 : vector<16x160xf32>
    %320 = vector.extract_strided_slice %235 {offsets = [4, 0], sizes = [16, 160], strides = [1, 1]} : vector<20x160xf32> to vector<16x160xf32>
    %c70 = arith.constant 70 : index
    %c0_92 = arith.constant 0 : index
    %321 = vector.load %arg2[%c70, %c0_92] : memref<100x160xf32, #tpu.memory_space<vmem>>, vector<1x160xf32>
    %322 = vector.broadcast %321 : vector<1x160xf32> to vector<16x160xf32>
    %323 = arith.mulf %320, %322 : vector<16x160xf32>
    %324 = arith.addf %303, %323 : vector<16x160xf32>
    %c71 = arith.constant 71 : index
    %c0_93 = arith.constant 0 : index
    %325 = vector.load %arg2[%c71, %c0_93] : memref<100x160xf32, #tpu.memory_space<vmem>>, vector<1x160xf32>
    %326 = vector.broadcast %325 : vector<1x160xf32> to vector<16x160xf32>
    %327 = arith.mulf %320, %326 : vector<16x160xf32>
    %328 = arith.addf %307, %327 : vector<16x160xf32>
    %c72 = arith.constant 72 : index
    %c0_94 = arith.constant 0 : index
    %329 = vector.load %arg2[%c72, %c0_94] : memref<100x160xf32, #tpu.memory_space<vmem>>, vector<1x160xf32>
    %330 = vector.broadcast %329 : vector<1x160xf32> to vector<16x160xf32>
    %331 = arith.mulf %320, %330 : vector<16x160xf32>
    %332 = arith.addf %311, %331 : vector<16x160xf32>
    %c73 = arith.constant 73 : index
    %c0_95 = arith.constant 0 : index
    %333 = vector.load %arg2[%c73, %c0_95] : memref<100x160xf32, #tpu.memory_space<vmem>>, vector<1x160xf32>
    %334 = vector.broadcast %333 : vector<1x160xf32> to vector<16x160xf32>
    %335 = arith.mulf %320, %334 : vector<16x160xf32>
    %336 = arith.addf %315, %335 : vector<16x160xf32>
    %c74 = arith.constant 74 : index
    %c0_96 = arith.constant 0 : index
    %337 = vector.load %arg2[%c74, %c0_96] : memref<100x160xf32, #tpu.memory_space<vmem>>, vector<1x160xf32>
    %338 = vector.broadcast %337 : vector<1x160xf32> to vector<16x160xf32>
    %339 = arith.mulf %320, %338 : vector<16x160xf32>
    %340 = arith.addf %319, %339 : vector<16x160xf32>
    %c0_97 = arith.constant 0 : index
    %c3_98 = arith.constant 3 : index
    %c0_99 = arith.constant 0 : index
    %c0_100 = arith.constant 0 : index
    %341 = vector.load %arg1[%c0_97, %c3_98, %c0_99, %c0_100] : memref<1x4x16x16xf32, #tpu.memory_space<vmem>>, vector<1x1x16x16xf32>
    %342 = vector.shape_cast %341 : vector<1x1x16x16xf32> to vector<16x16xf32>
    %cst_101 = arith.constant 0.000000e+00 : f32
    %343 = vector.broadcast %cst_101 : f32 to vector<16x2xf32>
    %344 = tpu.concatenate %343, %342, %343 in 1 : vector<16x2xf32>, vector<16x16xf32>, vector<16x2xf32> -> vector<16x20xf32>
    %345 = tpu.concatenate %344, %344, %344, %344, %344, %344, %344, %344 in 1 : vector<16x20xf32>, vector<16x20xf32>, vector<16x20xf32>, vector<16x20xf32>, vector<16x20xf32>, vector<16x20xf32>, vector<16x20xf32>, vector<16x20xf32> -> vector<16x160xf32>
    %cst_102 = arith.constant 0.000000e+00 : f32
    %346 = vector.broadcast %cst_102 : f32 to vector<2x160xf32>
    %347 = tpu.concatenate %346, %345, %346 in 0 : vector<2x160xf32>, vector<16x160xf32>, vector<2x160xf32> -> vector<20x160xf32>
    %348 = vector.extract_strided_slice %347 {offsets = [0, 0], sizes = [16, 160], strides = [1, 1]} : vector<20x160xf32> to vector<16x160xf32>
    %c75 = arith.constant 75 : index
    %c0_103 = arith.constant 0 : index
    %349 = vector.load %arg2[%c75, %c0_103] : memref<100x160xf32, #tpu.memory_space<vmem>>, vector<1x160xf32>
    %350 = vector.broadcast %349 : vector<1x160xf32> to vector<16x160xf32>
    %351 = arith.mulf %348, %350 : vector<16x160xf32>
    %352 = arith.addf %324, %351 : vector<16x160xf32>
    %c76 = arith.constant 76 : index
    %c0_104 = arith.constant 0 : index
    %353 = vector.load %arg2[%c76, %c0_104] : memref<100x160xf32, #tpu.memory_space<vmem>>, vector<1x160xf32>
    %354 = vector.broadcast %353 : vector<1x160xf32> to vector<16x160xf32>
    %355 = arith.mulf %348, %354 : vector<16x160xf32>
    %356 = arith.addf %328, %355 : vector<16x160xf32>
    %c77 = arith.constant 77 : index
    %c0_105 = arith.constant 0 : index
    %357 = vector.load %arg2[%c77, %c0_105] : memref<100x160xf32, #tpu.memory_space<vmem>>, vector<1x160xf32>
    %358 = vector.broadcast %357 : vector<1x160xf32> to vector<16x160xf32>
    %359 = arith.mulf %348, %358 : vector<16x160xf32>
    %360 = arith.addf %332, %359 : vector<16x160xf32>
    %c78 = arith.constant 78 : index
    %c0_106 = arith.constant 0 : index
    %361 = vector.load %arg2[%c78, %c0_106] : memref<100x160xf32, #tpu.memory_space<vmem>>, vector<1x160xf32>
    %362 = vector.broadcast %361 : vector<1x160xf32> to vector<16x160xf32>
    %363 = arith.mulf %348, %362 : vector<16x160xf32>
    %364 = arith.addf %336, %363 : vector<16x160xf32>
    %c79 = arith.constant 79 : index
    %c0_107 = arith.constant 0 : index
    %365 = vector.load %arg2[%c79, %c0_107] : memref<100x160xf32, #tpu.memory_space<vmem>>, vector<1x160xf32>
    %366 = vector.broadcast %365 : vector<1x160xf32> to vector<16x160xf32>
    %367 = arith.mulf %348, %366 : vector<16x160xf32>
    %368 = arith.addf %340, %367 : vector<16x160xf32>
    %369 = vector.extract_strided_slice %347 {offsets = [1, 0], sizes = [16, 160], strides = [1, 1]} : vector<20x160xf32> to vector<16x160xf32>
    %c80 = arith.constant 80 : index
    %c0_108 = arith.constant 0 : index
    %370 = vector.load %arg2[%c80, %c0_108] : memref<100x160xf32, #tpu.memory_space<vmem>>, vector<1x160xf32>
    %371 = vector.broadcast %370 : vector<1x160xf32> to vector<16x160xf32>
    %372 = arith.mulf %369, %371 : vector<16x160xf32>
    %373 = arith.addf %352, %372 : vector<16x160xf32>
    %c81 = arith.constant 81 : index
    %c0_109 = arith.constant 0 : index
    %374 = vector.load %arg2[%c81, %c0_109] : memref<100x160xf32, #tpu.memory_space<vmem>>, vector<1x160xf32>
    %375 = vector.broadcast %374 : vector<1x160xf32> to vector<16x160xf32>
    %376 = arith.mulf %369, %375 : vector<16x160xf32>
    %377 = arith.addf %356, %376 : vector<16x160xf32>
    %c82 = arith.constant 82 : index
    %c0_110 = arith.constant 0 : index
    %378 = vector.load %arg2[%c82, %c0_110] : memref<100x160xf32, #tpu.memory_space<vmem>>, vector<1x160xf32>
    %379 = vector.broadcast %378 : vector<1x160xf32> to vector<16x160xf32>
    %380 = arith.mulf %369, %379 : vector<16x160xf32>
    %381 = arith.addf %360, %380 : vector<16x160xf32>
    %c83 = arith.constant 83 : index
    %c0_111 = arith.constant 0 : index
    %382 = vector.load %arg2[%c83, %c0_111] : memref<100x160xf32, #tpu.memory_space<vmem>>, vector<1x160xf32>
    %383 = vector.broadcast %382 : vector<1x160xf32> to vector<16x160xf32>
    %384 = arith.mulf %369, %383 : vector<16x160xf32>
    %385 = arith.addf %364, %384 : vector<16x160xf32>
    %c84 = arith.constant 84 : index
    %c0_112 = arith.constant 0 : index
    %386 = vector.load %arg2[%c84, %c0_112] : memref<100x160xf32, #tpu.memory_space<vmem>>, vector<1x160xf32>
    %387 = vector.broadcast %386 : vector<1x160xf32> to vector<16x160xf32>
    %388 = arith.mulf %369, %387 : vector<16x160xf32>
    %389 = arith.addf %368, %388 : vector<16x160xf32>
    %390 = vector.extract_strided_slice %347 {offsets = [2, 0], sizes = [16, 160], strides = [1, 1]} : vector<20x160xf32> to vector<16x160xf32>
    %c85 = arith.constant 85 : index
    %c0_113 = arith.constant 0 : index
    %391 = vector.load %arg2[%c85, %c0_113] : memref<100x160xf32, #tpu.memory_space<vmem>>, vector<1x160xf32>
    %392 = vector.broadcast %391 : vector<1x160xf32> to vector<16x160xf32>
    %393 = arith.mulf %390, %392 : vector<16x160xf32>
    %394 = arith.addf %373, %393 : vector<16x160xf32>
    %c86 = arith.constant 86 : index
    %c0_114 = arith.constant 0 : index
    %395 = vector.load %arg2[%c86, %c0_114] : memref<100x160xf32, #tpu.memory_space<vmem>>, vector<1x160xf32>
    %396 = vector.broadcast %395 : vector<1x160xf32> to vector<16x160xf32>
    %397 = arith.mulf %390, %396 : vector<16x160xf32>
    %398 = arith.addf %377, %397 : vector<16x160xf32>
    %c87 = arith.constant 87 : index
    %c0_115 = arith.constant 0 : index
    %399 = vector.load %arg2[%c87, %c0_115] : memref<100x160xf32, #tpu.memory_space<vmem>>, vector<1x160xf32>
    %400 = vector.broadcast %399 : vector<1x160xf32> to vector<16x160xf32>
    %401 = arith.mulf %390, %400 : vector<16x160xf32>
    %402 = arith.addf %381, %401 : vector<16x160xf32>
    %c88 = arith.constant 88 : index
    %c0_116 = arith.constant 0 : index
    %403 = vector.load %arg2[%c88, %c0_116] : memref<100x160xf32, #tpu.memory_space<vmem>>, vector<1x160xf32>
    %404 = vector.broadcast %403 : vector<1x160xf32> to vector<16x160xf32>
    %405 = arith.mulf %390, %404 : vector<16x160xf32>
    %406 = arith.addf %385, %405 : vector<16x160xf32>
    %c89 = arith.constant 89 : index
    %c0_117 = arith.constant 0 : index
    %407 = vector.load %arg2[%c89, %c0_117] : memref<100x160xf32, #tpu.memory_space<vmem>>, vector<1x160xf32>
    %408 = vector.broadcast %407 : vector<1x160xf32> to vector<16x160xf32>
    %409 = arith.mulf %390, %408 : vector<16x160xf32>
    %410 = arith.addf %389, %409 : vector<16x160xf32>
    %411 = vector.extract_strided_slice %347 {offsets = [3, 0], sizes = [16, 160], strides = [1, 1]} : vector<20x160xf32> to vector<16x160xf32>
    %c90 = arith.constant 90 : index
    %c0_118 = arith.constant 0 : index
    %412 = vector.load %arg2[%c90, %c0_118] : memref<100x160xf32, #tpu.memory_space<vmem>>, vector<1x160xf32>
    %413 = vector.broadcast %412 : vector<1x160xf32> to vector<16x160xf32>
    %414 = arith.mulf %411, %413 : vector<16x160xf32>
    %415 = arith.addf %394, %414 : vector<16x160xf32>
    %c91 = arith.constant 91 : index
    %c0_119 = arith.constant 0 : index
    %416 = vector.load %arg2[%c91, %c0_119] : memref<100x160xf32, #tpu.memory_space<vmem>>, vector<1x160xf32>
    %417 = vector.broadcast %416 : vector<1x160xf32> to vector<16x160xf32>
    %418 = arith.mulf %411, %417 : vector<16x160xf32>
    %419 = arith.addf %398, %418 : vector<16x160xf32>
    %c92 = arith.constant 92 : index
    %c0_120 = arith.constant 0 : index
    %420 = vector.load %arg2[%c92, %c0_120] : memref<100x160xf32, #tpu.memory_space<vmem>>, vector<1x160xf32>
    %421 = vector.broadcast %420 : vector<1x160xf32> to vector<16x160xf32>
    %422 = arith.mulf %411, %421 : vector<16x160xf32>
    %423 = arith.addf %402, %422 : vector<16x160xf32>
    %c93 = arith.constant 93 : index
    %c0_121 = arith.constant 0 : index
    %424 = vector.load %arg2[%c93, %c0_121] : memref<100x160xf32, #tpu.memory_space<vmem>>, vector<1x160xf32>
    %425 = vector.broadcast %424 : vector<1x160xf32> to vector<16x160xf32>
    %426 = arith.mulf %411, %425 : vector<16x160xf32>
    %427 = arith.addf %406, %426 : vector<16x160xf32>
    %c94 = arith.constant 94 : index
    %c0_122 = arith.constant 0 : index
    %428 = vector.load %arg2[%c94, %c0_122] : memref<100x160xf32, #tpu.memory_space<vmem>>, vector<1x160xf32>
    %429 = vector.broadcast %428 : vector<1x160xf32> to vector<16x160xf32>
    %430 = arith.mulf %411, %429 : vector<16x160xf32>
    %431 = arith.addf %410, %430 : vector<16x160xf32>
    %432 = vector.extract_strided_slice %347 {offsets = [4, 0], sizes = [16, 160], strides = [1, 1]} : vector<20x160xf32> to vector<16x160xf32>
    %c95 = arith.constant 95 : index
    %c0_123 = arith.constant 0 : index
    %433 = vector.load %arg2[%c95, %c0_123] : memref<100x160xf32, #tpu.memory_space<vmem>>, vector<1x160xf32>
    %434 = vector.broadcast %433 : vector<1x160xf32> to vector<16x160xf32>
    %435 = arith.mulf %432, %434 : vector<16x160xf32>
    %436 = arith.addf %415, %435 : vector<16x160xf32>
    %c96 = arith.constant 96 : index
    %c0_124 = arith.constant 0 : index
    %437 = vector.load %arg2[%c96, %c0_124] : memref<100x160xf32, #tpu.memory_space<vmem>>, vector<1x160xf32>
    %438 = vector.broadcast %437 : vector<1x160xf32> to vector<16x160xf32>
    %439 = arith.mulf %432, %438 : vector<16x160xf32>
    %440 = arith.addf %419, %439 : vector<16x160xf32>
    %c97 = arith.constant 97 : index
    %c0_125 = arith.constant 0 : index
    %441 = vector.load %arg2[%c97, %c0_125] : memref<100x160xf32, #tpu.memory_space<vmem>>, vector<1x160xf32>
    %442 = vector.broadcast %441 : vector<1x160xf32> to vector<16x160xf32>
    %443 = arith.mulf %432, %442 : vector<16x160xf32>
    %444 = arith.addf %423, %443 : vector<16x160xf32>
    %c98 = arith.constant 98 : index
    %c0_126 = arith.constant 0 : index
    %445 = vector.load %arg2[%c98, %c0_126] : memref<100x160xf32, #tpu.memory_space<vmem>>, vector<1x160xf32>
    %446 = vector.broadcast %445 : vector<1x160xf32> to vector<16x160xf32>
    %447 = arith.mulf %432, %446 : vector<16x160xf32>
    %448 = arith.addf %427, %447 : vector<16x160xf32>
    %c99 = arith.constant 99 : index
    %c0_127 = arith.constant 0 : index
    %449 = vector.load %arg2[%c99, %c0_127] : memref<100x160xf32, #tpu.memory_space<vmem>>, vector<1x160xf32>
    %450 = vector.broadcast %449 : vector<1x160xf32> to vector<16x160xf32>
    %451 = arith.mulf %432, %450 : vector<16x160xf32>
    %452 = arith.addf %431, %451 : vector<16x160xf32>
    %453 = vector.extract_strided_slice %436 {offsets = [0, 0], sizes = [16, 16], strides = [1, 1]} : vector<16x160xf32> to vector<16x16xf32>
    %454 = vector.extract_strided_slice %440 {offsets = [0, 1], sizes = [16, 16], strides = [1, 1]} : vector<16x160xf32> to vector<16x16xf32>
    %455 = arith.addf %453, %454 : vector<16x16xf32>
    %456 = vector.extract_strided_slice %444 {offsets = [0, 2], sizes = [16, 16], strides = [1, 1]} : vector<16x160xf32> to vector<16x16xf32>
    %457 = arith.addf %455, %456 : vector<16x16xf32>
    %458 = vector.extract_strided_slice %448 {offsets = [0, 3], sizes = [16, 16], strides = [1, 1]} : vector<16x160xf32> to vector<16x16xf32>
    %459 = arith.addf %457, %458 : vector<16x16xf32>
    %460 = vector.extract_strided_slice %452 {offsets = [0, 4], sizes = [16, 16], strides = [1, 1]} : vector<16x160xf32> to vector<16x16xf32>
    %461 = arith.addf %459, %460 : vector<16x16xf32>
    %462 = vector.extract_strided_slice %436 {offsets = [0, 20], sizes = [16, 16], strides = [1, 1]} : vector<16x160xf32> to vector<16x16xf32>
    %463 = vector.extract_strided_slice %440 {offsets = [0, 21], sizes = [16, 16], strides = [1, 1]} : vector<16x160xf32> to vector<16x16xf32>
    %464 = arith.addf %462, %463 : vector<16x16xf32>
    %465 = vector.extract_strided_slice %444 {offsets = [0, 22], sizes = [16, 16], strides = [1, 1]} : vector<16x160xf32> to vector<16x16xf32>
    %466 = arith.addf %464, %465 : vector<16x16xf32>
    %467 = vector.extract_strided_slice %448 {offsets = [0, 23], sizes = [16, 16], strides = [1, 1]} : vector<16x160xf32> to vector<16x16xf32>
    %468 = arith.addf %466, %467 : vector<16x16xf32>
    %469 = vector.extract_strided_slice %452 {offsets = [0, 24], sizes = [16, 16], strides = [1, 1]} : vector<16x160xf32> to vector<16x16xf32>
    %470 = arith.addf %468, %469 : vector<16x16xf32>
    %471 = vector.extract_strided_slice %436 {offsets = [0, 40], sizes = [16, 16], strides = [1, 1]} : vector<16x160xf32> to vector<16x16xf32>
    %472 = vector.extract_strided_slice %440 {offsets = [0, 41], sizes = [16, 16], strides = [1, 1]} : vector<16x160xf32> to vector<16x16xf32>
    %473 = arith.addf %471, %472 : vector<16x16xf32>
    %474 = vector.extract_strided_slice %444 {offsets = [0, 42], sizes = [16, 16], strides = [1, 1]} : vector<16x160xf32> to vector<16x16xf32>
    %475 = arith.addf %473, %474 : vector<16x16xf32>
    %476 = vector.extract_strided_slice %448 {offsets = [0, 43], sizes = [16, 16], strides = [1, 1]} : vector<16x160xf32> to vector<16x16xf32>
    %477 = arith.addf %475, %476 : vector<16x16xf32>
    %478 = vector.extract_strided_slice %452 {offsets = [0, 44], sizes = [16, 16], strides = [1, 1]} : vector<16x160xf32> to vector<16x16xf32>
    %479 = arith.addf %477, %478 : vector<16x16xf32>
    %480 = vector.extract_strided_slice %436 {offsets = [0, 60], sizes = [16, 16], strides = [1, 1]} : vector<16x160xf32> to vector<16x16xf32>
    %481 = vector.extract_strided_slice %440 {offsets = [0, 61], sizes = [16, 16], strides = [1, 1]} : vector<16x160xf32> to vector<16x16xf32>
    %482 = arith.addf %480, %481 : vector<16x16xf32>
    %483 = vector.extract_strided_slice %444 {offsets = [0, 62], sizes = [16, 16], strides = [1, 1]} : vector<16x160xf32> to vector<16x16xf32>
    %484 = arith.addf %482, %483 : vector<16x16xf32>
    %485 = vector.extract_strided_slice %448 {offsets = [0, 63], sizes = [16, 16], strides = [1, 1]} : vector<16x160xf32> to vector<16x16xf32>
    %486 = arith.addf %484, %485 : vector<16x16xf32>
    %487 = vector.extract_strided_slice %452 {offsets = [0, 64], sizes = [16, 16], strides = [1, 1]} : vector<16x160xf32> to vector<16x16xf32>
    %488 = arith.addf %486, %487 : vector<16x16xf32>
    %489 = vector.extract_strided_slice %436 {offsets = [0, 80], sizes = [16, 16], strides = [1, 1]} : vector<16x160xf32> to vector<16x16xf32>
    %490 = vector.extract_strided_slice %440 {offsets = [0, 81], sizes = [16, 16], strides = [1, 1]} : vector<16x160xf32> to vector<16x16xf32>
    %491 = arith.addf %489, %490 : vector<16x16xf32>
    %492 = vector.extract_strided_slice %444 {offsets = [0, 82], sizes = [16, 16], strides = [1, 1]} : vector<16x160xf32> to vector<16x16xf32>
    %493 = arith.addf %491, %492 : vector<16x16xf32>
    %494 = vector.extract_strided_slice %448 {offsets = [0, 83], sizes = [16, 16], strides = [1, 1]} : vector<16x160xf32> to vector<16x16xf32>
    %495 = arith.addf %493, %494 : vector<16x16xf32>
    %496 = vector.extract_strided_slice %452 {offsets = [0, 84], sizes = [16, 16], strides = [1, 1]} : vector<16x160xf32> to vector<16x16xf32>
    %497 = arith.addf %495, %496 : vector<16x16xf32>
    %498 = vector.extract_strided_slice %436 {offsets = [0, 100], sizes = [16, 16], strides = [1, 1]} : vector<16x160xf32> to vector<16x16xf32>
    %499 = vector.extract_strided_slice %440 {offsets = [0, 101], sizes = [16, 16], strides = [1, 1]} : vector<16x160xf32> to vector<16x16xf32>
    %500 = arith.addf %498, %499 : vector<16x16xf32>
    %501 = vector.extract_strided_slice %444 {offsets = [0, 102], sizes = [16, 16], strides = [1, 1]} : vector<16x160xf32> to vector<16x16xf32>
    %502 = arith.addf %500, %501 : vector<16x16xf32>
    %503 = vector.extract_strided_slice %448 {offsets = [0, 103], sizes = [16, 16], strides = [1, 1]} : vector<16x160xf32> to vector<16x16xf32>
    %504 = arith.addf %502, %503 : vector<16x16xf32>
    %505 = vector.extract_strided_slice %452 {offsets = [0, 104], sizes = [16, 16], strides = [1, 1]} : vector<16x160xf32> to vector<16x16xf32>
    %506 = arith.addf %504, %505 : vector<16x16xf32>
    %507 = vector.extract_strided_slice %436 {offsets = [0, 120], sizes = [16, 16], strides = [1, 1]} : vector<16x160xf32> to vector<16x16xf32>
    %508 = vector.extract_strided_slice %440 {offsets = [0, 121], sizes = [16, 16], strides = [1, 1]} : vector<16x160xf32> to vector<16x16xf32>
    %509 = arith.addf %507, %508 : vector<16x16xf32>
    %510 = vector.extract_strided_slice %444 {offsets = [0, 122], sizes = [16, 16], strides = [1, 1]} : vector<16x160xf32> to vector<16x16xf32>
    %511 = arith.addf %509, %510 : vector<16x16xf32>
    %512 = vector.extract_strided_slice %448 {offsets = [0, 123], sizes = [16, 16], strides = [1, 1]} : vector<16x160xf32> to vector<16x16xf32>
    %513 = arith.addf %511, %512 : vector<16x16xf32>
    %514 = vector.extract_strided_slice %452 {offsets = [0, 124], sizes = [16, 16], strides = [1, 1]} : vector<16x160xf32> to vector<16x16xf32>
    %515 = arith.addf %513, %514 : vector<16x16xf32>
    %516 = vector.extract_strided_slice %436 {offsets = [0, 140], sizes = [16, 16], strides = [1, 1]} : vector<16x160xf32> to vector<16x16xf32>
    %517 = vector.extract_strided_slice %440 {offsets = [0, 141], sizes = [16, 16], strides = [1, 1]} : vector<16x160xf32> to vector<16x16xf32>
    %518 = arith.addf %516, %517 : vector<16x16xf32>
    %519 = vector.extract_strided_slice %444 {offsets = [0, 142], sizes = [16, 16], strides = [1, 1]} : vector<16x160xf32> to vector<16x16xf32>
    %520 = arith.addf %518, %519 : vector<16x16xf32>
    %521 = vector.extract_strided_slice %448 {offsets = [0, 143], sizes = [16, 16], strides = [1, 1]} : vector<16x160xf32> to vector<16x16xf32>
    %522 = arith.addf %520, %521 : vector<16x16xf32>
    %523 = vector.extract_strided_slice %452 {offsets = [0, 144], sizes = [16, 16], strides = [1, 1]} : vector<16x160xf32> to vector<16x16xf32>
    %524 = arith.addf %522, %523 : vector<16x16xf32>
    %525 = tpu.concatenate %461, %470, %479, %488, %497, %506, %515, %524 in 1 : vector<16x16xf32>, vector<16x16xf32>, vector<16x16xf32>, vector<16x16xf32>, vector<16x16xf32>, vector<16x16xf32>, vector<16x16xf32>, vector<16x16xf32> -> vector<16x128xf32>
    %c0_128 = arith.constant 0 : index
    %c0_129 = arith.constant 0 : index
    %c0_130 = arith.constant 0 : index
    %526 = vector.load %arg3[%c0_128, %c0_129, %c0_130] : memref<1x16x128xf32, #tpu.memory_space<vmem>>, vector<1x16x128xf32>
    %527 = vector.shape_cast %526 : vector<1x16x128xf32> to vector<16x128xf32>
    %528 = vector.shape_cast %525 : vector<16x128xf32> to vector<1x16x128xf32>
    tpu.vector_store %arg3[%c0_128, %c0_129, %c0_130], %528 {strides = array<i32>} : memref<1x16x128xf32, #tpu.memory_space<vmem>>, vector<1x16x128xf32>,
    return
  }
  func.func @transform_0(%arg0: i32) -> (i32, i32, i32, i32) {
    %c0_i32 = arith.constant 0 : i32
    %c0_i32_0 = arith.constant 0 : i32
    %c0_i32_1 = arith.constant 0 : i32
    %c0_i32_2 = arith.constant 0 : i32
    return %arg0, %c0_i32, %c0_i32_0, %c0_i32_1 : i32, i32, i32, i32
  }
  func.func @transform_1(%arg0: i32) -> (i32, i32) {
    %c0_i32 = arith.constant 0 : i32
    %c0_i32_0 = arith.constant 0 : i32
    %c0_i32_1 = arith.constant 0 : i32
    return %c0_i32, %c0_i32_0 : i32, i32
  }
  func.func @transform_2(%arg0: i32) -> (i32, i32, i32) {
    %c0_i32 = arith.constant 0 : i32
    %c0_i32_0 = arith.constant 0 : i32
    %c0_i32_1 = arith.constant 0 : i32
    return %arg0, %c0_i32, %c0_i32_0 : i32, i32, i32
  }
}

</mosaic_0001>

<llo_original>
// kernel: gabor_layer_forward.1
$region0: #{gabor_layer_forward.1}
  #allocation0 [shape = 'u32[]', space=smem, size = 0x4, offset = 0x4, fixed_abs, tag = 'smem constant byte address 0x4 - core index']
  #allocation1 [shape = 'u32[144,128]{1,0:T(1,128)}', space=vmem, size = 0x12000, scoped, tag = 'internal scratch']
  %s0 = inlined_call_operand.vmem [shape: f32[2,4,16,16], index: 0, kind: input, shape index: {}]
  %s1 = inlined_call_operand.vmem [shape: f32[100,160], index: 1, kind: input, shape index: {}]
  %s2 = inlined_call_operand.vmem [shape: f32[2,16,128], index: 2, kind: output, shape index: {}]
  %s3 = sld [smem:[#allocation0]]
  $region41: #{gabor_layer_forward.1} parent=0
    _
  %s5 = ssub.s32 1, %s3
  %s6 = scalar_select 0, %s5, %s3
  loop: start=0, step=1, limit=4
  $region2: #{gabor_layer_forward.1} parent=0 // loop_pre_header
    _
  $region3: #{gabor_layer_forward.1} parent=0 // loop_header
    %s8 = sphi 0, %s12
    %p9 = scmp.ge.s32.totalorder %s8, 4
    %s18 = sphi 0, %s20
    %s21 = sphi 0, %s18
    %s22 = sphi 0, %s21
    %s38 = sphi 0, %s22
    %s42 = sphi 0, %s42
    %s44 = sphi 0, %s42
    %s45 = sphi 0, %s44
    %s59 = sphi 0, %s45
    %s65 = sphi 0, %s67
    %s68 = sphi 0, %s65
    %s69 = sphi 0, %s68
    %s85 = sphi 0, %s69
  $region4: #{gabor_layer_forward.1} parent=0 // loop_header_branch
    %11 = sbr.rel (%p9) target = $region8
  $region5: #{gabor_layer_forward.1} parent=0 // loop_body
    %s13 = ssub.s32 %s8, 1
    %s14 = ssub.s32 %s8, 2
    %s15 = sadd.s32 %s8, 1
    %s16 = ssub.s32 %s8, %s15
    %p17 = scmp.eq.s32.totalorder %s16, 0
    %s19 = sadd.s32 %s18, 1
    %s20 = scalar_select %p17, %s18, %s19
    %p23 = pneg %p17
    %p24 = scmp.eq.s32.totalorder %s8, 1
    %p25 = por %p23, %p24
    %p26 = scmp.ne.s32.totalorder %s18, %s21
    %p27 = scmp.eq.s32.totalorder %s8, 0
    %p28 = por %p26, %p27
    %p29 = scmp.ne.s32.totalorder %s18, %s21
    %p30 = scmp.eq.s32.totalorder %s13, 1
    %p31 = por %p29, %p30
    %p32 = scmp.ne.s32.totalorder %s21, %s22
    %p33 = scmp.eq.s32.totalorder %s13, 0
    %p34 = por %p32, %p33
    %p35 = scmp.ne.s32.totalorder %s21, %s22
    %p36 = scmp.eq.s32.totalorder %s14, 1
    %p37 = por %p35, %p36
    %p39 = scmp.ne.s32.totalorder %s22, %s38
    %p40 = scmp.eq.s32.totalorder %s14, 0
    %p41 = por %p39, %p40
    %s43 = sadd.s32 %s42, 1
    %p46 = scmp.eq.s32.totalorder %s8, 1
    %p47 = scmp.ne.s32.totalorder %s42, %s44
    %p48 = scmp.eq.s32.totalorder %s8, 0
    %p49 = por %p47, %p48
    %p50 = scmp.ne.s32.totalorder %s42, %s44
    %p51 = scmp.eq.s32.totalorder %s13, 1
    %p52 = por %p50, %p51
    %p53 = scmp.ne.s32.totalorder %s44, %s45
    %p54 = scmp.eq.s32.totalorder %s13, 0
    %p55 = por %p53, %p54
    %p56 = scmp.ne.s32.totalorder %s44, %s45
    %p57 = scmp.eq.s32.totalorder %s14, 1
    %p58 = por %p56, %p57
    %p60 = scmp.ne.s32.totalorder %s45, %s59
    %p61 = scmp.eq.s32.totalorder %s14, 0
    %p62 = por %p60, %p61
    %s63 = ssub.s32 %s8, %s15
    %p64 = scmp.eq.s32.totalorder %s63, 0
    %s66 = sadd.s32 %s65, 1
    %s67 = scalar_select %p64, %s65, %s66
    %p70 = pneg %p64
    %p71 = scmp.eq.s32.totalorder %s8, 1
    %p72 = por %p70, %p71
    %p73 = scmp.ne.s32.totalorder %s65, %s68
    %p74 = scmp.eq.s32.totalorder %s8, 0
    %p75 = por %p73, %p74
    %p76 = scmp.ne.s32.totalorder %s65, %s68
    %p77 = scmp.eq.s32.totalorder %s13, 1
    %p78 = por %p76, %p77
    %p79 = scmp.ne.s32.totalorder %s68, %s69
    %p80 = scmp.eq.s32.totalorder %s13, 0
    %p81 = por %p79, %p80
    %p82 = scmp.ne.s32.totalorder %s68, %s69
    %p83 = scmp.eq.s32.totalorder %s14, 1
    %p84 = por %p82, %p83
    %p86 = scmp.ne.s32.totalorder %s69, %s85
    %p87 = scmp.eq.s32.totalorder %s14, 0
    %p88 = por %p86, %p87
    %p89 = scmp.le.s32.totalorder 1, %s8
    %p90 = scmp.lt.s32.totalorder %s8, 3
    %p91 = pnand %p89, %p90
    %p92 = pneg %p91
    // Predicated region
    $region9: #{gabor_layer_forward.1} parent=5 // pred_check
      _
    $region10: #{gabor_layer_forward.1} parent=5 // pred_check_branch
      %94 = sbr.rel (%p91) target = $region12
    $region11: #{gabor_layer_forward.1} parent=5 // pred_region
      %s95 = ssub.s32 %s8, 1
      // Predicated region
      $region13: #{gabor_layer_forward.1} parent=11 // pred_check
        %p96 = pneg %p55
      $region14: #{gabor_layer_forward.1} parent=11 // pred_check_branch
        %98 = sbr.rel (%p96) target = $region16
      $region15: #{gabor_layer_forward.1} parent=11 // pred_region
        _
      $region16: #{gabor_layer_forward.1} parent=11 // pred_fallthru
        _
    $region12: #{gabor_layer_forward.1} parent=5 // pred_fallthru
      _
    %p99 = scmp.lt.s32.totalorder %s8, 2
    // Predicated region
    $region17: #{gabor_layer_forward.1} parent=5 // pred_check
      %p100 = pneg %p99
    $region18: #{gabor_layer_forward.1} parent=5 // pred_check_branch
      %102 = sbr.rel (%p100) target = $region20
    $region19: #{gabor_layer_forward.1} parent=5 // pred_region
      // Predicated region
      $region21: #{gabor_layer_forward.1} parent=19 // pred_check
        %p103 = pneg %p28
      $region22: #{gabor_layer_forward.1} parent=19 // pred_check_branch
        %105 = sbr.rel (%p103) target = $region24
      $region23: #{gabor_layer_forward.1} parent=19 // pred_region
        %p106 = scmp.lt.s32.totalorder %s8, 1
        %s107 = scalar_select %p106, %s8, 1
        %s108 = smul.addr %s107, 8
        %s109 = smul.addr %s108, 8
        %s110 = scalar_lea.vmem %s0, %s109
      $region24: #{gabor_layer_forward.1} parent=19 // pred_fallthru
        _
    $region20: #{gabor_layer_forward.1} parent=5 // pred_fallthru
      _
    %p111 = scmp.le.s32.totalorder 1, %s8
    %p112 = scmp.lt.s32.totalorder %s8, 3
    %p113 = pnand %p111, %p112
    %p114 = pneg %p113
    // Predicated region
    $region25: #{gabor_layer_forward.1} parent=5 // pred_check
      _
    $region26: #{gabor_layer_forward.1} parent=5 // pred_check_branch
      %116 = sbr.rel (%p113) target = $region28
    $region27: #{gabor_layer_forward.1} parent=5 // pred_region
      %s117 = ssub.s32 %s8, 1
      %p118 = scmp.lt.s32.totalorder %s13, 1
      %s119 = scalar_select %p118, %s13, 1
      %s120 = smul.addr %s119, 8
      %s121 = smul.addr %s120, 8
      %s122 = scalar_lea.vmem %s0, %s121
      %p123 = pneg %p34
      %p124 = pneg %p31
      %p125 = pneg %p55
      %p126 = pneg %p52
      %p127 = pneg %p81
      %p128 = pneg %p78
      %p129 = scmp.lt.s32.totalorder %s13, 1
      %s130 = scalar_select %p129, %s13, 1
      %s131 = smul.addr %s130, 2
      %s132 = smul.addr %s131, 8
      %s133 = scalar_lea.vmem %s2, %s132
      %p134 = scmp.lt.s32.totalorder %s13, 1
      %s135 = scalar_select %p134, %s13, 1
      %s136 = smul.addr %s135, 8
      %s137 = smul.addr %s136, 8
      %s138 = scalar_lea.vmem %s0, %s137
      %p139 = scmp.lt.s32.totalorder %s13, 1
      %s140 = scalar_select %p139, %s13, 1
      %s141 = smul.addr %s140, 2
      %s142 = smul.addr %s141, 8
      %s143 = scalar_lea.vmem %s2, %s142
      %v144 = vld [vmem:[%s138] sm:$0xff]
      %v145 = vld [vmem:[%s138 + $0x8] sm:$0xff]
      %148 = vrot.lane.b32.xlu0 %v144, 2
      %v149 = vpop.permute.xlu0 %148
      %150 = vrot.lane.b32.xlu0 %v145, 2
      %v151 = vpop.permute.xlu0 %150
      %vm154 = vcmask 15360
      %v155 = vsel %vm154, 0.0, %v149
      %v156 = vsel %vm154, 0.0, %v151
      %vm157 = vcmask 146432
      %v158 = vsel %vm157, %v155, 0.0
      %v159 = vsel %vm157, %v156, 0.0
      %162 = vrot.lane.b32.xlu0 %v158, 20
      %v163 = vpop.permute.xlu0 %162
      %164 = vrot.lane.b32.xlu0 %v159, 20
      %v165 = vpop.permute.xlu0 %164
      %168 = vrot.lane.b32.xlu0 %v158, 40
      %v169 = vpop.permute.xlu0 %168
      %170 = vrot.lane.b32.xlu0 %v159, 40
      %v171 = vpop.permute.xlu0 %170
      %174 = vrot.lane.b32.xlu0 %v158, 60
      %v175 = vpop.permute.xlu0 %174
      %176 = vrot.lane.b32.xlu0 %v159, 60
      %v177 = vpop.permute.xlu0 %176
      %180 = vrot.lane.b32.xlu0 %v158, 80
      %v181 = vpop.permute.xlu0 %180
      %182 = vrot.lane.b32.xlu0 %v159, 80
      %v183 = vpop.permute.xlu0 %182
      %186 = vrot.lane.b32.xlu0 %v158, 100
      %v187 = vpop.permute.xlu0 %186
      %188 = vrot.lane.b32.xlu0 %v159, 100
      %v189 = vpop.permute.xlu0 %188
      %192 = vrot.lane.b32.xlu0 %v158, 120
      %v193 = vpop.permute.xlu0 %192
      %194 = vrot.lane.b32.xlu0 %v159, 120
      %v195 = vpop.permute.xlu0 %194
      %198 = vrot.lane.b32.xlu0 %v158, 12
      %v199 = vpop.permute.xlu0 %198
      %200 = vrot.lane.b32.xlu0 %v159, 12
      %v201 = vpop.permute.xlu0 %200
      %vm204 = vcmask 162816
      %v205 = vsel %vm204, %v158, %v163
      %v206 = vsel %vm204, %v159, %v165
      %vm207 = vcmask 326656
      %v208 = vsel %vm207, %v205, %v169
      %v209 = vsel %vm207, %v206, %v171
      %vm210 = vcmask 490496
      %v211 = vsel %vm210, %v208, %v175
      %v212 = vsel %vm210, %v209, %v177
      %vm213 = vcmask 654336
      %v214 = vsel %vm213, %v211, %v181
      %v215 = vsel %vm213, %v212, %v183
      %vm216 = vcmask 818176
      %v217 = vsel %vm216, %v214, %v187
      %v218 = vsel %vm216, %v215, %v189
      %vm219 = vcmask 982016
      %v220 = vsel %vm219, %v217, %v193
      %v221 = vsel %vm219, %v218, %v195
      %vm222 = vcmask 97280
      %v223 = vsel %vm222, %v193, %v199
      %v224 = vsel %vm222, %v195, %v201
      %vm229 = vcmask 1041408
      %v230 = vrot.slane %v220, 6
      %v231 = vrot.slane %v223, 6
      %v232 = vrot.slane %v221, 6
      %v233 = vsel %vm229, %v230, %v232
      %v234 = vrot.slane %v224, 6
      %v235 = vsel %vm229, %v231, %v234
      %v242 = vsel %vm229, 0.0, %v230
      %v243 = vsel %vm229, 0.0, %v231
      %v244 = vsel %vm229, %v232, 0.0
      %v245 = vsel %vm229, %v234, 0.0
      %v246 = vld [vmem:[%s1] ss:$8 sm:$0x3]
      %v248 = vlaneseq
      %v249 = vshrl.u32 %v248, 7
      %v250 = vsub.s32 0, %v249
      %v251 = vrot.slane %v246, %v250
      %v252 = vlaneseq
      %v253 = vshrl.u32 %v252, 7
      %v254 = vsub.s32 1, %v253
      %v255 = vrot.slane %v246, %v254
      %v258 = vmul.f32 %v242, %v251
      %v259 = vmul.f32 %v243, %v255
      %v260 = vmul.f32 %v233, %v251
      %v261 = vmul.f32 %v235, %v255
      %v262 = vadd.f32 %v258, 0.0
      %v263 = vadd.f32 %v259, 0.0
      %v264 = vadd.f32 %v260, 0.0
      %v265 = vadd.f32 %v261, 0.0
      %s266 = scalar_lea.vmem %s1, 1
      %v267 = vld [vmem:[%s266] ss:$8 sm:$0x3]
      %v269 = vlaneseq
      %v270 = vshrl.u32 %v269, 7
      %v271 = vsub.s32 0, %v270
      %v272 = vrot.slane %v267, %v271
      %v273 = vlaneseq
      %v274 = vshrl.u32 %v273, 7
      %v275 = vsub.s32 1, %v274
      %v276 = vrot.slane %v267, %v275
      %v279 = vmul.f32 %v242, %v272
      %v280 = vmul.f32 %v243, %v276
      %v281 = vmul.f32 %v233, %v272
      %v282 = vmul.f32 %v235, %v276
      %v283 = vadd.f32 %v279, 0.0
      %v284 = vadd.f32 %v280, 0.0
      %v285 = vadd.f32 %v281, 0.0
      %v286 = vadd.f32 %v282, 0.0
      %s287 = scalar_lea.vmem %s1, 2
      %v288 = vld [vmem:[%s287] ss:$8 sm:$0x3]
      %v290 = vlaneseq
      %v291 = vshrl.u32 %v290, 7
      %v292 = vsub.s32 0, %v291
      %v293 = vrot.slane %v288, %v292
      %v294 = vlaneseq
      %v295 = vshrl.u32 %v294, 7
      %v296 = vsub.s32 1, %v295
      %v297 = vrot.slane %v288, %v296
      %v300 = vmul.f32 %v242, %v293
      %v301 = vmul.f32 %v243, %v297
      %v302 = vmul.f32 %v233, %v293
      %v303 = vmul.f32 %v235, %v297
      %v304 = vadd.f32 %v300, 0.0
      %v305 = vadd.f32 %v301, 0.0
      %v306 = vadd.f32 %v302, 0.0
      %v307 = vadd.f32 %v303, 0.0
      %s308 = scalar_lea.vmem %s1, 3
      %v309 = vld [vmem:[%s308] ss:$8 sm:$0x3]
      %v311 = vlaneseq
      %v312 = vshrl.u32 %v311, 7
      %v313 = vsub.s32 0, %v312
      %v314 = vrot.slane %v309, %v313
      %v315 = vlaneseq
      %v316 = vshrl.u32 %v315, 7
      %v317 = vsub.s32 1, %v316
      %v318 = vrot.slane %v309, %v317
      %v321 = vmul.f32 %v242, %v314
      %v322 = vmul.f32 %v243, %v318
      %v323 = vmul.f32 %v233, %v314
      %v324 = vmul.f32 %v235, %v318
      %v325 = vadd.f32 %v321, 0.0
      %v326 = vadd.f32 %v322, 0.0
      %v327 = vadd.f32 %v323, 0.0
      %v328 = vadd.f32 %v324, 0.0
      %s329 = scalar_lea.vmem %s1, 4
      %v330 = vld [vmem:[%s329] ss:$8 sm:$0x3]
      %v332 = vlaneseq
      %v333 = vshrl.u32 %v332, 7
      %v334 = vsub.s32 0, %v333
      %v335 = vrot.slane %v330, %v334
      %v336 = vlaneseq
      %v337 = vshrl.u32 %v336, 7
      %v338 = vsub.s32 1, %v337
      %v339 = vrot.slane %v330, %v338
      %v342 = vmul.f32 %v242, %v335
      %v343 = vmul.f32 %v243, %v339
      %v344 = vmul.f32 %v233, %v335
      %v345 = vmul.f32 %v235, %v339
      %v346 = vadd.f32 %v342, 0.0
      %v347 = vadd.f32 %v343, 0.0
      %v348 = vadd.f32 %v344, 0.0
      %v349 = vadd.f32 %v345, 0.0
      %s350 = scalar_lea.vmem %s1, 5
      %v351 = vld [vmem:[%s350] ss:$8 sm:$0x3]
      %v353 = vlaneseq
      %v354 = vshrl.u32 %v353, 7
      %v355 = vsub.s32 0, %v354
      %v356 = vrot.slane %v351, %v355
      %v357 = vlaneseq
      %v358 = vshrl.u32 %v357, 7
      %v359 = vsub.s32 1, %v358
      %v360 = vrot.slane %v351, %v359
      %v363 = vmul.f32 %v242, %v356
      %v364 = vmul.f32 %v243, %v360
      %v365 = vmul.f32 %v233, %v356
      %v366 = vmul.f32 %v235, %v360
      %v367 = vmul.f32 %v244, %v356
      %v368 = vmul.f32 %v245, %v360
      %vm375 = vcmask 1046528
      %v376 = vrot.slane %v363, 1
      %v377 = vrot.slane %v365, 1
      %v378 = vsel %vm375, %v376, %v377
      %v379 = vrot.slane %v364, 1
      %v380 = vrot.slane %v366, 1
      %v381 = vsel %vm375, %v379, %v380
      %v382 = vrot.slane %v367, 1
      %v383 = vsel %vm375, %v377, %v382
      %v384 = vrot.slane %v368, 1
      %v385 = vsel %vm375, %v380, %v384
      %v390 = vadd.f32 %v262, %v378
      %v391 = vadd.f32 %v263, %v381
      %v392 = vadd.f32 %v264, %v383
      %v393 = vadd.f32 %v265, %v385
      %s394 = scalar_lea.vmem %s1, 6
      %v395 = vld [vmem:[%s394] ss:$8 sm:$0x3]
      %v397 = vlaneseq
      %v398 = vshrl.u32 %v397, 7
      %v399 = vsub.s32 0, %v398
      %v400 = vrot.slane %v395, %v399
      %v401 = vlaneseq
      %v402 = vshrl.u32 %v401, 7
      %v403 = vsub.s32 1, %v402
      %v404 = vrot.slane %v395, %v403
      %v407 = vmul.f32 %v242, %v400
      %v408 = vmul.f32 %v243, %v404
      %v409 = vmul.f32 %v233, %v400
      %v410 = vmul.f32 %v235, %v404
      %v411 = vmul.f32 %v244, %v400
      %v412 = vmul.f32 %v245, %v404
      %v419 = vrot.slane %v407, 1
      %v420 = vrot.slane %v409, 1
      %v421 = vsel %vm375, %v419, %v420
      %v422 = vrot.slane %v408, 1
      %v423 = vrot.slane %v410, 1
      %v424 = vsel %vm375, %v422, %v423
      %v425 = vrot.slane %v411, 1
      %v426 = vsel %vm375, %v420, %v425
      %v427 = vrot.slane %v412, 1
      %v428 = vsel %vm375, %v423, %v427
      %v433 = vadd.f32 %v283, %v421
      %v434 = vadd.f32 %v284, %v424
      %v435 = vadd.f32 %v285, %v426
      %v436 = vadd.f32 %v286, %v428
      %s437 = scalar_lea.vmem %s1, 7
      %v438 = vld [vmem:[%s437] ss:$8 sm:$0x3]
      %v440 = vlaneseq
      %v441 = vshrl.u32 %v440, 7
      %v442 = vsub.s32 0, %v441
      %v443 = vrot.slane %v438, %v442
      %v444 = vlaneseq
      %v445 = vshrl.u32 %v444, 7
      %v446 = vsub.s32 1, %v445
      %v447 = vrot.slane %v438, %v446
      %v450 = vmul.f32 %v242, %v443
      %v451 = vmul.f32 %v243, %v447
      %v452 = vmul.f32 %v233, %v443
      %v453 = vmul.f32 %v235, %v447
      %v454 = vmul.f32 %v244, %v443
      %v455 = vmul.f32 %v245, %v447
      %v462 = vrot.slane %v450, 1
      %v463 = vrot.slane %v452, 1
      %v464 = vsel %vm375, %v462, %v463
      %v465 = vrot.slane %v451, 1
      %v466 = vrot.slane %v453, 1
      %v467 = vsel %vm375, %v465, %v466
      %v468 = vrot.slane %v454, 1
      %v469 = vsel %vm375, %v463, %v468
      %v470 = vrot.slane %v455, 1
      %v471 = vsel %vm375, %v466, %v470
      %v476 = vadd.f32 %v304, %v464
      %v477 = vadd.f32 %v305, %v467
      %v478 = vadd.f32 %v306, %v469
      %v479 = vadd.f32 %v307, %v471
      %s480 = scalar_lea.vmem %s1, 16
      %v481 = vld [vmem:[%s480] ss:$8 sm:$0x3]
      %v483 = vlaneseq
      %v484 = vshrl.u32 %v483, 7
      %v485 = vsub.s32 0, %v484
      %v486 = vrot.slane %v481, %v485
      %v487 = vlaneseq
      %v488 = vshrl.u32 %v487, 7
      %v489 = vsub.s32 1, %v488
      %v490 = vrot.slane %v481, %v489
      %v493 = vmul.f32 %v242, %v486
      %v494 = vmul.f32 %v243, %v490
      %v495 = vmul.f32 %v233, %v486
      %v496 = vmul.f32 %v235, %v490
      %v497 = vmul.f32 %v244, %v486
      %v498 = vmul.f32 %v245, %v490
      %v505 = vrot.slane %v493, 1
      %v506 = vrot.slane %v495, 1
      %v507 = vsel %vm375, %v505, %v506
      %v508 = vrot.slane %v494, 1
      %v509 = vrot.slane %v496, 1
      %v510 = vsel %vm375, %v508, %v509
      %v511 = vrot.slane %v497, 1
      %v512 = vsel %vm375, %v506, %v511
      %v513 = vrot.slane %v498, 1
      %v514 = vsel %vm375, %v509, %v513
      %v519 = vadd.f32 %v325, %v507
      %v520 = vadd.f32 %v326, %v510
      %v521 = vadd.f32 %v327, %v512
      %v522 = vadd.f32 %v328, %v514
      %s523 = scalar_lea.vmem %s1, 17
      %v524 = vld [vmem:[%s523] ss:$8 sm:$0x3]
      %v526 = vlaneseq
      %v527 = vshrl.u32 %v526, 7
      %v528 = vsub.s32 0, %v527
      %v529 = vrot.slane %v524, %v528
      %v530 = vlaneseq
      %v531 = vshrl.u32 %v530, 7
      %v532 = vsub.s32 1, %v531
      %v533 = vrot.slane %v524, %v532
      %v536 = vmul.f32 %v242, %v529
      %v537 = vmul.f32 %v243, %v533
      %v538 = vmul.f32 %v233, %v529
      %v539 = vmul.f32 %v235, %v533
      %v540 = vmul.f32 %v244, %v529
      %v541 = vmul.f32 %v245, %v533
      %v548 = vrot.slane %v536, 1
      %v549 = vrot.slane %v538, 1
      %v550 = vsel %vm375, %v548, %v549
      %v551 = vrot.slane %v537, 1
      %v552 = vrot.slane %v539, 1
      %v553 = vsel %vm375, %v551, %v552
      %v554 = vrot.slane %v540, 1
      %v555 = vsel %vm375, %v549, %v554
      %v556 = vrot.slane %v541, 1
      %v557 = vsel %vm375, %v552, %v556
      %v562 = vadd.f32 %v346, %v550
      %v563 = vadd.f32 %v347, %v553
      %v564 = vadd.f32 %v348, %v555
      %v565 = vadd.f32 %v349, %v557
      %s566 = scalar_lea.vmem %s1, 18
      %v567 = vld [vmem:[%s566] ss:$8 sm:$0x3]
      %v569 = vlaneseq
      %v570 = vshrl.u32 %v569, 7
      %v571 = vsub.s32 0, %v570
      %v572 = vrot.slane %v567, %v571
      %v573 = vlaneseq
      %v574 = vshrl.u32 %v573, 7
      %v575 = vsub.s32 1, %v574
      %v576 = vrot.slane %v567, %v575
      %v579 = vmul.f32 %v242, %v572
      %v580 = vmul.f32 %v243, %v576
      %v581 = vmul.f32 %v233, %v572
      %v582 = vmul.f32 %v235, %v576
      %v583 = vmul.f32 %v244, %v572
      %v584 = vmul.f32 %v245, %v576
      %vm591 = vcmask 1045504
      %v592 = vrot.slane %v579, 2
      %v593 = vrot.slane %v581, 2
      %v594 = vsel %vm591, %v592, %v593
      %v595 = vrot.slane %v580, 2
      %v596 = vrot.slane %v582, 2
      %v597 = vsel %vm591, %v595, %v596
      %v598 = vrot.slane %v583, 2
      %v599 = vsel %vm591, %v593, %v598
      %v600 = vrot.slane %v584, 2
      %v601 = vsel %vm591, %v596, %v600
      %v606 = vadd.f32 %v390, %v594
      %v607 = vadd.f32 %v391, %v597
      %v608 = vadd.f32 %v392, %v599
      %v609 = vadd.f32 %v393, %v601
      %s610 = scalar_lea.vmem %s1, 19
      %v611 = vld [vmem:[%s610] ss:$8 sm:$0x3]
      %v613 = vlaneseq
      %v614 = vshrl.u32 %v613, 7
      %v615 = vsub.s32 0, %v614
      %v616 = vrot.slane %v611, %v615
      %v617 = vlaneseq
      %v618 = vshrl.u32 %v617, 7
      %v619 = vsub.s32 1, %v618
      %v620 = vrot.slane %v611, %v619
      %v623 = vmul.f32 %v242, %v616
      %v624 = vmul.f32 %v243, %v620
      %v625 = vmul.f32 %v233, %v616
      %v626 = vmul.f32 %v235, %v620
      %v627 = vmul.f32 %v244, %v616
      %v628 = vmul.f32 %v245, %v620
      %v635 = vrot.slane %v623, 2
      %v636 = vrot.slane %v625, 2
      %v637 = vsel %vm591, %v635, %v636
      %v638 = vrot.slane %v624, 2
      %v639 = vrot.slane %v626, 2
      %v640 = vsel %vm591, %v638, %v639
      %v641 = vrot.slane %v627, 2
      %v642 = vsel %vm591, %v636, %v641
      %v643 = vrot.slane %v628, 2
      %v644 = vsel %vm591, %v639, %v643
      %v649 = vadd.f32 %v433, %v637
      %v650 = vadd.f32 %v434, %v640
      %v651 = vadd.f32 %v435, %v642
      %v652 = vadd.f32 %v436, %v644
      %s653 = scalar_lea.vmem %s1, 20
      %v654 = vld [vmem:[%s653] ss:$8 sm:$0x3]
      %v656 = vlaneseq
      %v657 = vshrl.u32 %v656, 7
      %v658 = vsub.s32 0, %v657
      %v659 = vrot.slane %v654, %v658
      %v660 = vlaneseq
      %v661 = vshrl.u32 %v660, 7
      %v662 = vsub.s32 1, %v661
      %v663 = vrot.slane %v654, %v662
      %v666 = vmul.f32 %v242, %v659
      %v667 = vmul.f32 %v243, %v663
      %v668 = vmul.f32 %v233, %v659
      %v669 = vmul.f32 %v235, %v663
      %v670 = vmul.f32 %v244, %v659
      %v671 = vmul.f32 %v245, %v663
      %v678 = vrot.slane %v666, 2
      %v679 = vrot.slane %v668, 2
      %v680 = vsel %vm591, %v678, %v679
      %v681 = vrot.slane %v667, 2
      %v682 = vrot.slane %v669, 2
      %v683 = vsel %vm591, %v681, %v682
      %v684 = vrot.slane %v670, 2
      %v685 = vsel %vm591, %v679, %v684
      %v686 = vrot.slane %v671, 2
      %v687 = vsel %vm591, %v682, %v686
      %v692 = vadd.f32 %v476, %v680
      %v693 = vadd.f32 %v477, %v683
      %v694 = vadd.f32 %v478, %v685
      %v695 = vadd.f32 %v479, %v687
      %s696 = scalar_lea.vmem %s1, 21
      %v697 = vld [vmem:[%s696] ss:$8 sm:$0x3]
      %v699 = vlaneseq
      %v700 = vshrl.u32 %v699, 7
      %v701 = vsub.s32 0, %v700
      %v702 = vrot.slane %v697, %v701
      %v703 = vlaneseq
      %v704 = vshrl.u32 %v703, 7
      %v705 = vsub.s32 1, %v704
      %v706 = vrot.slane %v697, %v705
      %v709 = vmul.f32 %v242, %v702
      %v710 = vmul.f32 %v243, %v706
      %v711 = vmul.f32 %v233, %v702
      %v712 = vmul.f32 %v235, %v706
      %v713 = vmul.f32 %v244, %v702
      %v714 = vmul.f32 %v245, %v706
      %v721 = vrot.slane %v709, 2
      %v722 = vrot.slane %v711, 2
      %v723 = vsel %vm591, %v721, %v722
      %v724 = vrot.slane %v710, 2
      %v725 = vrot.slane %v712, 2
      %v726 = vsel %vm591, %v724, %v725
      %v727 = vrot.slane %v713, 2
      %v728 = vsel %vm591, %v722, %v727
      %v729 = vrot.slane %v714, 2
      %v730 = vsel %vm591, %v725, %v729
      %v735 = vadd.f32 %v519, %v723
      %v736 = vadd.f32 %v520, %v726
      %v737 = vadd.f32 %v521, %v728
      %v738 = vadd.f32 %v522, %v730
      %s739 = scalar_lea.vmem %s1, 22
      %v740 = vld [vmem:[%s739] ss:$8 sm:$0x3]
      %v742 = vlaneseq
      %v743 = vshrl.u32 %v742, 7
      %v744 = vsub.s32 0, %v743
      %v745 = vrot.slane %v740, %v744
      %v746 = vlaneseq
      %v747 = vshrl.u32 %v746, 7
      %v748 = vsub.s32 1, %v747
      %v749 = vrot.slane %v740, %v748
      %v752 = vmul.f32 %v242, %v745
      %v753 = vmul.f32 %v243, %v749
      %v754 = vmul.f32 %v233, %v745
      %v755 = vmul.f32 %v235, %v749
      %v756 = vmul.f32 %v244, %v745
      %v757 = vmul.f32 %v245, %v749
      %v764 = vrot.slane %v752, 2
      %v765 = vrot.slane %v754, 2
      %v766 = vsel %vm591, %v764, %v765
      %v767 = vrot.slane %v753, 2
      %v768 = vrot.slane %v755, 2
      %v769 = vsel %vm591, %v767, %v768
      %v770 = vrot.slane %v756, 2
      %v771 = vsel %vm591, %v765, %v770
      %v772 = vrot.slane %v757, 2
      %v773 = vsel %vm591, %v768, %v772
      %v778 = vadd.f32 %v562, %v766
      %v779 = vadd.f32 %v563, %v769
      %v780 = vadd.f32 %v564, %v771
      %v781 = vadd.f32 %v565, %v773
      %s782 = scalar_lea.vmem %s1, 23
      %v783 = vld [vmem:[%s782] ss:$8 sm:$0x3]
      %v785 = vlaneseq
      %v786 = vshrl.u32 %v785, 7
      %v787 = vsub.s32 0, %v786
      %v788 = vrot.slane %v783, %v787
      %v789 = vlaneseq
      %v790 = vshrl.u32 %v789, 7
      %v791 = vsub.s32 1, %v790
      %v792 = vrot.slane %v783, %v791
      %v795 = vmul.f32 %v242, %v788
      %v796 = vmul.f32 %v243, %v792
      %v797 = vmul.f32 %v233, %v788
      %v798 = vmul.f32 %v235, %v792
      %v799 = vmul.f32 %v244, %v788
      %v800 = vmul.f32 %v245, %v792
      %vm807 = vcmask 1044480
      %v808 = vrot.slane %v795, 3
      %v809 = vrot.slane %v797, 3
      %v810 = vsel %vm807, %v808, %v809
      %v811 = vrot.slane %v796, 3
      %v812 = vrot.slane %v798, 3
      %v813 = vsel %vm807, %v811, %v812
      %v814 = vrot.slane %v799, 3
      %v815 = vsel %vm807, %v809, %v814
      %v816 = vrot.slane %v800, 3
      %v817 = vsel %vm807, %v812, %v816
      %v822 = vadd.f32 %v606, %v810
      %v823 = vadd.f32 %v607, %v813
      %v824 = vadd.f32 %v608, %v815
      %v825 = vadd.f32 %v609, %v817
      %s826 = scalar_lea.vmem %s1, 32
      %v827 = vld [vmem:[%s826] ss:$8 sm:$0x3]
      %v829 = vlaneseq
      %v830 = vshrl.u32 %v829, 7
      %v831 = vsub.s32 0, %v830
      %v832 = vrot.slane %v827, %v831
      %v833 = vlaneseq
      %v834 = vshrl.u32 %v833, 7
      %v835 = vsub.s32 1, %v834
      %v836 = vrot.slane %v827, %v835
      %v839 = vmul.f32 %v242, %v832
      %v840 = vmul.f32 %v243, %v836
      %v841 = vmul.f32 %v233, %v832
      %v842 = vmul.f32 %v235, %v836
      %v843 = vmul.f32 %v244, %v832
      %v844 = vmul.f32 %v245, %v836
      %v851 = vrot.slane %v839, 3
      %v852 = vrot.slane %v841, 3
      %v853 = vsel %vm807, %v851, %v852
      %v854 = vrot.slane %v840, 3
      %v855 = vrot.slane %v842, 3
      %v856 = vsel %vm807, %v854, %v855
      %v857 = vrot.slane %v843, 3
      %v858 = vsel %vm807, %v852, %v857
      %v859 = vrot.slane %v844, 3
      %v860 = vsel %vm807, %v855, %v859
      %v865 = vadd.f32 %v649, %v853
      %v866 = vadd.f32 %v650, %v856
      %v867 = vadd.f32 %v651, %v858
      %v868 = vadd.f32 %v652, %v860
      %s869 = scalar_lea.vmem %s1, 33
      %v870 = vld [vmem:[%s869] ss:$8 sm:$0x3]
      %v872 = vlaneseq
      %v873 = vshrl.u32 %v872, 7
      %v874 = vsub.s32 0, %v873
      %v875 = vrot.slane %v870, %v874
      %v876 = vlaneseq
      %v877 = vshrl.u32 %v876, 7
      %v878 = vsub.s32 1, %v877
      %v879 = vrot.slane %v870, %v878
      %v882 = vmul.f32 %v242, %v875
      %v883 = vmul.f32 %v243, %v879
      %v884 = vmul.f32 %v233, %v875
      %v885 = vmul.f32 %v235, %v879
      %v886 = vmul.f32 %v244, %v875
      %v887 = vmul.f32 %v245, %v879
      %v894 = vrot.slane %v882, 3
      %v895 = vrot.slane %v884, 3
      %v896 = vsel %vm807, %v894, %v895
      %v897 = vrot.slane %v883, 3
      %v898 = vrot.slane %v885, 3
      %v899 = vsel %vm807, %v897, %v898
      %v900 = vrot.slane %v886, 3
      %v901 = vsel %vm807, %v895, %v900
      %v902 = vrot.slane %v887, 3
      %v903 = vsel %vm807, %v898, %v902
      %v908 = vadd.f32 %v692, %v896
      %v909 = vadd.f32 %v693, %v899
      %v910 = vadd.f32 %v694, %v901
      %v911 = vadd.f32 %v695, %v903
      %s912 = scalar_lea.vmem %s1, 34
      %v913 = vld [vmem:[%s912] ss:$8 sm:$0x3]
      %v915 = vlaneseq
      %v916 = vshrl.u32 %v915, 7
      %v917 = vsub.s32 0, %v916
      %v918 = vrot.slane %v913, %v917
      %v919 = vlaneseq
      %v920 = vshrl.u32 %v919, 7
      %v921 = vsub.s32 1, %v920
      %v922 = vrot.slane %v913, %v921
      %v925 = vmul.f32 %v242, %v918
      %v926 = vmul.f32 %v243, %v922
      %v927 = vmul.f32 %v233, %v918
      %v928 = vmul.f32 %v235, %v922
      %v929 = vmul.f32 %v244, %v918
      %v930 = vmul.f32 %v245, %v922
      %v937 = vrot.slane %v925, 3
      %v938 = vrot.slane %v927, 3
      %v939 = vsel %vm807, %v937, %v938
      %v940 = vrot.slane %v926, 3
      %v941 = vrot.slane %v928, 3
      %v942 = vsel %vm807, %v940, %v941
      %v943 = vrot.slane %v929, 3
      %v944 = vsel %vm807, %v938, %v943
      %v945 = vrot.slane %v930, 3
      %v946 = vsel %vm807, %v941, %v945
      %v951 = vadd.f32 %v735, %v939
      %v952 = vadd.f32 %v736, %v942
      %v953 = vadd.f32 %v737, %v944
      %v954 = vadd.f32 %v738, %v946
      %s955 = scalar_lea.vmem %s1, 35
      %v956 = vld [vmem:[%s955] ss:$8 sm:$0x3]
      %v958 = vlaneseq
      %v959 = vshrl.u32 %v958, 7
      %v960 = vsub.s32 0, %v959
      %v961 = vrot.slane %v956, %v960
      %v962 = vlaneseq
      %v963 = vshrl.u32 %v962, 7
      %v964 = vsub.s32 1, %v963
      %v965 = vrot.slane %v956, %v964
      %v968 = vmul.f32 %v242, %v961
      %v969 = vmul.f32 %v243, %v965
      %v970 = vmul.f32 %v233, %v961
      %v971 = vmul.f32 %v235, %v965
      %v972 = vmul.f32 %v244, %v961
      %v973 = vmul.f32 %v245, %v965
      %v980 = vrot.slane %v968, 3
      %v981 = vrot.slane %v970, 3
      %v982 = vsel %vm807, %v980, %v981
      %v983 = vrot.slane %v969, 3
      %v984 = vrot.slane %v971, 3
      %v985 = vsel %vm807, %v983, %v984
      %v986 = vrot.slane %v972, 3
      %v987 = vsel %vm807, %v981, %v986
      %v988 = vrot.slane %v973, 3
      %v989 = vsel %vm807, %v984, %v988
      %v994 = vadd.f32 %v778, %v982
      %v995 = vadd.f32 %v779, %v985
      %v996 = vadd.f32 %v780, %v987
      %v997 = vadd.f32 %v781, %v989
      %s998 = scalar_lea.vmem %s1, 36
      %v999 = vld [vmem:[%s998] ss:$8 sm:$0x3]
      %v1001 = vlaneseq
      %v1002 = vshrl.u32 %v1001, 7
      %v1003 = vsub.s32 0, %v1002
      %v1004 = vrot.slane %v999, %v1003
      %v1005 = vlaneseq
      %v1006 = vshrl.u32 %v1005, 7
      %v1007 = vsub.s32 1, %v1006
      %v1008 = vrot.slane %v999, %v1007
      %v1011 = vmul.f32 %v242, %v1004
      %v1012 = vmul.f32 %v243, %v1008
      %v1013 = vmul.f32 %v233, %v1004
      %v1014 = vmul.f32 %v235, %v1008
      %v1015 = vmul.f32 %v244, %v1004
      %v1016 = vmul.f32 %v245, %v1008
      %vm1023 = vcmask 1043456
      %v1024 = vrot.slane %v1011, 4
      %v1025 = vrot.slane %v1013, 4
      %v1026 = vsel %vm1023, %v1024, %v1025
      %v1027 = vrot.slane %v1012, 4
      %v1028 = vrot.slane %v1014, 4
      %v1029 = vsel %vm1023, %v1027, %v1028
      %v1030 = vrot.slane %v1015, 4
      %v1031 = vsel %vm1023, %v1025, %v1030
      %v1032 = vrot.slane %v1016, 4
      %v1033 = vsel %vm1023, %v1028, %v1032
      %v1038 = vadd.f32 %v822, %v1026
      %v1039 = vadd.f32 %v823, %v1029
      %v1040 = vadd.f32 %v824, %v1031
      %v1041 = vadd.f32 %v825, %v1033
      %s1042 = scalar_lea.vmem %s1, 37
      %v1043 = vld [vmem:[%s1042] ss:$8 sm:$0x3]
      %v1045 = vlaneseq
      %v1046 = vshrl.u32 %v1045, 7
      %v1047 = vsub.s32 0, %v1046
      %v1048 = vrot.slane %v1043, %v1047
      %v1049 = vlaneseq
      %v1050 = vshrl.u32 %v1049, 7
      %v1051 = vsub.s32 1, %v1050
      %v1052 = vrot.slane %v1043, %v1051
      %v1055 = vmul.f32 %v242, %v1048
      %v1056 = vmul.f32 %v243, %v1052
      %v1057 = vmul.f32 %v233, %v1048
      %v1058 = vmul.f32 %v235, %v1052
      %v1059 = vmul.f32 %v244, %v1048
      %v1060 = vmul.f32 %v245, %v1052
      %v1067 = vrot.slane %v1055, 4
      %v1068 = vrot.slane %v1057, 4
      %v1069 = vsel %vm1023, %v1067, %v1068
      %v1070 = vrot.slane %v1056, 4
      %v1071 = vrot.slane %v1058, 4
      %v1072 = vsel %vm1023, %v1070, %v1071
      %v1073 = vrot.slane %v1059, 4
      %v1074 = vsel %vm1023, %v1068, %v1073
      %v1075 = vrot.slane %v1060, 4
      %v1076 = vsel %vm1023, %v1071, %v1075
      %v1081 = vadd.f32 %v865, %v1069
      %v1082 = vadd.f32 %v866, %v1072
      %v1083 = vadd.f32 %v867, %v1074
      %v1084 = vadd.f32 %v868, %v1076
      %s1085 = scalar_lea.vmem %s1, 38
      %v1086 = vld [vmem:[%s1085] ss:$8 sm:$0x3]
      %v1088 = vlaneseq
      %v1089 = vshrl.u32 %v1088, 7
      %v1090 = vsub.s32 0, %v1089
      %v1091 = vrot.slane %v1086, %v1090
      %v1092 = vlaneseq
      %v1093 = vshrl.u32 %v1092, 7
      %v1094 = vsub.s32 1, %v1093
      %v1095 = vrot.slane %v1086, %v1094
      %v1098 = vmul.f32 %v242, %v1091
      %v1099 = vmul.f32 %v243, %v1095
      %v1100 = vmul.f32 %v233, %v1091
      %v1101 = vmul.f32 %v235, %v1095
      %v1102 = vmul.f32 %v244, %v1091
      %v1103 = vmul.f32 %v245, %v1095
      %v1110 = vrot.slane %v1098, 4
      %v1111 = vrot.slane %v1100, 4
      %v1112 = vsel %vm1023, %v1110, %v1111
      %v1113 = vrot.slane %v1099, 4
      %v1114 = vrot.slane %v1101, 4
      %v1115 = vsel %vm1023, %v1113, %v1114
      %v1116 = vrot.slane %v1102, 4
      %v1117 = vsel %vm1023, %v1111, %v1116
      %v1118 = vrot.slane %v1103, 4
      %v1119 = vsel %vm1023, %v1114, %v1118
      %v1124 = vadd.f32 %v908, %v1112
      %v1125 = vadd.f32 %v909, %v1115
      %v1126 = vadd.f32 %v910, %v1117
      %v1127 = vadd.f32 %v911, %v1119
      %s1128 = scalar_lea.vmem %s1, 39
      %v1129 = vld [vmem:[%s1128] ss:$8 sm:$0x3]
      %v1131 = vlaneseq
      %v1132 = vshrl.u32 %v1131, 7
      %v1133 = vsub.s32 0, %v1132
      %v1134 = vrot.slane %v1129, %v1133
      %v1135 = vlaneseq
      %v1136 = vshrl.u32 %v1135, 7
      %v1137 = vsub.s32 1, %v1136
      %v1138 = vrot.slane %v1129, %v1137
      %v1141 = vmul.f32 %v242, %v1134
      %v1142 = vmul.f32 %v243, %v1138
      %v1143 = vmul.f32 %v233, %v1134
      %v1144 = vmul.f32 %v235, %v1138
      %v1145 = vmul.f32 %v244, %v1134
      %v1146 = vmul.f32 %v245, %v1138
      %v1153 = vrot.slane %v1141, 4
      %v1154 = vrot.slane %v1143, 4
      %v1155 = vsel %vm1023, %v1153, %v1154
      %v1156 = vrot.slane %v1142, 4
      %v1157 = vrot.slane %v1144, 4
      %v1158 = vsel %vm1023, %v1156, %v1157
      %v1159 = vrot.slane %v1145, 4
      %v1160 = vsel %vm1023, %v1154, %v1159
      %v1161 = vrot.slane %v1146, 4
      %v1162 = vsel %vm1023, %v1157, %v1161
      %v1167 = vadd.f32 %v951, %v1155
      %v1168 = vadd.f32 %v952, %v1158
      %v1169 = vadd.f32 %v953, %v1160
      %v1170 = vadd.f32 %v954, %v1162
      %s1171 = scalar_lea.vmem %s1, 48
      %v1172 = vld [vmem:[%s1171] ss:$8 sm:$0x3]
      %v1174 = vlaneseq
      %v1175 = vshrl.u32 %v1174, 7
      %v1176 = vsub.s32 0, %v1175
      %v1177 = vrot.slane %v1172, %v1176
      %v1178 = vlaneseq
      %v1179 = vshrl.u32 %v1178, 7
      %v1180 = vsub.s32 1, %v1179
      %v1181 = vrot.slane %v1172, %v1180
      %v1184 = vmul.f32 %v242, %v1177
      %v1185 = vmul.f32 %v243, %v1181
      %v1186 = vmul.f32 %v233, %v1177
      %v1187 = vmul.f32 %v235, %v1181
      %v1188 = vmul.f32 %v244, %v1177
      %v1189 = vmul.f32 %v245, %v1181
      %v1196 = vrot.slane %v1184, 4
      %v1197 = vrot.slane %v1186, 4
      %v1198 = vsel %vm1023, %v1196, %v1197
      %v1199 = vrot.slane %v1185, 4
      %v1200 = vrot.slane %v1187, 4
      %v1201 = vsel %vm1023, %v1199, %v1200
      %v1202 = vrot.slane %v1188, 4
      %v1203 = vsel %vm1023, %v1197, %v1202
      %v1204 = vrot.slane %v1189, 4
      %v1205 = vsel %vm1023, %v1200, %v1204
      %v1210 = vadd.f32 %v994, %v1198
      %v1211 = vadd.f32 %v995, %v1201
      %v1212 = vadd.f32 %v996, %v1203
      %v1213 = vadd.f32 %v997, %v1205
      %s1214 = scalar_lea.vmem %s138, 16
      %v1215 = vld [vmem:[%s1214] sm:$0xff]
      %v1216 = vld [vmem:[%s1214 + $0x8] sm:$0xff]
      %1219 = vrot.lane.b32.xlu0 %v1215, 2
      %v1220 = vpop.permute.xlu0 %1219
      %1221 = vrot.lane.b32.xlu0 %v1216, 2
      %v1222 = vpop.permute.xlu0 %1221
      %v1225 = vsel %vm154, 0.0, %v1220
      %v1226 = vsel %vm154, 0.0, %v1222
      %v1227 = vsel %vm157, %v1225, 0.0
      %v1228 = vsel %vm157, %v1226, 0.0
      %1231 = vrot.lane.b32.xlu0 %v1227, 20
      %v1232 = vpop.permute.xlu0 %1231
      %1233 = vrot.lane.b32.xlu0 %v1228, 20
      %v1234 = vpop.permute.xlu0 %1233
      %1237 = vrot.lane.b32.xlu0 %v1227, 40
      %v1238 = vpop.permute.xlu0 %1237
      %1239 = vrot.lane.b32.xlu0 %v1228, 40
      %v1240 = vpop.permute.xlu0 %1239
      %1243 = vrot.lane.b32.xlu0 %v1227, 60
      %v1244 = vpop.permute.xlu0 %1243
      %1245 = vrot.lane.b32.xlu0 %v1228, 60
      %v1246 = vpop.permute.xlu0 %1245
      %1249 = vrot.lane.b32.xlu0 %v1227, 80
      %v1250 = vpop.permute.xlu0 %1249
      %1251 = vrot.lane.b32.xlu0 %v1228, 80
      %v1252 = vpop.permute.xlu0 %1251
      %1255 = vrot.lane.b32.xlu0 %v1227, 100
      %v1256 = vpop.permute.xlu0 %1255
      %1257 = vrot.lane.b32.xlu0 %v1228, 100
      %v1258 = vpop.permute.xlu0 %1257
      %1261 = vrot.lane.b32.xlu0 %v1227, 120
      %v1262 = vpop.permute.xlu0 %1261
      %1263 = vrot.lane.b32.xlu0 %v1228, 120
      %v1264 = vpop.permute.xlu0 %1263
      %1267 = vrot.lane.b32.xlu0 %v1227, 12
      %v1268 = vpop.permute.xlu0 %1267
      %1269 = vrot.lane.b32.xlu0 %v1228, 12
      %v1270 = vpop.permute.xlu0 %1269
      %v1273 = vsel %vm204, %v1227, %v1232
      %v1274 = vsel %vm204, %v1228, %v1234
      %v1275 = vsel %vm207, %v1273, %v1238
      %v1276 = vsel %vm207, %v1274, %v1240
      %v1277 = vsel %vm210, %v1275, %v1244
      %v1278 = vsel %vm210, %v1276, %v1246
      %v1279 = vsel %vm213, %v1277, %v1250
      %v1280 = vsel %vm213, %v1278, %v1252
      %v1281 = vsel %vm216, %v1279, %v1256
      %v1282 = vsel %vm216, %v1280, %v1258
      %v1283 = vsel %vm219, %v1281, %v1262
      %v1284 = vsel %vm219, %v1282, %v1264
      %v1285 = vsel %vm222, %v1262, %v1268
      %v1286 = vsel %vm222, %v1264, %v1270
      %v1291 = vrot.slane %v1283, 6
      %v1292 = vrot.slane %v1285, 6
      %v1293 = vrot.slane %v1284, 6
      %v1294 = vsel %vm229, %v1291, %v1293
      %v1295 = vrot.slane %v1286, 6
      %v1296 = vsel %vm229, %v1292, %v1295
      %v1303 = vsel %vm229, 0.0, %v1291
      %v1304 = vsel %vm229, 0.0, %v1292
      %v1305 = vsel %vm229, %v1293, 0.0
      %v1306 = vsel %vm229, %v1295, 0.0
      %s1307 = scalar_lea.vmem %s1, 49
      %v1308 = vld [vmem:[%s1307] ss:$8 sm:$0x3]
      %v1310 = vlaneseq
      %v1311 = vshrl.u32 %v1310, 7
      %v1312 = vsub.s32 0, %v1311
      %v1313 = vrot.slane %v1308, %v1312
      %v1314 = vlaneseq
      %v1315 = vshrl.u32 %v1314, 7
      %v1316 = vsub.s32 1, %v1315
      %v1317 = vrot.slane %v1308, %v1316
      %v1320 = vmul.f32 %v1303, %v1313
      %v1321 = vmul.f32 %v1304, %v1317
      %v1322 = vmul.f32 %v1294, %v1313
      %v1323 = vmul.f32 %v1296, %v1317
      %v1324 = vadd.f32 %v1038, %v1320
      %v1325 = vadd.f32 %v1039, %v1321
      %v1326 = vadd.f32 %v1040, %v1322
      %v1327 = vadd.f32 %v1041, %v1323
      %s1328 = scalar_lea.vmem %s1, 50
      %v1329 = vld [vmem:[%s1328] ss:$8 sm:$0x3]
      %v1331 = vlaneseq
      %v1332 = vshrl.u32 %v1331, 7
      %v1333 = vsub.s32 0, %v1332
      %v1334 = vrot.slane %v1329, %v1333
      %v1335 = vlaneseq
      %v1336 = vshrl.u32 %v1335, 7
      %v1337 = vsub.s32 1, %v1336
      %v1338 = vrot.slane %v1329, %v1337
      %v1341 = vmul.f32 %v1303, %v1334
      %v1342 = vmul.f32 %v1304, %v1338
      %v1343 = vmul.f32 %v1294, %v1334
      %v1344 = vmul.f32 %v1296, %v1338
      %v1345 = vadd.f32 %v1081, %v1341
      %v1346 = vadd.f32 %v1082, %v1342
      %v1347 = vadd.f32 %v1083, %v1343
      %v1348 = vadd.f32 %v1084, %v1344
      %s1349 = scalar_lea.vmem %s1, 51
      %v1350 = vld [vmem:[%s1349] ss:$8 sm:$0x3]
      %v1352 = vlaneseq
      %v1353 = vshrl.u32 %v1352, 7
      %v1354 = vsub.s32 0, %v1353
      %v1355 = vrot.slane %v1350, %v1354
      %v1356 = vlaneseq
      %v1357 = vshrl.u32 %v1356, 7
      %v1358 = vsub.s32 1, %v1357
      %v1359 = vrot.slane %v1350, %v1358
      %v1362 = vmul.f32 %v1303, %v1355
      %v1363 = vmul.f32 %v1304, %v1359
      %v1364 = vmul.f32 %v1294, %v1355
      %v1365 = vmul.f32 %v1296, %v1359
      %v1366 = vadd.f32 %v1124, %v1362
      %v1367 = vadd.f32 %v1125, %v1363
      %v1368 = vadd.f32 %v1126, %v1364
      %v1369 = vadd.f32 %v1127, %v1365
      %s1370 = scalar_lea.vmem %s1, 52
      %v1371 = vld [vmem:[%s1370] ss:$8 sm:$0x3]
      %v1373 = vlaneseq
      %v1374 = vshrl.u32 %v1373, 7
      %v1375 = vsub.s32 0, %v1374
      %v1376 = vrot.slane %v1371, %v1375
      %v1377 = vlaneseq
      %v1378 = vshrl.u32 %v1377, 7
      %v1379 = vsub.s32 1, %v1378
      %v1380 = vrot.slane %v1371, %v1379
      %v1383 = vmul.f32 %v1303, %v1376
      %v1384 = vmul.f32 %v1304, %v1380
      %v1385 = vmul.f32 %v1294, %v1376
      %v1386 = vmul.f32 %v1296, %v1380
      %v1387 = vadd.f32 %v1167, %v1383
      %v1388 = vadd.f32 %v1168, %v1384
      %v1389 = vadd.f32 %v1169, %v1385
      %v1390 = vadd.f32 %v1170, %v1386
      %s1391 = scalar_lea.vmem %s1, 53
      %v1392 = vld [vmem:[%s1391] ss:$8 sm:$0x3]
      %v1394 = vlaneseq
      %v1395 = vshrl.u32 %v1394, 7
      %v1396 = vsub.s32 0, %v1395
      %v1397 = vrot.slane %v1392, %v1396
      %v1398 = vlaneseq
      %v1399 = vshrl.u32 %v1398, 7
      %v1400 = vsub.s32 1, %v1399
      %v1401 = vrot.slane %v1392, %v1400
      %v1404 = vmul.f32 %v1303, %v1397
      %v1405 = vmul.f32 %v1304, %v1401
      %v1406 = vmul.f32 %v1294, %v1397
      %v1407 = vmul.f32 %v1296, %v1401
      %v1408 = vadd.f32 %v1210, %v1404
      %v1409 = vadd.f32 %v1211, %v1405
      %v1410 = vadd.f32 %v1212, %v1406
      %v1411 = vadd.f32 %v1213, %v1407
      %s1412 = scalar_lea.vmem %s1, 54
      %v1413 = vld [vmem:[%s1412] ss:$8 sm:$0x3]
      %v1415 = vlaneseq
      %v1416 = vshrl.u32 %v1415, 7
      %v1417 = vsub.s32 0, %v1416
      %v1418 = vrot.slane %v1413, %v1417
      %v1419 = vlaneseq
      %v1420 = vshrl.u32 %v1419, 7
      %v1421 = vsub.s32 1, %v1420
      %v1422 = vrot.slane %v1413, %v1421
      %v1425 = vmul.f32 %v1303, %v1418
      %v1426 = vmul.f32 %v1304, %v1422
      %v1427 = vmul.f32 %v1294, %v1418
      %v1428 = vmul.f32 %v1296, %v1422
      %v1429 = vmul.f32 %v1305, %v1418
      %v1430 = vmul.f32 %v1306, %v1422
      %v1437 = vrot.slane %v1425, 1
      %v1438 = vrot.slane %v1427, 1
      %v1439 = vsel %vm375, %v1437, %v1438
      %v1440 = vrot.slane %v1426, 1
      %v1441 = vrot.slane %v1428, 1
      %v1442 = vsel %vm375, %v1440, %v1441
      %v1443 = vrot.slane %v1429, 1
      %v1444 = vsel %vm375, %v1438, %v1443
      %v1445 = vrot.slane %v1430, 1
      %v1446 = vsel %vm375, %v1441, %v1445
      %v1451 = vadd.f32 %v1324, %v1439
      %v1452 = vadd.f32 %v1325, %v1442
      %v1453 = vadd.f32 %v1326, %v1444
      %v1454 = vadd.f32 %v1327, %v1446
      %s1455 = scalar_lea.vmem %s1, 55
      %v1456 = vld [vmem:[%s1455] ss:$8 sm:$0x3]
      %v1458 = vlaneseq
      %v1459 = vshrl.u32 %v1458, 7
      %v1460 = vsub.s32 0, %v1459
      %v1461 = vrot.slane %v1456, %v1460
      %v1462 = vlaneseq
      %v1463 = vshrl.u32 %v1462, 7
      %v1464 = vsub.s32 1, %v1463
      %v1465 = vrot.slane %v1456, %v1464
      %v1468 = vmul.f32 %v1303, %v1461
      %v1469 = vmul.f32 %v1304, %v1465
      %v1470 = vmul.f32 %v1294, %v1461
      %v1471 = vmul.f32 %v1296, %v1465
      %v1472 = vmul.f32 %v1305, %v1461
      %v1473 = vmul.f32 %v1306, %v1465
      %v1480 = vrot.slane %v1468, 1
      %v1481 = vrot.slane %v1470, 1
      %v1482 = vsel %vm375, %v1480, %v1481
      %v1483 = vrot.slane %v1469, 1
      %v1484 = vrot.slane %v1471, 1
      %v1485 = vsel %vm375, %v1483, %v1484
      %v1486 = vrot.slane %v1472, 1
      %v1487 = vsel %vm375, %v1481, %v1486
      %v1488 = vrot.slane %v1473, 1
      %v1489 = vsel %vm375, %v1484, %v1488
      %v1494 = vadd.f32 %v1345, %v1482
      %v1495 = vadd.f32 %v1346, %v1485
      %v1496 = vadd.f32 %v1347, %v1487
      %v1497 = vadd.f32 %v1348, %v1489
      %s1498 = scalar_lea.vmem %s1, 64
      %v1499 = vld [vmem:[%s1498] ss:$8 sm:$0x3]
      %v1501 = vlaneseq
      %v1502 = vshrl.u32 %v1501, 7
      %v1503 = vsub.s32 0, %v1502
      %v1504 = vrot.slane %v1499, %v1503
      %v1505 = vlaneseq
      %v1506 = vshrl.u32 %v1505, 7
      %v1507 = vsub.s32 1, %v1506
      %v1508 = vrot.slane %v1499, %v1507
      %v1511 = vmul.f32 %v1303, %v1504
      %v1512 = vmul.f32 %v1304, %v1508
      %v1513 = vmul.f32 %v1294, %v1504
      %v1514 = vmul.f32 %v1296, %v1508
      %v1515 = vmul.f32 %v1305, %v1504
      %v1516 = vmul.f32 %v1306, %v1508
      %v1523 = vrot.slane %v1511, 1
      %v1524 = vrot.slane %v1513, 1
      %v1525 = vsel %vm375, %v1523, %v1524
      %v1526 = vrot.slane %v1512, 1
      %v1527 = vrot.slane %v1514, 1
      %v1528 = vsel %vm375, %v1526, %v1527
      %v1529 = vrot.slane %v1515, 1
      %v1530 = vsel %vm375, %v1524, %v1529
      %v1531 = vrot.slane %v1516, 1
      %v1532 = vsel %vm375, %v1527, %v1531
      %v1537 = vadd.f32 %v1366, %v1525
      %v1538 = vadd.f32 %v1367, %v1528
      %v1539 = vadd.f32 %v1368, %v1530
      %v1540 = vadd.f32 %v1369, %v1532
      %s1541 = scalar_lea.vmem %s1, 65
      %v1542 = vld [vmem:[%s1541] ss:$8 sm:$0x3]
      %v1544 = vlaneseq
      %v1545 = vshrl.u32 %v1544, 7
      %v1546 = vsub.s32 0, %v1545
      %v1547 = vrot.slane %v1542, %v1546
      %v1548 = vlaneseq
      %v1549 = vshrl.u32 %v1548, 7
      %v1550 = vsub.s32 1, %v1549
      %v1551 = vrot.slane %v1542, %v1550
      %v1554 = vmul.f32 %v1303, %v1547
      %v1555 = vmul.f32 %v1304, %v1551
      %v1556 = vmul.f32 %v1294, %v1547
      %v1557 = vmul.f32 %v1296, %v1551
      %v1558 = vmul.f32 %v1305, %v1547
      %v1559 = vmul.f32 %v1306, %v1551
      %v1566 = vrot.slane %v1554, 1
      %v1567 = vrot.slane %v1556, 1
      %v1568 = vsel %vm375, %v1566, %v1567
      %v1569 = vrot.slane %v1555, 1
      %v1570 = vrot.slane %v1557, 1
      %v1571 = vsel %vm375, %v1569, %v1570
      %v1572 = vrot.slane %v1558, 1
      %v1573 = vsel %vm375, %v1567, %v1572
      %v1574 = vrot.slane %v1559, 1
      %v1575 = vsel %vm375, %v1570, %v1574
      %v1580 = vadd.f32 %v1387, %v1568
      %v1581 = vadd.f32 %v1388, %v1571
      %v1582 = vadd.f32 %v1389, %v1573
      %v1583 = vadd.f32 %v1390, %v1575
      %s1584 = scalar_lea.vmem %s1, 66
      %v1585 = vld [vmem:[%s1584] ss:$8 sm:$0x3]
      %v1587 = vlaneseq
      %v1588 = vshrl.u32 %v1587, 7
      %v1589 = vsub.s32 0, %v1588
      %v1590 = vrot.slane %v1585, %v1589
      %v1591 = vlaneseq
      %v1592 = vshrl.u32 %v1591, 7
      %v1593 = vsub.s32 1, %v1592
      %v1594 = vrot.slane %v1585, %v1593
      %v1597 = vmul.f32 %v1303, %v1590
      %v1598 = vmul.f32 %v1304, %v1594
      %v1599 = vmul.f32 %v1294, %v1590
      %v1600 = vmul.f32 %v1296, %v1594
      %v1601 = vmul.f32 %v1305, %v1590
      %v1602 = vmul.f32 %v1306, %v1594
      %v1609 = vrot.slane %v1597, 1
      %v1610 = vrot.slane %v1599, 1
      %v1611 = vsel %vm375, %v1609, %v1610
      %v1612 = vrot.slane %v1598, 1
      %v1613 = vrot.slane %v1600, 1
      %v1614 = vsel %vm375, %v1612, %v1613
      %v1615 = vrot.slane %v1601, 1
      %v1616 = vsel %vm375, %v1610, %v1615
      %v1617 = vrot.slane %v1602, 1
      %v1618 = vsel %vm375, %v1613, %v1617
      %v1623 = vadd.f32 %v1408, %v1611
      %v1624 = vadd.f32 %v1409, %v1614
      %v1625 = vadd.f32 %v1410, %v1616
      %v1626 = vadd.f32 %v1411, %v1618
      %s1627 = scalar_lea.vmem %s1, 67
      %v1628 = vld [vmem:[%s1627] ss:$8 sm:$0x3]
      %v1630 = vlaneseq
      %v1631 = vshrl.u32 %v1630, 7
      %v1632 = vsub.s32 0, %v1631
      %v1633 = vrot.slane %v1628, %v1632
      %v1634 = vlaneseq
      %v1635 = vshrl.u32 %v1634, 7
      %v1636 = vsub.s32 1, %v1635
      %v1637 = vrot.slane %v1628, %v1636
      %v1640 = vmul.f32 %v1303, %v1633
      %v1641 = vmul.f32 %v1304, %v1637
      %v1642 = vmul.f32 %v1294, %v1633
      %v1643 = vmul.f32 %v1296, %v1637
      %v1644 = vmul.f32 %v1305, %v1633
      %v1645 = vmul.f32 %v1306, %v1637
      %v1652 = vrot.slane %v1640, 2
      %v1653 = vrot.slane %v1642, 2
      %v1654 = vsel %vm591, %v1652, %v1653
      %v1655 = vrot.slane %v1641, 2
      %v1656 = vrot.slane %v1643, 2
      %v1657 = vsel %vm591, %v1655, %v1656
      %v1658 = vrot.slane %v1644, 2
      %v1659 = vsel %vm591, %v1653, %v1658
      %v1660 = vrot.slane %v1645, 2
      %v1661 = vsel %vm591, %v1656, %v1660
      %v1666 = vadd.f32 %v1451, %v1654
      %v1667 = vadd.f32 %v1452, %v1657
      %v1668 = vadd.f32 %v1453, %v1659
      %v1669 = vadd.f32 %v1454, %v1661
      %s1670 = scalar_lea.vmem %s1, 68
      %v1671 = vld [vmem:[%s1670] ss:$8 sm:$0x3]
      %v1673 = vlaneseq
      %v1674 = vshrl.u32 %v1673, 7
      %v1675 = vsub.s32 0, %v1674
      %v1676 = vrot.slane %v1671, %v1675
      %v1677 = vlaneseq
      %v1678 = vshrl.u32 %v1677, 7
      %v1679 = vsub.s32 1, %v1678
      %v1680 = vrot.slane %v1671, %v1679
      %v1683 = vmul.f32 %v1303, %v1676
      %v1684 = vmul.f32 %v1304, %v1680
      %v1685 = vmul.f32 %v1294, %v1676
      %v1686 = vmul.f32 %v1296, %v1680
      %v1687 = vmul.f32 %v1305, %v1676
      %v1688 = vmul.f32 %v1306, %v1680
      %v1695 = vrot.slane %v1683, 2
      %v1696 = vrot.slane %v1685, 2
      %v1697 = vsel %vm591, %v1695, %v1696
      %v1698 = vrot.slane %v1684, 2
      %v1699 = vrot.slane %v1686, 2
      %v1700 = vsel %vm591, %v1698, %v1699
      %v1701 = vrot.slane %v1687, 2
      %v1702 = vsel %vm591, %v1696, %v1701
      %v1703 = vrot.slane %v1688, 2
      %v1704 = vsel %vm591, %v1699, %v1703
      %v1709 = vadd.f32 %v1494, %v1697
      %v1710 = vadd.f32 %v1495, %v1700
      %v1711 = vadd.f32 %v1496, %v1702
      %v1712 = vadd.f32 %v1497, %v1704
      %s1713 = scalar_lea.vmem %s1, 69
      %v1714 = vld [vmem:[%s1713] ss:$8 sm:$0x3]
      %v1716 = vlaneseq
      %v1717 = vshrl.u32 %v1716, 7
      %v1718 = vsub.s32 0, %v1717
      %v1719 = vrot.slane %v1714, %v1718
      %v1720 = vlaneseq
      %v1721 = vshrl.u32 %v1720, 7
      %v1722 = vsub.s32 1, %v1721
      %v1723 = vrot.slane %v1714, %v1722
      %v1726 = vmul.f32 %v1303, %v1719
      %v1727 = vmul.f32 %v1304, %v1723
      %v1728 = vmul.f32 %v1294, %v1719
      %v1729 = vmul.f32 %v1296, %v1723
      %v1730 = vmul.f32 %v1305, %v1719
      %v1731 = vmul.f32 %v1306, %v1723
      %v1738 = vrot.slane %v1726, 2
      %v1739 = vrot.slane %v1728, 2
      %v1740 = vsel %vm591, %v1738, %v1739
      %v1741 = vrot.slane %v1727, 2
      %v1742 = vrot.slane %v1729, 2
      %v1743 = vsel %vm591, %v1741, %v1742
      %v1744 = vrot.slane %v1730, 2
      %v1745 = vsel %vm591, %v1739, %v1744
      %v1746 = vrot.slane %v1731, 2
      %v1747 = vsel %vm591, %v1742, %v1746
      %v1752 = vadd.f32 %v1537, %v1740
      %v1753 = vadd.f32 %v1538, %v1743
      %v1754 = vadd.f32 %v1539, %v1745
      %v1755 = vadd.f32 %v1540, %v1747
      %s1756 = scalar_lea.vmem %s1, 70
      %v1757 = vld [vmem:[%s1756] ss:$8 sm:$0x3]
      %v1759 = vlaneseq
      %v1760 = vshrl.u32 %v1759, 7
      %v1761 = vsub.s32 0, %v1760
      %v1762 = vrot.slane %v1757, %v1761
      %v1763 = vlaneseq
      %v1764 = vshrl.u32 %v1763, 7
      %v1765 = vsub.s32 1, %v1764
      %v1766 = vrot.slane %v1757, %v1765
      %v1769 = vmul.f32 %v1303, %v1762
      %v1770 = vmul.f32 %v1304, %v1766
      %v1771 = vmul.f32 %v1294, %v1762
      %v1772 = vmul.f32 %v1296, %v1766
      %v1773 = vmul.f32 %v1305, %v1762
      %v1774 = vmul.f32 %v1306, %v1766
      %v1781 = vrot.slane %v1769, 2
      %v1782 = vrot.slane %v1771, 2
      %v1783 = vsel %vm591, %v1781, %v1782
      %v1784 = vrot.slane %v1770, 2
      %v1785 = vrot.slane %v1772, 2
      %v1786 = vsel %vm591, %v1784, %v1785
      %v1787 = vrot.slane %v1773, 2
      %v1788 = vsel %vm591, %v1782, %v1787
      %v1789 = vrot.slane %v1774, 2
      %v1790 = vsel %vm591, %v1785, %v1789
      %v1795 = vadd.f32 %v1580, %v1783
      %v1796 = vadd.f32 %v1581, %v1786
      %v1797 = vadd.f32 %v1582, %v1788
      %v1798 = vadd.f32 %v1583, %v1790
      %s1799 = scalar_lea.vmem %s1, 71
      %v1800 = vld [vmem:[%s1799] ss:$8 sm:$0x3]
      %v1802 = vlaneseq
      %v1803 = vshrl.u32 %v1802, 7
      %v1804 = vsub.s32 0, %v1803
      %v1805 = vrot.slane %v1800, %v1804
      %v1806 = vlaneseq
      %v1807 = vshrl.u32 %v1806, 7
      %v1808 = vsub.s32 1, %v1807
      %v1809 = vrot.slane %v1800, %v1808
      %v1812 = vmul.f32 %v1303, %v1805
      %v1813 = vmul.f32 %v1304, %v1809
      %v1814 = vmul.f32 %v1294, %v1805
      %v1815 = vmul.f32 %v1296, %v1809
      %v1816 = vmul.f32 %v1305, %v1805
      %v1817 = vmul.f32 %v1306, %v1809
      %v1824 = vrot.slane %v1812, 2
      %v1825 = vrot.slane %v1814, 2
      %v1826 = vsel %vm591, %v1824, %v1825
      %v1827 = vrot.slane %v1813, 2
      %v1828 = vrot.slane %v1815, 2
      %v1829 = vsel %vm591, %v1827, %v1828
      %v1830 = vrot.slane %v1816, 2
      %v1831 = vsel %vm591, %v1825, %v1830
      %v1832 = vrot.slane %v1817, 2
      %v1833 = vsel %vm591, %v1828, %v1832
      %v1838 = vadd.f32 %v1623, %v1826
      %v1839 = vadd.f32 %v1624, %v1829
      %v1840 = vadd.f32 %v1625, %v1831
      %v1841 = vadd.f32 %v1626, %v1833
      %s1842 = scalar_lea.vmem %s1, 80
      %v1843 = vld [vmem:[%s1842] ss:$8 sm:$0x3]
      %v1845 = vlaneseq
      %v1846 = vshrl.u32 %v1845, 7
      %v1847 = vsub.s32 0, %v1846
      %v1848 = vrot.slane %v1843, %v1847
      %v1849 = vlaneseq
      %v1850 = vshrl.u32 %v1849, 7
      %v1851 = vsub.s32 1, %v1850
      %v1852 = vrot.slane %v1843, %v1851
      %v1855 = vmul.f32 %v1303, %v1848
      %v1856 = vmul.f32 %v1304, %v1852
      %v1857 = vmul.f32 %v1294, %v1848
      %v1858 = vmul.f32 %v1296, %v1852
      %v1859 = vmul.f32 %v1305, %v1848
      %v1860 = vmul.f32 %v1306, %v1852
      %v1867 = vrot.slane %v1855, 3
      %v1868 = vrot.slane %v1857, 3
      %v1869 = vsel %vm807, %v1867, %v1868
      %v1870 = vrot.slane %v1856, 3
      %v1871 = vrot.slane %v1858, 3
      %v1872 = vsel %vm807, %v1870, %v1871
      %v1873 = vrot.slane %v1859, 3
      %v1874 = vsel %vm807, %v1868, %v1873
      %v1875 = vrot.slane %v1860, 3
      %v1876 = vsel %vm807, %v1871, %v1875
      %v1881 = vadd.f32 %v1666, %v1869
      %v1882 = vadd.f32 %v1667, %v1872
      %v1883 = vadd.f32 %v1668, %v1874
      %v1884 = vadd.f32 %v1669, %v1876
      %s1885 = scalar_lea.vmem %s1, 81
      %v1886 = vld [vmem:[%s1885] ss:$8 sm:$0x3]
      %v1888 = vlaneseq
      %v1889 = vshrl.u32 %v1888, 7
      %v1890 = vsub.s32 0, %v1889
      %v1891 = vrot.slane %v1886, %v1890
      %v1892 = vlaneseq
      %v1893 = vshrl.u32 %v1892, 7
      %v1894 = vsub.s32 1, %v1893
      %v1895 = vrot.slane %v1886, %v1894
      %v1898 = vmul.f32 %v1303, %v1891
      %v1899 = vmul.f32 %v1304, %v1895
      %v1900 = vmul.f32 %v1294, %v1891
      %v1901 = vmul.f32 %v1296, %v1895
      %v1902 = vmul.f32 %v1305, %v1891
      %v1903 = vmul.f32 %v1306, %v1895
      %v1910 = vrot.slane %v1898, 3
      %v1911 = vrot.slane %v1900, 3
      %v1912 = vsel %vm807, %v1910, %v1911
      %v1913 = vrot.slane %v1899, 3
      %v1914 = vrot.slane %v1901, 3
      %v1915 = vsel %vm807, %v1913, %v1914
      %v1916 = vrot.slane %v1902, 3
      %v1917 = vsel %vm807, %v1911, %v1916
      %v1918 = vrot.slane %v1903, 3
      %v1919 = vsel %vm807, %v1914, %v1918
      %v1924 = vadd.f32 %v1709, %v1912
      %v1925 = vadd.f32 %v1710, %v1915
      %v1926 = vadd.f32 %v1711, %v1917
      %v1927 = vadd.f32 %v1712, %v1919
      %s1928 = scalar_lea.vmem %s1, 82
      %v1929 = vld [vmem:[%s1928] ss:$8 sm:$0x3]
      %v1931 = vlaneseq
      %v1932 = vshrl.u32 %v1931, 7
      %v1933 = vsub.s32 0, %v1932
      %v1934 = vrot.slane %v1929, %v1933
      %v1935 = vlaneseq
      %v1936 = vshrl.u32 %v1935, 7
      %v1937 = vsub.s32 1, %v1936
      %v1938 = vrot.slane %v1929, %v1937
      %v1941 = vmul.f32 %v1303, %v1934
      %v1942 = vmul.f32 %v1304, %v1938
      %v1943 = vmul.f32 %v1294, %v1934
      %v1944 = vmul.f32 %v1296, %v1938
      %v1945 = vmul.f32 %v1305, %v1934
      %v1946 = vmul.f32 %v1306, %v1938
      %v1953 = vrot.slane %v1941, 3
      %v1954 = vrot.slane %v1943, 3
      %v1955 = vsel %vm807, %v1953, %v1954
      %v1956 = vrot.slane %v1942, 3
      %v1957 = vrot.slane %v1944, 3
      %v1958 = vsel %vm807, %v1956, %v1957
      %v1959 = vrot.slane %v1945, 3
      %v1960 = vsel %vm807, %v1954, %v1959
      %v1961 = vrot.slane %v1946, 3
      %v1962 = vsel %vm807, %v1957, %v1961
      %v1967 = vadd.f32 %v1752, %v1955
      %v1968 = vadd.f32 %v1753, %v1958
      %v1969 = vadd.f32 %v1754, %v1960
      %v1970 = vadd.f32 %v1755, %v1962
      %s1971 = scalar_lea.vmem %s1, 83
      %v1972 = vld [vmem:[%s1971] ss:$8 sm:$0x3]
      %v1974 = vlaneseq
      %v1975 = vshrl.u32 %v1974, 7
      %v1976 = vsub.s32 0, %v1975
      %v1977 = vrot.slane %v1972, %v1976
      %v1978 = vlaneseq
      %v1979 = vshrl.u32 %v1978, 7
      %v1980 = vsub.s32 1, %v1979
      %v1981 = vrot.slane %v1972, %v1980
      %v1984 = vmul.f32 %v1303, %v1977
      %v1985 = vmul.f32 %v1304, %v1981
      %v1986 = vmul.f32 %v1294, %v1977
      %v1987 = vmul.f32 %v1296, %v1981
      %v1988 = vmul.f32 %v1305, %v1977
      %v1989 = vmul.f32 %v1306, %v1981
      %v1996 = vrot.slane %v1984, 3
      %v1997 = vrot.slane %v1986, 3
      %v1998 = vsel %vm807, %v1996, %v1997
      %v1999 = vrot.slane %v1985, 3
      %v2000 = vrot.slane %v1987, 3
      %v2001 = vsel %vm807, %v1999, %v2000
      %v2002 = vrot.slane %v1988, 3
      %v2003 = vsel %vm807, %v1997, %v2002
      %v2004 = vrot.slane %v1989, 3
      %v2005 = vsel %vm807, %v2000, %v2004
      %v2010 = vadd.f32 %v1795, %v1998
      %v2011 = vadd.f32 %v1796, %v2001
      %v2012 = vadd.f32 %v1797, %v2003
      %v2013 = vadd.f32 %v1798, %v2005
      %s2014 = scalar_lea.vmem %s1, 84
      %v2015 = vld [vmem:[%s2014] ss:$8 sm:$0x3]
      %v2017 = vlaneseq
      %v2018 = vshrl.u32 %v2017, 7
      %v2019 = vsub.s32 0, %v2018
      %v2020 = vrot.slane %v2015, %v2019
      %v2021 = vlaneseq
      %v2022 = vshrl.u32 %v2021, 7
      %v2023 = vsub.s32 1, %v2022
      %v2024 = vrot.slane %v2015, %v2023
      %v2027 = vmul.f32 %v1303, %v2020
      %v2028 = vmul.f32 %v1304, %v2024
      %v2029 = vmul.f32 %v1294, %v2020
      %v2030 = vmul.f32 %v1296, %v2024
      %v2031 = vmul.f32 %v1305, %v2020
      %v2032 = vmul.f32 %v1306, %v2024
      %v2039 = vrot.slane %v2027, 3
      %v2040 = vrot.slane %v2029, 3
      %v2041 = vsel %vm807, %v2039, %v2040
      %v2042 = vrot.slane %v2028, 3
      %v2043 = vrot.slane %v2030, 3
      %v2044 = vsel %vm807, %v2042, %v2043
      %v2045 = vrot.slane %v2031, 3
      %v2046 = vsel %vm807, %v2040, %v2045
      %v2047 = vrot.slane %v2032, 3
      %v2048 = vsel %vm807, %v2043, %v2047
      %v2053 = vadd.f32 %v1838, %v2041
      %v2054 = vadd.f32 %v1839, %v2044
      %v2055 = vadd.f32 %v1840, %v2046
      %v2056 = vadd.f32 %v1841, %v2048
      %s2057 = scalar_lea.vmem %s1, 85
      %v2058 = vld [vmem:[%s2057] ss:$8 sm:$0x3]
      %v2060 = vlaneseq
      %v2061 = vshrl.u32 %v2060, 7
      %v2062 = vsub.s32 0, %v2061
      %v2063 = vrot.slane %v2058, %v2062
      %v2064 = vlaneseq
      %v2065 = vshrl.u32 %v2064, 7
      %v2066 = vsub.s32 1, %v2065
      %v2067 = vrot.slane %v2058, %v2066
      %v2070 = vmul.f32 %v1303, %v2063
      %v2071 = vmul.f32 %v1304, %v2067
      %v2072 = vmul.f32 %v1294, %v2063
      %v2073 = vmul.f32 %v1296, %v2067
      %v2074 = vmul.f32 %v1305, %v2063
      %v2075 = vmul.f32 %v1306, %v2067
      %v2082 = vrot.slane %v2070, 4
      %v2083 = vrot.slane %v2072, 4
      %v2084 = vsel %vm1023, %v2082, %v2083
      %v2085 = vrot.slane %v2071, 4
      %v2086 = vrot.slane %v2073, 4
      %v2087 = vsel %vm1023, %v2085, %v2086
      %v2088 = vrot.slane %v2074, 4
      %v2089 = vsel %vm1023, %v2083, %v2088
      %v2090 = vrot.slane %v2075, 4
      %v2091 = vsel %vm1023, %v2086, %v2090
      %v2096 = vadd.f32 %v1881, %v2084
      %v2097 = vadd.f32 %v1882, %v2087
      %v2098 = vadd.f32 %v1883, %v2089
      %v2099 = vadd.f32 %v1884, %v2091
      %s2100 = scalar_lea.vmem %s1, 86
      %v2101 = vld [vmem:[%s2100] ss:$8 sm:$0x3]
      %v2103 = vlaneseq
      %v2104 = vshrl.u32 %v2103, 7
      %v2105 = vsub.s32 0, %v2104
      %v2106 = vrot.slane %v2101, %v2105
      %v2107 = vlaneseq
      %v2108 = vshrl.u32 %v2107, 7
      %v2109 = vsub.s32 1, %v2108
      %v2110 = vrot.slane %v2101, %v2109
      %v2113 = vmul.f32 %v1303, %v2106
      %v2114 = vmul.f32 %v1304, %v2110
      %v2115 = vmul.f32 %v1294, %v2106
      %v2116 = vmul.f32 %v1296, %v2110
      %v2117 = vmul.f32 %v1305, %v2106
      %v2118 = vmul.f32 %v1306, %v2110
      %v2125 = vrot.slane %v2113, 4
      %v2126 = vrot.slane %v2115, 4
      %v2127 = vsel %vm1023, %v2125, %v2126
      %v2128 = vrot.slane %v2114, 4
      %v2129 = vrot.slane %v2116, 4
      %v2130 = vsel %vm1023, %v2128, %v2129
      %v2131 = vrot.slane %v2117, 4
      %v2132 = vsel %vm1023, %v2126, %v2131
      %v2133 = vrot.slane %v2118, 4
      %v2134 = vsel %vm1023, %v2129, %v2133
      %v2139 = vadd.f32 %v1924, %v2127
      %v2140 = vadd.f32 %v1925, %v2130
      %v2141 = vadd.f32 %v1926, %v2132
      %v2142 = vadd.f32 %v1927, %v2134
      %s2143 = scalar_lea.vmem %s1, 87
      %v2144 = vld [vmem:[%s2143] ss:$8 sm:$0x3]
      %v2146 = vlaneseq
      %v2147 = vshrl.u32 %v2146, 7
      %v2148 = vsub.s32 0, %v2147
      %v2149 = vrot.slane %v2144, %v2148
      %v2150 = vlaneseq
      %v2151 = vshrl.u32 %v2150, 7
      %v2152 = vsub.s32 1, %v2151
      %v2153 = vrot.slane %v2144, %v2152
      %v2156 = vmul.f32 %v1303, %v2149
      %v2157 = vmul.f32 %v1304, %v2153
      %v2158 = vmul.f32 %v1294, %v2149
      %v2159 = vmul.f32 %v1296, %v2153
      %v2160 = vmul.f32 %v1305, %v2149
      %v2161 = vmul.f32 %v1306, %v2153
      %v2168 = vrot.slane %v2156, 4
      %v2169 = vrot.slane %v2158, 4
      %v2170 = vsel %vm1023, %v2168, %v2169
      %v2171 = vrot.slane %v2157, 4
      %v2172 = vrot.slane %v2159, 4
      %v2173 = vsel %vm1023, %v2171, %v2172
      %v2174 = vrot.slane %v2160, 4
      %v2175 = vsel %vm1023, %v2169, %v2174
      %v2176 = vrot.slane %v2161, 4
      %v2177 = vsel %vm1023, %v2172, %v2176
      %v2182 = vadd.f32 %v1967, %v2170
      %v2183 = vadd.f32 %v1968, %v2173
      %v2184 = vadd.f32 %v1969, %v2175
      %v2185 = vadd.f32 %v1970, %v2177
      %s2186 = scalar_lea.vmem %s1, 96
      %v2187 = vld [vmem:[%s2186] ss:$8 sm:$0x3]
      %v2189 = vlaneseq
      %v2190 = vshrl.u32 %v2189, 7
      %v2191 = vsub.s32 0, %v2190
      %v2192 = vrot.slane %v2187, %v2191
      %v2193 = vlaneseq
      %v2194 = vshrl.u32 %v2193, 7
      %v2195 = vsub.s32 1, %v2194
      %v2196 = vrot.slane %v2187, %v2195
      %v2199 = vmul.f32 %v1303, %v2192
      %v2200 = vmul.f32 %v1304, %v2196
      %v2201 = vmul.f32 %v1294, %v2192
      %v2202 = vmul.f32 %v1296, %v2196
      %v2203 = vmul.f32 %v1305, %v2192
      %v2204 = vmul.f32 %v1306, %v2196
      %v2211 = vrot.slane %v2199, 4
      %v2212 = vrot.slane %v2201, 4
      %v2213 = vsel %vm1023, %v2211, %v2212
      %v2214 = vrot.slane %v2200, 4
      %v2215 = vrot.slane %v2202, 4
      %v2216 = vsel %vm1023, %v2214, %v2215
      %v2217 = vrot.slane %v2203, 4
      %v2218 = vsel %vm1023, %v2212, %v2217
      %v2219 = vrot.slane %v2204, 4
      %v2220 = vsel %vm1023, %v2215, %v2219
      %v2225 = vadd.f32 %v2010, %v2213
      %v2226 = vadd.f32 %v2011, %v2216
      %v2227 = vadd.f32 %v2012, %v2218
      %v2228 = vadd.f32 %v2013, %v2220
      %s2229 = scalar_lea.vmem %s1, 97
      %v2230 = vld [vmem:[%s2229] ss:$8 sm:$0x3]
      %v2232 = vlaneseq
      %v2233 = vshrl.u32 %v2232, 7
      %v2234 = vsub.s32 0, %v2233
      %v2235 = vrot.slane %v2230, %v2234
      %v2236 = vlaneseq
      %v2237 = vshrl.u32 %v2236, 7
      %v2238 = vsub.s32 1, %v2237
      %v2239 = vrot.slane %v2230, %v2238
      %v2242 = vmul.f32 %v1303, %v2235
      %v2243 = vmul.f32 %v1304, %v2239
      %v2244 = vmul.f32 %v1294, %v2235
      %v2245 = vmul.f32 %v1296, %v2239
      %v2246 = vmul.f32 %v1305, %v2235
      %v2247 = vmul.f32 %v1306, %v2239
      %v2254 = vrot.slane %v2242, 4
      %v2255 = vrot.slane %v2244, 4
      %v2256 = vsel %vm1023, %v2254, %v2255
      %v2257 = vrot.slane %v2243, 4
      %v2258 = vrot.slane %v2245, 4
      %v2259 = vsel %vm1023, %v2257, %v2258
      %v2260 = vrot.slane %v2246, 4
      %v2261 = vsel %vm1023, %v2255, %v2260
      %v2262 = vrot.slane %v2247, 4
      %v2263 = vsel %vm1023, %v2258, %v2262
      %v2268 = vadd.f32 %v2053, %v2256
      %v2269 = vadd.f32 %v2054, %v2259
      %v2270 = vadd.f32 %v2055, %v2261
      %v2271 = vadd.f32 %v2056, %v2263
      %s2272 = scalar_lea.vmem %s138, 32
      %v2273 = vld [vmem:[%s2272] sm:$0xff]
      %v2274 = vld [vmem:[%s2272 + $0x8] sm:$0xff]
      %2277 = vrot.lane.b32.xlu0 %v2273, 2
      %v2278 = vpop.permute.xlu0 %2277
      %2279 = vrot.lane.b32.xlu0 %v2274, 2
      %v2280 = vpop.permute.xlu0 %2279
      %v2283 = vsel %vm154, 0.0, %v2278
      %v2284 = vsel %vm154, 0.0, %v2280
      %v2285 = vsel %vm157, %v2283, 0.0
      %v2286 = vsel %vm157, %v2284, 0.0
      %2289 = vrot.lane.b32.xlu0 %v2285, 20
      %v2290 = vpop.permute.xlu0 %2289
      %2291 = vrot.lane.b32.xlu0 %v2286, 20
      %v2292 = vpop.permute.xlu0 %2291
      %2295 = vrot.lane.b32.xlu0 %v2285, 40
      %v2296 = vpop.permute.xlu0 %2295
      %2297 = vrot.lane.b32.xlu0 %v2286, 40
      %v2298 = vpop.permute.xlu0 %2297
      %2301 = vrot.lane.b32.xlu0 %v2285, 60
      %v2302 = vpop.permute.xlu0 %2301
      %2303 = vrot.lane.b32.xlu0 %v2286, 60
      %v2304 = vpop.permute.xlu0 %2303
      %2307 = vrot.lane.b32.xlu0 %v2285, 80
      %v2308 = vpop.permute.xlu0 %2307
      %2309 = vrot.lane.b32.xlu0 %v2286, 80
      %v2310 = vpop.permute.xlu0 %2309
      %2313 = vrot.lane.b32.xlu0 %v2285, 100
      %v2314 = vpop.permute.xlu0 %2313
      %2315 = vrot.lane.b32.xlu0 %v2286, 100
      %v2316 = vpop.permute.xlu0 %2315
      %2319 = vrot.lane.b32.xlu0 %v2285, 120
      %v2320 = vpop.permute.xlu0 %2319
      %2321 = vrot.lane.b32.xlu0 %v2286, 120
      %v2322 = vpop.permute.xlu0 %2321
      %2325 = vrot.lane.b32.xlu0 %v2285, 12
      %v2326 = vpop.permute.xlu0 %2325
      %2327 = vrot.lane.b32.xlu0 %v2286, 12
      %v2328 = vpop.permute.xlu0 %2327
      %v2331 = vsel %vm204, %v2285, %v2290
      %v2332 = vsel %vm204, %v2286, %v2292
      %v2333 = vsel %vm207, %v2331, %v2296
      %v2334 = vsel %vm207, %v2332, %v2298
      %v2335 = vsel %vm210, %v2333, %v2302
      %v2336 = vsel %vm210, %v2334, %v2304
      %v2337 = vsel %vm213, %v2335, %v2308
      %v2338 = vsel %vm213, %v2336, %v2310
      %v2339 = vsel %vm216, %v2337, %v2314
      %v2340 = vsel %vm216, %v2338, %v2316
      %v2341 = vsel %vm219, %v2339, %v2320
      %v2342 = vsel %vm219, %v2340, %v2322
      %v2343 = vsel %vm222, %v2320, %v2326
      %v2344 = vsel %vm222, %v2322, %v2328
      %v2349 = vrot.slane %v2341, 6
      %v2350 = vrot.slane %v2343, 6
      %v2351 = vrot.slane %v2342, 6
      %v2352 = vsel %vm229, %v2349, %v2351
      %v2353 = vrot.slane %v2344, 6
      %v2354 = vsel %vm229, %v2350, %v2353
      %v2361 = vsel %vm229, 0.0, %v2349
      %v2362 = vsel %vm229, 0.0, %v2350
      %v2363 = vsel %vm229, %v2351, 0.0
      %v2364 = vsel %vm229, %v2353, 0.0
      %s2365 = scalar_lea.vmem %s1, 98
      %v2366 = vld [vmem:[%s2365] ss:$8 sm:$0x3]
      %v2368 = vlaneseq
      %v2369 = vshrl.u32 %v2368, 7
      %v2370 = vsub.s32 0, %v2369
      %v2371 = vrot.slane %v2366, %v2370
      %v2372 = vlaneseq
      %v2373 = vshrl.u32 %v2372, 7
      %v2374 = vsub.s32 1, %v2373
      %v2375 = vrot.slane %v2366, %v2374
      %v2378 = vmul.f32 %v2361, %v2371
      %v2379 = vmul.f32 %v2362, %v2375
      %v2380 = vmul.f32 %v2352, %v2371
      %v2381 = vmul.f32 %v2354, %v2375
      %v2382 = vadd.f32 %v2096, %v2378
      %v2383 = vadd.f32 %v2097, %v2379
      %v2384 = vadd.f32 %v2098, %v2380
      %v2385 = vadd.f32 %v2099, %v2381
      %s2386 = scalar_lea.vmem %s1, 99
      %v2387 = vld [vmem:[%s2386] ss:$8 sm:$0x3]
      %v2389 = vlaneseq
      %v2390 = vshrl.u32 %v2389, 7
      %v2391 = vsub.s32 0, %v2390
      %v2392 = vrot.slane %v2387, %v2391
      %v2393 = vlaneseq
      %v2394 = vshrl.u32 %v2393, 7
      %v2395 = vsub.s32 1, %v2394
      %v2396 = vrot.slane %v2387, %v2395
      %v2399 = vmul.f32 %v2361, %v2392
      %v2400 = vmul.f32 %v2362, %v2396
      %v2401 = vmul.f32 %v2352, %v2392
      %v2402 = vmul.f32 %v2354, %v2396
      %v2403 = vadd.f32 %v2139, %v2399
      %v2404 = vadd.f32 %v2140, %v2400
      %v2405 = vadd.f32 %v2141, %v2401
      %v2406 = vadd.f32 %v2142, %v2402
      %s2407 = scalar_lea.vmem %s1, 100
      %v2408 = vld [vmem:[%s2407] ss:$8 sm:$0x3]
      %v2410 = vlaneseq
      %v2411 = vshrl.u32 %v2410, 7
      %v2412 = vsub.s32 0, %v2411
      %v2413 = vrot.slane %v2408, %v2412
      %v2414 = vlaneseq
      %v2415 = vshrl.u32 %v2414, 7
      %v2416 = vsub.s32 1, %v2415
      %v2417 = vrot.slane %v2408, %v2416
      %v2420 = vmul.f32 %v2361, %v2413
      %v2421 = vmul.f32 %v2362, %v2417
      %v2422 = vmul.f32 %v2352, %v2413
      %v2423 = vmul.f32 %v2354, %v2417
      %v2424 = vadd.f32 %v2182, %v2420
      %v2425 = vadd.f32 %v2183, %v2421
      %v2426 = vadd.f32 %v2184, %v2422
      %v2427 = vadd.f32 %v2185, %v2423
      %s2428 = scalar_lea.vmem %s1, 101
      %v2429 = vld [vmem:[%s2428] ss:$8 sm:$0x3]
      %v2431 = vlaneseq
      %v2432 = vshrl.u32 %v2431, 7
      %v2433 = vsub.s32 0, %v2432
      %v2434 = vrot.slane %v2429, %v2433
      %v2435 = vlaneseq
      %v2436 = vshrl.u32 %v2435, 7
      %v2437 = vsub.s32 1, %v2436
      %v2438 = vrot.slane %v2429, %v2437
      %v2441 = vmul.f32 %v2361, %v2434
      %v2442 = vmul.f32 %v2362, %v2438
      %v2443 = vmul.f32 %v2352, %v2434
      %v2444 = vmul.f32 %v2354, %v2438
      %v2445 = vadd.f32 %v2225, %v2441
      %v2446 = vadd.f32 %v2226, %v2442
      %v2447 = vadd.f32 %v2227, %v2443
      %v2448 = vadd.f32 %v2228, %v2444
      %s2449 = scalar_lea.vmem %s1, 102
      %v2450 = vld [vmem:[%s2449] ss:$8 sm:$0x3]
      %v2452 = vlaneseq
      %v2453 = vshrl.u32 %v2452, 7
      %v2454 = vsub.s32 0, %v2453
      %v2455 = vrot.slane %v2450, %v2454
      %v2456 = vlaneseq
      %v2457 = vshrl.u32 %v2456, 7
      %v2458 = vsub.s32 1, %v2457
      %v2459 = vrot.slane %v2450, %v2458
      %v2462 = vmul.f32 %v2361, %v2455
      %v2463 = vmul.f32 %v2362, %v2459
      %v2464 = vmul.f32 %v2352, %v2455
      %v2465 = vmul.f32 %v2354, %v2459
      %v2466 = vadd.f32 %v2268, %v2462
      %v2467 = vadd.f32 %v2269, %v2463
      %v2468 = vadd.f32 %v2270, %v2464
      %v2469 = vadd.f32 %v2271, %v2465
      %s2470 = scalar_lea.vmem %s1, 103
      %v2471 = vld [vmem:[%s2470] ss:$8 sm:$0x3]
      %v2473 = vlaneseq
      %v2474 = vshrl.u32 %v2473, 7
      %v2475 = vsub.s32 0, %v2474
      %v2476 = vrot.slane %v2471, %v2475
      %v2477 = vlaneseq
      %v2478 = vshrl.u32 %v2477, 7
      %v2479 = vsub.s32 1, %v2478
      %v2480 = vrot.slane %v2471, %v2479
      %v2483 = vmul.f32 %v2361, %v2476
      %v2484 = vmul.f32 %v2362, %v2480
      %v2485 = vmul.f32 %v2352, %v2476
      %v2486 = vmul.f32 %v2354, %v2480
      %v2487 = vmul.f32 %v2363, %v2476
      %v2488 = vmul.f32 %v2364, %v2480
      %v2495 = vrot.slane %v2483, 1
      %v2496 = vrot.slane %v2485, 1
      %v2497 = vsel %vm375, %v2495, %v2496
      %v2498 = vrot.slane %v2484, 1
      %v2499 = vrot.slane %v2486, 1
      %v2500 = vsel %vm375, %v2498, %v2499
      %v2501 = vrot.slane %v2487, 1
      %v2502 = vsel %vm375, %v2496, %v2501
      %v2503 = vrot.slane %v2488, 1
      %v2504 = vsel %vm375, %v2499, %v2503
      %v2509 = vadd.f32 %v2382, %v2497
      %v2510 = vadd.f32 %v2383, %v2500
      %v2511 = vadd.f32 %v2384, %v2502
      %v2512 = vadd.f32 %v2385, %v2504
      %s2513 = scalar_lea.vmem %s1, 112
      %v2514 = vld [vmem:[%s2513] ss:$8 sm:$0x3]
      %v2516 = vlaneseq
      %v2517 = vshrl.u32 %v2516, 7
      %v2518 = vsub.s32 0, %v2517
      %v2519 = vrot.slane %v2514, %v2518
      %v2520 = vlaneseq
      %v2521 = vshrl.u32 %v2520, 7
      %v2522 = vsub.s32 1, %v2521
      %v2523 = vrot.slane %v2514, %v2522
      %v2526 = vmul.f32 %v2361, %v2519
      %v2527 = vmul.f32 %v2362, %v2523
      %v2528 = vmul.f32 %v2352, %v2519
      %v2529 = vmul.f32 %v2354, %v2523
      %v2530 = vmul.f32 %v2363, %v2519
      %v2531 = vmul.f32 %v2364, %v2523
      %v2538 = vrot.slane %v2526, 1
      %v2539 = vrot.slane %v2528, 1
      %v2540 = vsel %vm375, %v2538, %v2539
      %v2541 = vrot.slane %v2527, 1
      %v2542 = vrot.slane %v2529, 1
      %v2543 = vsel %vm375, %v2541, %v2542
      %v2544 = vrot.slane %v2530, 1
      %v2545 = vsel %vm375, %v2539, %v2544
      %v2546 = vrot.slane %v2531, 1
      %v2547 = vsel %vm375, %v2542, %v2546
      %v2552 = vadd.f32 %v2403, %v2540
      %v2553 = vadd.f32 %v2404, %v2543
      %v2554 = vadd.f32 %v2405, %v2545
      %v2555 = vadd.f32 %v2406, %v2547
      %s2556 = scalar_lea.vmem %s1, 113
      %v2557 = vld [vmem:[%s2556] ss:$8 sm:$0x3]
      %v2559 = vlaneseq
      %v2560 = vshrl.u32 %v2559, 7
      %v2561 = vsub.s32 0, %v2560
      %v2562 = vrot.slane %v2557, %v2561
      %v2563 = vlaneseq
      %v2564 = vshrl.u32 %v2563, 7
      %v2565 = vsub.s32 1, %v2564
      %v2566 = vrot.slane %v2557, %v2565
      %v2569 = vmul.f32 %v2361, %v2562
      %v2570 = vmul.f32 %v2362, %v2566
      %v2571 = vmul.f32 %v2352, %v2562
      %v2572 = vmul.f32 %v2354, %v2566
      %v2573 = vmul.f32 %v2363, %v2562
      %v2574 = vmul.f32 %v2364, %v2566
      %v2581 = vrot.slane %v2569, 1
      %v2582 = vrot.slane %v2571, 1
      %v2583 = vsel %vm375, %v2581, %v2582
      %v2584 = vrot.slane %v2570, 1
      %v2585 = vrot.slane %v2572, 1
      %v2586 = vsel %vm375, %v2584, %v2585
      %v2587 = vrot.slane %v2573, 1
      %v2588 = vsel %vm375, %v2582, %v2587
      %v2589 = vrot.slane %v2574, 1
      %v2590 = vsel %vm375, %v2585, %v2589
      %v2595 = vadd.f32 %v2424, %v2583
      %v2596 = vadd.f32 %v2425, %v2586
      %v2597 = vadd.f32 %v2426, %v2588
      %v2598 = vadd.f32 %v2427, %v2590
      %s2599 = scalar_lea.vmem %s1, 114
      %v2600 = vld [vmem:[%s2599] ss:$8 sm:$0x3]
      %v2602 = vlaneseq
      %v2603 = vshrl.u32 %v2602, 7
      %v2604 = vsub.s32 0, %v2603
      %v2605 = vrot.slane %v2600, %v2604
      %v2606 = vlaneseq
      %v2607 = vshrl.u32 %v2606, 7
      %v2608 = vsub.s32 1, %v2607
      %v2609 = vrot.slane %v2600, %v2608
      %v2612 = vmul.f32 %v2361, %v2605
      %v2613 = vmul.f32 %v2362, %v2609
      %v2614 = vmul.f32 %v2352, %v2605
      %v2615 = vmul.f32 %v2354, %v2609
      %v2616 = vmul.f32 %v2363, %v2605
      %v2617 = vmul.f32 %v2364, %v2609
      %v2624 = vrot.slane %v2612, 1
      %v2625 = vrot.slane %v2614, 1
      %v2626 = vsel %vm375, %v2624, %v2625
      %v2627 = vrot.slane %v2613, 1
      %v2628 = vrot.slane %v2615, 1
      %v2629 = vsel %vm375, %v2627, %v2628
      %v2630 = vrot.slane %v2616, 1
      %v2631 = vsel %vm375, %v2625, %v2630
      %v2632 = vrot.slane %v2617, 1
      %v2633 = vsel %vm375, %v2628, %v2632
      %v2638 = vadd.f32 %v2445, %v2626
      %v2639 = vadd.f32 %v2446, %v2629
      %v2640 = vadd.f32 %v2447, %v2631
      %v2641 = vadd.f32 %v2448, %v2633
      %s2642 = scalar_lea.vmem %s1, 115
      %v2643 = vld [vmem:[%s2642] ss:$8 sm:$0x3]
      %v2645 = vlaneseq
      %v2646 = vshrl.u32 %v2645, 7
      %v2647 = vsub.s32 0, %v2646
      %v2648 = vrot.slane %v2643, %v2647
      %v2649 = vlaneseq
      %v2650 = vshrl.u32 %v2649, 7
      %v2651 = vsub.s32 1, %v2650
      %v2652 = vrot.slane %v2643, %v2651
      %v2655 = vmul.f32 %v2361, %v2648
      %v2656 = vmul.f32 %v2362, %v2652
      %v2657 = vmul.f32 %v2352, %v2648
      %v2658 = vmul.f32 %v2354, %v2652
      %v2659 = vmul.f32 %v2363, %v2648
      %v2660 = vmul.f32 %v2364, %v2652
      %v2667 = vrot.slane %v2655, 1
      %v2668 = vrot.slane %v2657, 1
      %v2669 = vsel %vm375, %v2667, %v2668
      %v2670 = vrot.slane %v2656, 1
      %v2671 = vrot.slane %v2658, 1
      %v2672 = vsel %vm375, %v2670, %v2671
      %v2673 = vrot.slane %v2659, 1
      %v2674 = vsel %vm375, %v2668, %v2673
      %v2675 = vrot.slane %v2660, 1
      %v2676 = vsel %vm375, %v2671, %v2675
      %v2681 = vadd.f32 %v2466, %v2669
      %v2682 = vadd.f32 %v2467, %v2672
      %v2683 = vadd.f32 %v2468, %v2674
      %v2684 = vadd.f32 %v2469, %v2676
      %s2685 = scalar_lea.vmem %s1, 116
      %v2686 = vld [vmem:[%s2685] ss:$8 sm:$0x3]
      %v2688 = vlaneseq
      %v2689 = vshrl.u32 %v2688, 7
      %v2690 = vsub.s32 0, %v2689
      %v2691 = vrot.slane %v2686, %v2690
      %v2692 = vlaneseq
      %v2693 = vshrl.u32 %v2692, 7
      %v2694 = vsub.s32 1, %v2693
      %v2695 = vrot.slane %v2686, %v2694
      %v2698 = vmul.f32 %v2361, %v2691
      %v2699 = vmul.f32 %v2362, %v2695
      %v2700 = vmul.f32 %v2352, %v2691
      %v2701 = vmul.f32 %v2354, %v2695
      %v2702 = vmul.f32 %v2363, %v2691
      %v2703 = vmul.f32 %v2364, %v2695
      %v2710 = vrot.slane %v2698, 2
      %v2711 = vrot.slane %v2700, 2
      %v2712 = vsel %vm591, %v2710, %v2711
      %v2713 = vrot.slane %v2699, 2
      %v2714 = vrot.slane %v2701, 2
      %v2715 = vsel %vm591, %v2713, %v2714
      %v2716 = vrot.slane %v2702, 2
      %v2717 = vsel %vm591, %v2711, %v2716
      %v2718 = vrot.slane %v2703, 2
      %v2719 = vsel %vm591, %v2714, %v2718
      %v2724 = vadd.f32 %v2509, %v2712
      %v2725 = vadd.f32 %v2510, %v2715
      %v2726 = vadd.f32 %v2511, %v2717
      %v2727 = vadd.f32 %v2512, %v2719
      %s2728 = scalar_lea.vmem %s1, 117
      %v2729 = vld [vmem:[%s2728] ss:$8 sm:$0x3]
      %v2731 = vlaneseq
      %v2732 = vshrl.u32 %v2731, 7
      %v2733 = vsub.s32 0, %v2732
      %v2734 = vrot.slane %v2729, %v2733
      %v2735 = vlaneseq
      %v2736 = vshrl.u32 %v2735, 7
      %v2737 = vsub.s32 1, %v2736
      %v2738 = vrot.slane %v2729, %v2737
      %v2741 = vmul.f32 %v2361, %v2734
      %v2742 = vmul.f32 %v2362, %v2738
      %v2743 = vmul.f32 %v2352, %v2734
      %v2744 = vmul.f32 %v2354, %v2738
      %v2745 = vmul.f32 %v2363, %v2734
      %v2746 = vmul.f32 %v2364, %v2738
      %v2753 = vrot.slane %v2741, 2
      %v2754 = vrot.slane %v2743, 2
      %v2755 = vsel %vm591, %v2753, %v2754
      %v2756 = vrot.slane %v2742, 2
      %v2757 = vrot.slane %v2744, 2
      %v2758 = vsel %vm591, %v2756, %v2757
      %v2759 = vrot.slane %v2745, 2
      %v2760 = vsel %vm591, %v2754, %v2759
      %v2761 = vrot.slane %v2746, 2
      %v2762 = vsel %vm591, %v2757, %v2761
      %v2767 = vadd.f32 %v2552, %v2755
      %v2768 = vadd.f32 %v2553, %v2758
      %v2769 = vadd.f32 %v2554, %v2760
      %v2770 = vadd.f32 %v2555, %v2762
      %s2771 = scalar_lea.vmem %s1, 118
      %v2772 = vld [vmem:[%s2771] ss:$8 sm:$0x3]
      %v2774 = vlaneseq
      %v2775 = vshrl.u32 %v2774, 7
      %v2776 = vsub.s32 0, %v2775
      %v2777 = vrot.slane %v2772, %v2776
      %v2778 = vlaneseq
      %v2779 = vshrl.u32 %v2778, 7
      %v2780 = vsub.s32 1, %v2779
      %v2781 = vrot.slane %v2772, %v2780
      %v2784 = vmul.f32 %v2361, %v2777
      %v2785 = vmul.f32 %v2362, %v2781
      %v2786 = vmul.f32 %v2352, %v2777
      %v2787 = vmul.f32 %v2354, %v2781
      %v2788 = vmul.f32 %v2363, %v2777
      %v2789 = vmul.f32 %v2364, %v2781
      %v2796 = vrot.slane %v2784, 2
      %v2797 = vrot.slane %v2786, 2
      %v2798 = vsel %vm591, %v2796, %v2797
      %v2799 = vrot.slane %v2785, 2
      %v2800 = vrot.slane %v2787, 2
      %v2801 = vsel %vm591, %v2799, %v2800
      %v2802 = vrot.slane %v2788, 2
      %v2803 = vsel %vm591, %v2797, %v2802
      %v2804 = vrot.slane %v2789, 2
      %v2805 = vsel %vm591, %v2800, %v2804
      %v2810 = vadd.f32 %v2595, %v2798
      %v2811 = vadd.f32 %v2596, %v2801
      %v2812 = vadd.f32 %v2597, %v2803
      %v2813 = vadd.f32 %v2598, %v2805
      %s2814 = scalar_lea.vmem %s1, 119
      %v2815 = vld [vmem:[%s2814] ss:$8 sm:$0x3]
      %v2817 = vlaneseq
      %v2818 = vshrl.u32 %v2817, 7
      %v2819 = vsub.s32 0, %v2818
      %v2820 = vrot.slane %v2815, %v2819
      %v2821 = vlaneseq
      %v2822 = vshrl.u32 %v2821, 7
      %v2823 = vsub.s32 1, %v2822
      %v2824 = vrot.slane %v2815, %v2823
      %v2827 = vmul.f32 %v2361, %v2820
      %v2828 = vmul.f32 %v2362, %v2824
      %v2829 = vmul.f32 %v2352, %v2820
      %v2830 = vmul.f32 %v2354, %v2824
      %v2831 = vmul.f32 %v2363, %v2820
      %v2832 = vmul.f32 %v2364, %v2824
      %v2839 = vrot.slane %v2827, 2
      %v2840 = vrot.slane %v2829, 2
      %v2841 = vsel %vm591, %v2839, %v2840
      %v2842 = vrot.slane %v2828, 2
      %v2843 = vrot.slane %v2830, 2
      %v2844 = vsel %vm591, %v2842, %v2843
      %v2845 = vrot.slane %v2831, 2
      %v2846 = vsel %vm591, %v2840, %v2845
      %v2847 = vrot.slane %v2832, 2
      %v2848 = vsel %vm591, %v2843, %v2847
      %v2853 = vadd.f32 %v2638, %v2841
      %v2854 = vadd.f32 %v2639, %v2844
      %v2855 = vadd.f32 %v2640, %v2846
      %v2856 = vadd.f32 %v2641, %v2848
      %s2857 = scalar_lea.vmem %s1, 128
      %v2858 = vld [vmem:[%s2857] ss:$8 sm:$0x3]
      %v2860 = vlaneseq
      %v2861 = vshrl.u32 %v2860, 7
      %v2862 = vsub.s32 0, %v2861
      %v2863 = vrot.slane %v2858, %v2862
      %v2864 = vlaneseq
      %v2865 = vshrl.u32 %v2864, 7
      %v2866 = vsub.s32 1, %v2865
      %v2867 = vrot.slane %v2858, %v2866
      %v2870 = vmul.f32 %v2361, %v2863
      %v2871 = vmul.f32 %v2362, %v2867
      %v2872 = vmul.f32 %v2352, %v2863
      %v2873 = vmul.f32 %v2354, %v2867
      %v2874 = vmul.f32 %v2363, %v2863
      %v2875 = vmul.f32 %v2364, %v2867
      %v2882 = vrot.slane %v2870, 2
      %v2883 = vrot.slane %v2872, 2
      %v2884 = vsel %vm591, %v2882, %v2883
      %v2885 = vrot.slane %v2871, 2
      %v2886 = vrot.slane %v2873, 2
      %v2887 = vsel %vm591, %v2885, %v2886
      %v2888 = vrot.slane %v2874, 2
      %v2889 = vsel %vm591, %v2883, %v2888
      %v2890 = vrot.slane %v2875, 2
      %v2891 = vsel %vm591, %v2886, %v2890
      %v2896 = vadd.f32 %v2681, %v2884
      %v2897 = vadd.f32 %v2682, %v2887
      %v2898 = vadd.f32 %v2683, %v2889
      %v2899 = vadd.f32 %v2684, %v2891
      %s2900 = scalar_lea.vmem %s1, 129
      %v2901 = vld [vmem:[%s2900] ss:$8 sm:$0x3]
      %v2903 = vlaneseq
      %v2904 = vshrl.u32 %v2903, 7
      %v2905 = vsub.s32 0, %v2904
      %v2906 = vrot.slane %v2901, %v2905
      %v2907 = vlaneseq
      %v2908 = vshrl.u32 %v2907, 7
      %v2909 = vsub.s32 1, %v2908
      %v2910 = vrot.slane %v2901, %v2909
      %v2913 = vmul.f32 %v2361, %v2906
      %v2914 = vmul.f32 %v2362, %v2910
      %v2915 = vmul.f32 %v2352, %v2906
      %v2916 = vmul.f32 %v2354, %v2910
      %v2917 = vmul.f32 %v2363, %v2906
      %v2918 = vmul.f32 %v2364, %v2910
      %v2925 = vrot.slane %v2913, 3
      %v2926 = vrot.slane %v2915, 3
      %v2927 = vsel %vm807, %v2925, %v2926
      %v2928 = vrot.slane %v2914, 3
      %v2929 = vrot.slane %v2916, 3
      %v2930 = vsel %vm807, %v2928, %v2929
      %v2931 = vrot.slane %v2917, 3
      %v2932 = vsel %vm807, %v2926, %v2931
      %v2933 = vrot.slane %v2918, 3
      %v2934 = vsel %vm807, %v2929, %v2933
      %v2939 = vadd.f32 %v2724, %v2927
      %v2940 = vadd.f32 %v2725, %v2930
      %v2941 = vadd.f32 %v2726, %v2932
      %v2942 = vadd.f32 %v2727, %v2934
      %s2943 = scalar_lea.vmem %s1, 130
      %v2944 = vld [vmem:[%s2943] ss:$8 sm:$0x3]
      %v2946 = vlaneseq
      %v2947 = vshrl.u32 %v2946, 7
      %v2948 = vsub.s32 0, %v2947
      %v2949 = vrot.slane %v2944, %v2948
      %v2950 = vlaneseq
      %v2951 = vshrl.u32 %v2950, 7
      %v2952 = vsub.s32 1, %v2951
      %v2953 = vrot.slane %v2944, %v2952
      %v2956 = vmul.f32 %v2361, %v2949
      %v2957 = vmul.f32 %v2362, %v2953
      %v2958 = vmul.f32 %v2352, %v2949
      %v2959 = vmul.f32 %v2354, %v2953
      %v2960 = vmul.f32 %v2363, %v2949
      %v2961 = vmul.f32 %v2364, %v2953
      %v2968 = vrot.slane %v2956, 3
      %v2969 = vrot.slane %v2958, 3
      %v2970 = vsel %vm807, %v2968, %v2969
      %v2971 = vrot.slane %v2957, 3
      %v2972 = vrot.slane %v2959, 3
      %v2973 = vsel %vm807, %v2971, %v2972
      %v2974 = vrot.slane %v2960, 3
      %v2975 = vsel %vm807, %v2969, %v2974
      %v2976 = vrot.slane %v2961, 3
      %v2977 = vsel %vm807, %v2972, %v2976
      %v2982 = vadd.f32 %v2767, %v2970
      %v2983 = vadd.f32 %v2768, %v2973
      %v2984 = vadd.f32 %v2769, %v2975
      %v2985 = vadd.f32 %v2770, %v2977
      %s2986 = scalar_lea.vmem %s1, 131
      %v2987 = vld [vmem:[%s2986] ss:$8 sm:$0x3]
      %v2989 = vlaneseq
      %v2990 = vshrl.u32 %v2989, 7
      %v2991 = vsub.s32 0, %v2990
      %v2992 = vrot.slane %v2987, %v2991
      %v2993 = vlaneseq
      %v2994 = vshrl.u32 %v2993, 7
      %v2995 = vsub.s32 1, %v2994
      %v2996 = vrot.slane %v2987, %v2995
      %v2999 = vmul.f32 %v2361, %v2992
      %v3000 = vmul.f32 %v2362, %v2996
      %v3001 = vmul.f32 %v2352, %v2992
      %v3002 = vmul.f32 %v2354, %v2996
      %v3003 = vmul.f32 %v2363, %v2992
      %v3004 = vmul.f32 %v2364, %v2996
      %v3011 = vrot.slane %v2999, 3
      %v3012 = vrot.slane %v3001, 3
      %v3013 = vsel %vm807, %v3011, %v3012
      %v3014 = vrot.slane %v3000, 3
      %v3015 = vrot.slane %v3002, 3
      %v3016 = vsel %vm807, %v3014, %v3015
      %v3017 = vrot.slane %v3003, 3
      %v3018 = vsel %vm807, %v3012, %v3017
      %v3019 = vrot.slane %v3004, 3
      %v3020 = vsel %vm807, %v3015, %v3019
      %v3025 = vadd.f32 %v2810, %v3013
      %v3026 = vadd.f32 %v2811, %v3016
      %v3027 = vadd.f32 %v2812, %v3018
      %v3028 = vadd.f32 %v2813, %v3020
      %s3029 = scalar_lea.vmem %s1, 132
      %v3030 = vld [vmem:[%s3029] ss:$8 sm:$0x3]
      %v3032 = vlaneseq
      %v3033 = vshrl.u32 %v3032, 7
      %v3034 = vsub.s32 0, %v3033
      %v3035 = vrot.slane %v3030, %v3034
      %v3036 = vlaneseq
      %v3037 = vshrl.u32 %v3036, 7
      %v3038 = vsub.s32 1, %v3037
      %v3039 = vrot.slane %v3030, %v3038
      %v3042 = vmul.f32 %v2361, %v3035
      %v3043 = vmul.f32 %v2362, %v3039
      %v3044 = vmul.f32 %v2352, %v3035
      %v3045 = vmul.f32 %v2354, %v3039
      %v3046 = vmul.f32 %v2363, %v3035
      %v3047 = vmul.f32 %v2364, %v3039
      %v3054 = vrot.slane %v3042, 3
      %v3055 = vrot.slane %v3044, 3
      %v3056 = vsel %vm807, %v3054, %v3055
      %v3057 = vrot.slane %v3043, 3
      %v3058 = vrot.slane %v3045, 3
      %v3059 = vsel %vm807, %v3057, %v3058
      %v3060 = vrot.slane %v3046, 3
      %v3061 = vsel %vm807, %v3055, %v3060
      %v3062 = vrot.slane %v3047, 3
      %v3063 = vsel %vm807, %v3058, %v3062
      %v3068 = vadd.f32 %v2853, %v3056
      %v3069 = vadd.f32 %v2854, %v3059
      %v3070 = vadd.f32 %v2855, %v3061
      %v3071 = vadd.f32 %v2856, %v3063
      %s3072 = scalar_lea.vmem %s1, 133
      %v3073 = vld [vmem:[%s3072] ss:$8 sm:$0x3]
      %v3075 = vlaneseq
      %v3076 = vshrl.u32 %v3075, 7
      %v3077 = vsub.s32 0, %v3076
      %v3078 = vrot.slane %v3073, %v3077
      %v3079 = vlaneseq
      %v3080 = vshrl.u32 %v3079, 7
      %v3081 = vsub.s32 1, %v3080
      %v3082 = vrot.slane %v3073, %v3081
      %v3085 = vmul.f32 %v2361, %v3078
      %v3086 = vmul.f32 %v2362, %v3082
      %v3087 = vmul.f32 %v2352, %v3078
      %v3088 = vmul.f32 %v2354, %v3082
      %v3089 = vmul.f32 %v2363, %v3078
      %v3090 = vmul.f32 %v2364, %v3082
      %v3097 = vrot.slane %v3085, 3
      %v3098 = vrot.slane %v3087, 3
      %v3099 = vsel %vm807, %v3097, %v3098
      %v3100 = vrot.slane %v3086, 3
      %v3101 = vrot.slane %v3088, 3
      %v3102 = vsel %vm807, %v3100, %v3101
      %v3103 = vrot.slane %v3089, 3
      %v3104 = vsel %vm807, %v3098, %v3103
      %v3105 = vrot.slane %v3090, 3
      %v3106 = vsel %vm807, %v3101, %v3105
      %v3111 = vadd.f32 %v2896, %v3099
      %v3112 = vadd.f32 %v2897, %v3102
      %v3113 = vadd.f32 %v2898, %v3104
      %v3114 = vadd.f32 %v2899, %v3106
      %s3115 = scalar_lea.vmem %s1, 134
      %v3116 = vld [vmem:[%s3115] ss:$8 sm:$0x3]
      %v3118 = vlaneseq
      %v3119 = vshrl.u32 %v3118, 7
      %v3120 = vsub.s32 0, %v3119
      %v3121 = vrot.slane %v3116, %v3120
      %v3122 = vlaneseq
      %v3123 = vshrl.u32 %v3122, 7
      %v3124 = vsub.s32 1, %v3123
      %v3125 = vrot.slane %v3116, %v3124
      %v3128 = vmul.f32 %v2361, %v3121
      %v3129 = vmul.f32 %v2362, %v3125
      %v3130 = vmul.f32 %v2352, %v3121
      %v3131 = vmul.f32 %v2354, %v3125
      %v3132 = vmul.f32 %v2363, %v3121
      %v3133 = vmul.f32 %v2364, %v3125
      %v3140 = vrot.slane %v3128, 4
      %v3141 = vrot.slane %v3130, 4
      %v3142 = vsel %vm1023, %v3140, %v3141
      %v3143 = vrot.slane %v3129, 4
      %v3144 = vrot.slane %v3131, 4
      %v3145 = vsel %vm1023, %v3143, %v3144
      %v3146 = vrot.slane %v3132, 4
      %v3147 = vsel %vm1023, %v3141, %v3146
      %v3148 = vrot.slane %v3133, 4
      %v3149 = vsel %vm1023, %v3144, %v3148
      %v3154 = vadd.f32 %v2939, %v3142
      %v3155 = vadd.f32 %v2940, %v3145
      %v3156 = vadd.f32 %v2941, %v3147
      %v3157 = vadd.f32 %v2942, %v3149
      %s3158 = scalar_lea.vmem %s1, 135
      %v3159 = vld [vmem:[%s3158] ss:$8 sm:$0x3]
      %v3161 = vlaneseq
      %v3162 = vshrl.u32 %v3161, 7
      %v3163 = vsub.s32 0, %v3162
      %v3164 = vrot.slane %v3159, %v3163
      %v3165 = vlaneseq
      %v3166 = vshrl.u32 %v3165, 7
      %v3167 = vsub.s32 1, %v3166
      %v3168 = vrot.slane %v3159, %v3167
      %v3171 = vmul.f32 %v2361, %v3164
      %v3172 = vmul.f32 %v2362, %v3168
      %v3173 = vmul.f32 %v2352, %v3164
      %v3174 = vmul.f32 %v2354, %v3168
      %v3175 = vmul.f32 %v2363, %v3164
      %v3176 = vmul.f32 %v2364, %v3168
      %v3183 = vrot.slane %v3171, 4
      %v3184 = vrot.slane %v3173, 4
      %v3185 = vsel %vm1023, %v3183, %v3184
      %v3186 = vrot.slane %v3172, 4
      %v3187 = vrot.slane %v3174, 4
      %v3188 = vsel %vm1023, %v3186, %v3187
      %v3189 = vrot.slane %v3175, 4
      %v3190 = vsel %vm1023, %v3184, %v3189
      %v3191 = vrot.slane %v3176, 4
      %v3192 = vsel %vm1023, %v3187, %v3191
      %v3197 = vadd.f32 %v2982, %v3185
      %v3198 = vadd.f32 %v2983, %v3188
      %v3199 = vadd.f32 %v2984, %v3190
      %v3200 = vadd.f32 %v2985, %v3192
      %s3201 = scalar_lea.vmem %s1, 144
      %v3202 = vld [vmem:[%s3201] ss:$8 sm:$0x3]
      %v3204 = vlaneseq
      %v3205 = vshrl.u32 %v3204, 7
      %v3206 = vsub.s32 0, %v3205
      %v3207 = vrot.slane %v3202, %v3206
      %v3208 = vlaneseq
      %v3209 = vshrl.u32 %v3208, 7
      %v3210 = vsub.s32 1, %v3209
      %v3211 = vrot.slane %v3202, %v3210
      %v3214 = vmul.f32 %v2361, %v3207
      %v3215 = vmul.f32 %v2362, %v3211
      %v3216 = vmul.f32 %v2352, %v3207
      %v3217 = vmul.f32 %v2354, %v3211
      %v3218 = vmul.f32 %v2363, %v3207
      %v3219 = vmul.f32 %v2364, %v3211
      %v3226 = vrot.slane %v3214, 4
      %v3227 = vrot.slane %v3216, 4
      %v3228 = vsel %vm1023, %v3226, %v3227
      %v3229 = vrot.slane %v3215, 4
      %v3230 = vrot.slane %v3217, 4
      %v3231 = vsel %vm1023, %v3229, %v3230
      %v3232 = vrot.slane %v3218, 4
      %v3233 = vsel %vm1023, %v3227, %v3232
      %v3234 = vrot.slane %v3219, 4
      %v3235 = vsel %vm1023, %v3230, %v3234
      %v3240 = vadd.f32 %v3025, %v3228
      %v3241 = vadd.f32 %v3026, %v3231
      %v3242 = vadd.f32 %v3027, %v3233
      %v3243 = vadd.f32 %v3028, %v3235
      %s3244 = scalar_lea.vmem %s1, 145
      %v3245 = vld [vmem:[%s3244] ss:$8 sm:$0x3]
      %v3247 = vlaneseq
      %v3248 = vshrl.u32 %v3247, 7
      %v3249 = vsub.s32 0, %v3248
      %v3250 = vrot.slane %v3245, %v3249
      %v3251 = vlaneseq
      %v3252 = vshrl.u32 %v3251, 7
      %v3253 = vsub.s32 1, %v3252
      %v3254 = vrot.slane %v3245, %v3253
      %v3257 = vmul.f32 %v2361, %v3250
      %v3258 = vmul.f32 %v2362, %v3254
      %v3259 = vmul.f32 %v2352, %v3250
      %v3260 = vmul.f32 %v2354, %v3254
      %v3261 = vmul.f32 %v2363, %v3250
      %v3262 = vmul.f32 %v2364, %v3254
      %v3269 = vrot.slane %v3257, 4
      %v3270 = vrot.slane %v3259, 4
      %v3271 = vsel %vm1023, %v3269, %v3270
      %v3272 = vrot.slane %v3258, 4
      %v3273 = vrot.slane %v3260, 4
      %v3274 = vsel %vm1023, %v3272, %v3273
      %v3275 = vrot.slane %v3261, 4
      %v3276 = vsel %vm1023, %v3270, %v3275
      %v3277 = vrot.slane %v3262, 4
      %v3278 = vsel %vm1023, %v3273, %v3277
      %v3283 = vadd.f32 %v3068, %v3271
      %v3284 = vadd.f32 %v3069, %v3274
      %v3285 = vadd.f32 %v3070, %v3276
      %v3286 = vadd.f32 %v3071, %v3278
      %s3287 = scalar_lea.vmem %s1, 146
      %v3288 = vld [vmem:[%s3287] ss:$8 sm:$0x3]
      %v3290 = vlaneseq
      %v3291 = vshrl.u32 %v3290, 7
      %v3292 = vsub.s32 0, %v3291
      %v3293 = vrot.slane %v3288, %v3292
      %v3294 = vlaneseq
      %v3295 = vshrl.u32 %v3294, 7
      %v3296 = vsub.s32 1, %v3295
      %v3297 = vrot.slane %v3288, %v3296
      %v3300 = vmul.f32 %v2361, %v3293
      %v3301 = vmul.f32 %v2362, %v3297
      %v3302 = vmul.f32 %v2352, %v3293
      %v3303 = vmul.f32 %v2354, %v3297
      %v3304 = vmul.f32 %v2363, %v3293
      %v3305 = vmul.f32 %v2364, %v3297
      %v3312 = vrot.slane %v3300, 4
      %v3313 = vrot.slane %v3302, 4
      %v3314 = vsel %vm1023, %v3312, %v3313
      %v3315 = vrot.slane %v3301, 4
      %v3316 = vrot.slane %v3303, 4
      %v3317 = vsel %vm1023, %v3315, %v3316
      %v3318 = vrot.slane %v3304, 4
      %v3319 = vsel %vm1023, %v3313, %v3318
      %v3320 = vrot.slane %v3305, 4
      %v3321 = vsel %vm1023, %v3316, %v3320
      %v3326 = vadd.f32 %v3111, %v3314
      %v3327 = vadd.f32 %v3112, %v3317
      %v3328 = vadd.f32 %v3113, %v3319
      %v3329 = vadd.f32 %v3114, %v3321
      %s3330 = scalar_lea.vmem %s138, 48
      %v3331 = vld [vmem:[%s3330] sm:$0xff]
      %v3332 = vld [vmem:[%s3330 + $0x8] sm:$0xff]
      %3335 = vrot.lane.b32.xlu0 %v3331, 2
      %v3336 = vpop.permute.xlu0 %3335
      %3337 = vrot.lane.b32.xlu0 %v3332, 2
      %v3338 = vpop.permute.xlu0 %3337
      %v3341 = vsel %vm154, 0.0, %v3336
      %v3342 = vsel %vm154, 0.0, %v3338
      %v3343 = vsel %vm157, %v3341, 0.0
      %v3344 = vsel %vm157, %v3342, 0.0
      %3347 = vrot.lane.b32.xlu0 %v3343, 20
      %v3348 = vpop.permute.xlu0 %3347
      %3349 = vrot.lane.b32.xlu0 %v3344, 20
      %v3350 = vpop.permute.xlu0 %3349
      %3353 = vrot.lane.b32.xlu0 %v3343, 40
      %v3354 = vpop.permute.xlu0 %3353
      %3355 = vrot.lane.b32.xlu0 %v3344, 40
      %v3356 = vpop.permute.xlu0 %3355
      %3359 = vrot.lane.b32.xlu0 %v3343, 60
      %v3360 = vpop.permute.xlu0 %3359
      %3361 = vrot.lane.b32.xlu0 %v3344, 60
      %v3362 = vpop.permute.xlu0 %3361
      %3365 = vrot.lane.b32.xlu0 %v3343, 80
      %v3366 = vpop.permute.xlu0 %3365
      %3367 = vrot.lane.b32.xlu0 %v3344, 80
      %v3368 = vpop.permute.xlu0 %3367
      %3371 = vrot.lane.b32.xlu0 %v3343, 100
      %v3372 = vpop.permute.xlu0 %3371
      %3373 = vrot.lane.b32.xlu0 %v3344, 100
      %v3374 = vpop.permute.xlu0 %3373
      %3377 = vrot.lane.b32.xlu0 %v3343, 120
      %v3378 = vpop.permute.xlu0 %3377
      %3379 = vrot.lane.b32.xlu0 %v3344, 120
      %v3380 = vpop.permute.xlu0 %3379
      %3383 = vrot.lane.b32.xlu0 %v3343, 12
      %v3384 = vpop.permute.xlu0 %3383
      %3385 = vrot.lane.b32.xlu0 %v3344, 12
      %v3386 = vpop.permute.xlu0 %3385
      %v3389 = vsel %vm204, %v3343, %v3348
      %v3390 = vsel %vm204, %v3344, %v3350
      %v3391 = vsel %vm207, %v3389, %v3354
      %v3392 = vsel %vm207, %v3390, %v3356
      %v3393 = vsel %vm210, %v3391, %v3360
      %v3394 = vsel %vm210, %v3392, %v3362
      %v3395 = vsel %vm213, %v3393, %v3366
      %v3396 = vsel %vm213, %v3394, %v3368
      %v3397 = vsel %vm216, %v3395, %v3372
      %v3398 = vsel %vm216, %v3396, %v3374
      %v3399 = vsel %vm219, %v3397, %v3378
      %v3400 = vsel %vm219, %v3398, %v3380
      %v3401 = vsel %vm222, %v3378, %v3384
      %v3402 = vsel %vm222, %v3380, %v3386
      %v3407 = vrot.slane %v3399, 6
      %v3408 = vrot.slane %v3401, 6
      %v3409 = vrot.slane %v3400, 6
      %v3410 = vsel %vm229, %v3407, %v3409
      %v3411 = vrot.slane %v3402, 6
      %v3412 = vsel %vm229, %v3408, %v3411
      %v3419 = vsel %vm229, 0.0, %v3407
      %v3420 = vsel %vm229, 0.0, %v3408
      %v3421 = vsel %vm229, %v3409, 0.0
      %v3422 = vsel %vm229, %v3411, 0.0
      %s3423 = scalar_lea.vmem %s1, 147
      %v3424 = vld [vmem:[%s3423] ss:$8 sm:$0x3]
      %v3426 = vlaneseq
      %v3427 = vshrl.u32 %v3426, 7
      %v3428 = vsub.s32 0, %v3427
      %v3429 = vrot.slane %v3424, %v3428
      %v3430 = vlaneseq
      %v3431 = vshrl.u32 %v3430, 7
      %v3432 = vsub.s32 1, %v3431
      %v3433 = vrot.slane %v3424, %v3432
      %v3436 = vmul.f32 %v3419, %v3429
      %v3437 = vmul.f32 %v3420, %v3433
      %v3438 = vmul.f32 %v3410, %v3429
      %v3439 = vmul.f32 %v3412, %v3433
      %v3440 = vadd.f32 %v3154, %v3436
      %v3441 = vadd.f32 %v3155, %v3437
      %v3442 = vadd.f32 %v3156, %v3438
      %v3443 = vadd.f32 %v3157, %v3439
      %s3444 = scalar_lea.vmem %s1, 148
      %v3445 = vld [vmem:[%s3444] ss:$8 sm:$0x3]
      %v3447 = vlaneseq
      %v3448 = vshrl.u32 %v3447, 7
      %v3449 = vsub.s32 0, %v3448
      %v3450 = vrot.slane %v3445, %v3449
      %v3451 = vlaneseq
      %v3452 = vshrl.u32 %v3451, 7
      %v3453 = vsub.s32 1, %v3452
      %v3454 = vrot.slane %v3445, %v3453
      %v3457 = vmul.f32 %v3419, %v3450
      %v3458 = vmul.f32 %v3420, %v3454
      %v3459 = vmul.f32 %v3410, %v3450
      %v3460 = vmul.f32 %v3412, %v3454
      %v3461 = vadd.f32 %v3197, %v3457
      %v3462 = vadd.f32 %v3198, %v3458
      %v3463 = vadd.f32 %v3199, %v3459
      %v3464 = vadd.f32 %v3200, %v3460
      %s3465 = scalar_lea.vmem %s1, 149
      %v3466 = vld [vmem:[%s3465] ss:$8 sm:$0x3]
      %v3468 = vlaneseq
      %v3469 = vshrl.u32 %v3468, 7
      %v3470 = vsub.s32 0, %v3469
      %v3471 = vrot.slane %v3466, %v3470
      %v3472 = vlaneseq
      %v3473 = vshrl.u32 %v3472, 7
      %v3474 = vsub.s32 1, %v3473
      %v3475 = vrot.slane %v3466, %v3474
      %v3478 = vmul.f32 %v3419, %v3471
      %v3479 = vmul.f32 %v3420, %v3475
      %v3480 = vmul.f32 %v3410, %v3471
      %v3481 = vmul.f32 %v3412, %v3475
      %v3482 = vadd.f32 %v3240, %v3478
      %v3483 = vadd.f32 %v3241, %v3479
      %v3484 = vadd.f32 %v3242, %v3480
      %v3485 = vadd.f32 %v3243, %v3481
      %s3486 = scalar_lea.vmem %s1, 150
      %v3487 = vld [vmem:[%s3486] ss:$8 sm:$0x3]
      %v3489 = vlaneseq
      %v3490 = vshrl.u32 %v3489, 7
      %v3491 = vsub.s32 0, %v3490
      %v3492 = vrot.slane %v3487, %v3491
      %v3493 = vlaneseq
      %v3494 = vshrl.u32 %v3493, 7
      %v3495 = vsub.s32 1, %v3494
      %v3496 = vrot.slane %v3487, %v3495
      %v3499 = vmul.f32 %v3419, %v3492
      %v3500 = vmul.f32 %v3420, %v3496
      %v3501 = vmul.f32 %v3410, %v3492
      %v3502 = vmul.f32 %v3412, %v3496
      %v3503 = vadd.f32 %v3283, %v3499
      %v3504 = vadd.f32 %v3284, %v3500
      %v3505 = vadd.f32 %v3285, %v3501
      %v3506 = vadd.f32 %v3286, %v3502
      %s3507 = scalar_lea.vmem %s1, 151
      %v3508 = vld [vmem:[%s3507] ss:$8 sm:$0x3]
      %v3510 = vlaneseq
      %v3511 = vshrl.u32 %v3510, 7
      %v3512 = vsub.s32 0, %v3511
      %v3513 = vrot.slane %v3508, %v3512
      %v3514 = vlaneseq
      %v3515 = vshrl.u32 %v3514, 7
      %v3516 = vsub.s32 1, %v3515
      %v3517 = vrot.slane %v3508, %v3516
      %v3520 = vmul.f32 %v3419, %v3513
      %v3521 = vmul.f32 %v3420, %v3517
      %v3522 = vmul.f32 %v3410, %v3513
      %v3523 = vmul.f32 %v3412, %v3517
      %v3524 = vadd.f32 %v3326, %v3520
      %v3525 = vadd.f32 %v3327, %v3521
      %v3526 = vadd.f32 %v3328, %v3522
      %v3527 = vadd.f32 %v3329, %v3523
      %s3528 = scalar_lea.vmem %s1, 160
      %v3529 = vld [vmem:[%s3528] ss:$8 sm:$0x3]
      %v3531 = vlaneseq
      %v3532 = vshrl.u32 %v3531, 7
      %v3533 = vsub.s32 0, %v3532
      %v3534 = vrot.slane %v3529, %v3533
      %v3535 = vlaneseq
      %v3536 = vshrl.u32 %v3535, 7
      %v3537 = vsub.s32 1, %v3536
      %v3538 = vrot.slane %v3529, %v3537
      %v3541 = vmul.f32 %v3419, %v3534
      %v3542 = vmul.f32 %v3420, %v3538
      %v3543 = vmul.f32 %v3410, %v3534
      %v3544 = vmul.f32 %v3412, %v3538
      %v3545 = vmul.f32 %v3421, %v3534
      %v3546 = vmul.f32 %v3422, %v3538
      %v3553 = vrot.slane %v3541, 1
      %v3554 = vrot.slane %v3543, 1
      %v3555 = vsel %vm375, %v3553, %v3554
      %v3556 = vrot.slane %v3542, 1
      %v3557 = vrot.slane %v3544, 1
      %v3558 = vsel %vm375, %v3556, %v3557
      %v3559 = vrot.slane %v3545, 1
      %v3560 = vsel %vm375, %v3554, %v3559
      %v3561 = vrot.slane %v3546, 1
      %v3562 = vsel %vm375, %v3557, %v3561
      %v3567 = vadd.f32 %v3440, %v3555
      %v3568 = vadd.f32 %v3441, %v3558
      %v3569 = vadd.f32 %v3442, %v3560
      %v3570 = vadd.f32 %v3443, %v3562
      %s3571 = scalar_lea.vmem %s1, 161
      %v3572 = vld [vmem:[%s3571] ss:$8 sm:$0x3]
      %v3574 = vlaneseq
      %v3575 = vshrl.u32 %v3574, 7
      %v3576 = vsub.s32 0, %v3575
      %v3577 = vrot.slane %v3572, %v3576
      %v3578 = vlaneseq
      %v3579 = vshrl.u32 %v3578, 7
      %v3580 = vsub.s32 1, %v3579
      %v3581 = vrot.slane %v3572, %v3580
      %v3584 = vmul.f32 %v3419, %v3577
      %v3585 = vmul.f32 %v3420, %v3581
      %v3586 = vmul.f32 %v3410, %v3577
      %v3587 = vmul.f32 %v3412, %v3581
      %v3588 = vmul.f32 %v3421, %v3577
      %v3589 = vmul.f32 %v3422, %v3581
      %v3596 = vrot.slane %v3584, 1
      %v3597 = vrot.slane %v3586, 1
      %v3598 = vsel %vm375, %v3596, %v3597
      %v3599 = vrot.slane %v3585, 1
      %v3600 = vrot.slane %v3587, 1
      %v3601 = vsel %vm375, %v3599, %v3600
      %v3602 = vrot.slane %v3588, 1
      %v3603 = vsel %vm375, %v3597, %v3602
      %v3604 = vrot.slane %v3589, 1
      %v3605 = vsel %vm375, %v3600, %v3604
      %v3610 = vadd.f32 %v3461, %v3598
      %v3611 = vadd.f32 %v3462, %v3601
      %v3612 = vadd.f32 %v3463, %v3603
      %v3613 = vadd.f32 %v3464, %v3605
      %s3614 = scalar_lea.vmem %s1, 162
      %v3615 = vld [vmem:[%s3614] ss:$8 sm:$0x3]
      %v3617 = vlaneseq
      %v3618 = vshrl.u32 %v3617, 7
      %v3619 = vsub.s32 0, %v3618
      %v3620 = vrot.slane %v3615, %v3619
      %v3621 = vlaneseq
      %v3622 = vshrl.u32 %v3621, 7
      %v3623 = vsub.s32 1, %v3622
      %v3624 = vrot.slane %v3615, %v3623
      %v3627 = vmul.f32 %v3419, %v3620
      %v3628 = vmul.f32 %v3420, %v3624
      %v3629 = vmul.f32 %v3410, %v3620
      %v3630 = vmul.f32 %v3412, %v3624
      %v3631 = vmul.f32 %v3421, %v3620
      %v3632 = vmul.f32 %v3422, %v3624
      %v3639 = vrot.slane %v3627, 1
      %v3640 = vrot.slane %v3629, 1
      %v3641 = vsel %vm375, %v3639, %v3640
      %v3642 = vrot.slane %v3628, 1
      %v3643 = vrot.slane %v3630, 1
      %v3644 = vsel %vm375, %v3642, %v3643
      %v3645 = vrot.slane %v3631, 1
      %v3646 = vsel %vm375, %v3640, %v3645
      %v3647 = vrot.slane %v3632, 1
      %v3648 = vsel %vm375, %v3643, %v3647
      %v3653 = vadd.f32 %v3482, %v3641
      %v3654 = vadd.f32 %v3483, %v3644
      %v3655 = vadd.f32 %v3484, %v3646
      %v3656 = vadd.f32 %v3485, %v3648
      %s3657 = scalar_lea.vmem %s1, 163
      %v3658 = vld [vmem:[%s3657] ss:$8 sm:$0x3]
      %v3660 = vlaneseq
      %v3661 = vshrl.u32 %v3660, 7
      %v3662 = vsub.s32 0, %v3661
      %v3663 = vrot.slane %v3658, %v3662
      %v3664 = vlaneseq
      %v3665 = vshrl.u32 %v3664, 7
      %v3666 = vsub.s32 1, %v3665
      %v3667 = vrot.slane %v3658, %v3666
      %v3670 = vmul.f32 %v3419, %v3663
      %v3671 = vmul.f32 %v3420, %v3667
      %v3672 = vmul.f32 %v3410, %v3663
      %v3673 = vmul.f32 %v3412, %v3667
      %v3674 = vmul.f32 %v3421, %v3663
      %v3675 = vmul.f32 %v3422, %v3667
      %v3682 = vrot.slane %v3670, 1
      %v3683 = vrot.slane %v3672, 1
      %v3684 = vsel %vm375, %v3682, %v3683
      %v3685 = vrot.slane %v3671, 1
      %v3686 = vrot.slane %v3673, 1
      %v3687 = vsel %vm375, %v3685, %v3686
      %v3688 = vrot.slane %v3674, 1
      %v3689 = vsel %vm375, %v3683, %v3688
      %v3690 = vrot.slane %v3675, 1
      %v3691 = vsel %vm375, %v3686, %v3690
      %v3696 = vadd.f32 %v3503, %v3684
      %v3697 = vadd.f32 %v3504, %v3687
      %v3698 = vadd.f32 %v3505, %v3689
      %v3699 = vadd.f32 %v3506, %v3691
      %s3700 = scalar_lea.vmem %s1, 164
      %v3701 = vld [vmem:[%s3700] ss:$8 sm:$0x3]
      %v3703 = vlaneseq
      %v3704 = vshrl.u32 %v3703, 7
      %v3705 = vsub.s32 0, %v3704
      %v3706 = vrot.slane %v3701, %v3705
      %v3707 = vlaneseq
      %v3708 = vshrl.u32 %v3707, 7
      %v3709 = vsub.s32 1, %v3708
      %v3710 = vrot.slane %v3701, %v3709
      %v3713 = vmul.f32 %v3419, %v3706
      %v3714 = vmul.f32 %v3420, %v3710
      %v3715 = vmul.f32 %v3410, %v3706
      %v3716 = vmul.f32 %v3412, %v3710
      %v3717 = vmul.f32 %v3421, %v3706
      %v3718 = vmul.f32 %v3422, %v3710
      %v3725 = vrot.slane %v3713, 1
      %v3726 = vrot.slane %v3715, 1
      %v3727 = vsel %vm375, %v3725, %v3726
      %v3728 = vrot.slane %v3714, 1
      %v3729 = vrot.slane %v3716, 1
      %v3730 = vsel %vm375, %v3728, %v3729
      %v3731 = vrot.slane %v3717, 1
      %v3732 = vsel %vm375, %v3726, %v3731
      %v3733 = vrot.slane %v3718, 1
      %v3734 = vsel %vm375, %v3729, %v3733
      %v3739 = vadd.f32 %v3524, %v3727
      %v3740 = vadd.f32 %v3525, %v3730
      %v3741 = vadd.f32 %v3526, %v3732
      %v3742 = vadd.f32 %v3527, %v3734
      %s3743 = scalar_lea.vmem %s1, 165
      %v3744 = vld [vmem:[%s3743] ss:$8 sm:$0x3]
      %v3746 = vlaneseq
      %v3747 = vshrl.u32 %v3746, 7
      %v3748 = vsub.s32 0, %v3747
      %v3749 = vrot.slane %v3744, %v3748
      %v3750 = vlaneseq
      %v3751 = vshrl.u32 %v3750, 7
      %v3752 = vsub.s32 1, %v3751
      %v3753 = vrot.slane %v3744, %v3752
      %v3756 = vmul.f32 %v3419, %v3749
      %v3757 = vmul.f32 %v3420, %v3753
      %v3758 = vmul.f32 %v3410, %v3749
      %v3759 = vmul.f32 %v3412, %v3753
      %v3760 = vmul.f32 %v3421, %v3749
      %v3761 = vmul.f32 %v3422, %v3753
      %v3768 = vrot.slane %v3756, 2
      %v3769 = vrot.slane %v3758, 2
      %v3770 = vsel %vm591, %v3768, %v3769
      %v3771 = vrot.slane %v3757, 2
      %v3772 = vrot.slane %v3759, 2
      %v3773 = vsel %vm591, %v3771, %v3772
      %v3774 = vrot.slane %v3760, 2
      %v3775 = vsel %vm591, %v3769, %v3774
      %v3776 = vrot.slane %v3761, 2
      %v3777 = vsel %vm591, %v3772, %v3776
      %v3782 = vadd.f32 %v3567, %v3770
      %v3783 = vadd.f32 %v3568, %v3773
      %v3784 = vadd.f32 %v3569, %v3775
      %v3785 = vadd.f32 %v3570, %v3777
      %s3786 = scalar_lea.vmem %s1, 166
      %v3787 = vld [vmem:[%s3786] ss:$8 sm:$0x3]
      %v3789 = vlaneseq
      %v3790 = vshrl.u32 %v3789, 7
      %v3791 = vsub.s32 0, %v3790
      %v3792 = vrot.slane %v3787, %v3791
      %v3793 = vlaneseq
      %v3794 = vshrl.u32 %v3793, 7
      %v3795 = vsub.s32 1, %v3794
      %v3796 = vrot.slane %v3787, %v3795
      %v3799 = vmul.f32 %v3419, %v3792
      %v3800 = vmul.f32 %v3420, %v3796
      %v3801 = vmul.f32 %v3410, %v3792
      %v3802 = vmul.f32 %v3412, %v3796
      %v3803 = vmul.f32 %v3421, %v3792
      %v3804 = vmul.f32 %v3422, %v3796
      %v3811 = vrot.slane %v3799, 2
      %v3812 = vrot.slane %v3801, 2
      %v3813 = vsel %vm591, %v3811, %v3812
      %v3814 = vrot.slane %v3800, 2
      %v3815 = vrot.slane %v3802, 2
      %v3816 = vsel %vm591, %v3814, %v3815
      %v3817 = vrot.slane %v3803, 2
      %v3818 = vsel %vm591, %v3812, %v3817
      %v3819 = vrot.slane %v3804, 2
      %v3820 = vsel %vm591, %v3815, %v3819
      %v3825 = vadd.f32 %v3610, %v3813
      %v3826 = vadd.f32 %v3611, %v3816
      %v3827 = vadd.f32 %v3612, %v3818
      %v3828 = vadd.f32 %v3613, %v3820
      %s3829 = scalar_lea.vmem %s1, 167
      %v3830 = vld [vmem:[%s3829] ss:$8 sm:$0x3]
      %v3832 = vlaneseq
      %v3833 = vshrl.u32 %v3832, 7
      %v3834 = vsub.s32 0, %v3833
      %v3835 = vrot.slane %v3830, %v3834
      %v3836 = vlaneseq
      %v3837 = vshrl.u32 %v3836, 7
      %v3838 = vsub.s32 1, %v3837
      %v3839 = vrot.slane %v3830, %v3838
      %v3842 = vmul.f32 %v3419, %v3835
      %v3843 = vmul.f32 %v3420, %v3839
      %v3844 = vmul.f32 %v3410, %v3835
      %v3845 = vmul.f32 %v3412, %v3839
      %v3846 = vmul.f32 %v3421, %v3835
      %v3847 = vmul.f32 %v3422, %v3839
      %v3854 = vrot.slane %v3842, 2
      %v3855 = vrot.slane %v3844, 2
      %v3856 = vsel %vm591, %v3854, %v3855
      %v3857 = vrot.slane %v3843, 2
      %v3858 = vrot.slane %v3845, 2
      %v3859 = vsel %vm591, %v3857, %v3858
      %v3860 = vrot.slane %v3846, 2
      %v3861 = vsel %vm591, %v3855, %v3860
      %v3862 = vrot.slane %v3847, 2
      %v3863 = vsel %vm591, %v3858, %v3862
      %v3868 = vadd.f32 %v3653, %v3856
      %v3869 = vadd.f32 %v3654, %v3859
      %v3870 = vadd.f32 %v3655, %v3861
      %v3871 = vadd.f32 %v3656, %v3863
      %s3872 = scalar_lea.vmem %s1, 176
      %v3873 = vld [vmem:[%s3872] ss:$8 sm:$0x3]
      %v3875 = vlaneseq
      %v3876 = vshrl.u32 %v3875, 7
      %v3877 = vsub.s32 0, %v3876
      %v3878 = vrot.slane %v3873, %v3877
      %v3879 = vlaneseq
      %v3880 = vshrl.u32 %v3879, 7
      %v3881 = vsub.s32 1, %v3880
      %v3882 = vrot.slane %v3873, %v3881
      %v3885 = vmul.f32 %v3419, %v3878
      %v3886 = vmul.f32 %v3420, %v3882
      %v3887 = vmul.f32 %v3410, %v3878
      %v3888 = vmul.f32 %v3412, %v3882
      %v3889 = vmul.f32 %v3421, %v3878
      %v3890 = vmul.f32 %v3422, %v3882
      %v3897 = vrot.slane %v3885, 2
      %v3898 = vrot.slane %v3887, 2
      %v3899 = vsel %vm591, %v3897, %v3898
      %v3900 = vrot.slane %v3886, 2
      %v3901 = vrot.slane %v3888, 2
      %v3902 = vsel %vm591, %v3900, %v3901
      %v3903 = vrot.slane %v3889, 2
      %v3904 = vsel %vm591, %v3898, %v3903
      %v3905 = vrot.slane %v3890, 2
      %v3906 = vsel %vm591, %v3901, %v3905
      %v3911 = vadd.f32 %v3696, %v3899
      %v3912 = vadd.f32 %v3697, %v3902
      %v3913 = vadd.f32 %v3698, %v3904
      %v3914 = vadd.f32 %v3699, %v3906
      %s3915 = scalar_lea.vmem %s1, 177
      %v3916 = vld [vmem:[%s3915] ss:$8 sm:$0x3]
      %v3918 = vlaneseq
      %v3919 = vshrl.u32 %v3918, 7
      %v3920 = vsub.s32 0, %v3919
      %v3921 = vrot.slane %v3916, %v3920
      %v3922 = vlaneseq
      %v3923 = vshrl.u32 %v3922, 7
      %v3924 = vsub.s32 1, %v3923
      %v3925 = vrot.slane %v3916, %v3924
      %v3928 = vmul.f32 %v3419, %v3921
      %v3929 = vmul.f32 %v3420, %v3925
      %v3930 = vmul.f32 %v3410, %v3921
      %v3931 = vmul.f32 %v3412, %v3925
      %v3932 = vmul.f32 %v3421, %v3921
      %v3933 = vmul.f32 %v3422, %v3925
      %v3940 = vrot.slane %v3928, 2
      %v3941 = vrot.slane %v3930, 2
      %v3942 = vsel %vm591, %v3940, %v3941
      %v3943 = vrot.slane %v3929, 2
      %v3944 = vrot.slane %v3931, 2
      %v3945 = vsel %vm591, %v3943, %v3944
      %v3946 = vrot.slane %v3932, 2
      %v3947 = vsel %vm591, %v3941, %v3946
      %v3948 = vrot.slane %v3933, 2
      %v3949 = vsel %vm591, %v3944, %v3948
      %v3954 = vadd.f32 %v3739, %v3942
      %v3955 = vadd.f32 %v3740, %v3945
      %v3956 = vadd.f32 %v3741, %v3947
      %v3957 = vadd.f32 %v3742, %v3949
      %s3958 = scalar_lea.vmem %s1, 178
      %v3959 = vld [vmem:[%s3958] ss:$8 sm:$0x3]
      %v3961 = vlaneseq
      %v3962 = vshrl.u32 %v3961, 7
      %v3963 = vsub.s32 0, %v3962
      %v3964 = vrot.slane %v3959, %v3963
      %v3965 = vlaneseq
      %v3966 = vshrl.u32 %v3965, 7
      %v3967 = vsub.s32 1, %v3966
      %v3968 = vrot.slane %v3959, %v3967
      %v3971 = vmul.f32 %v3419, %v3964
      %v3972 = vmul.f32 %v3420, %v3968
      %v3973 = vmul.f32 %v3410, %v3964
      %v3974 = vmul.f32 %v3412, %v3968
      %v3975 = vmul.f32 %v3421, %v3964
      %v3976 = vmul.f32 %v3422, %v3968
      %v3983 = vrot.slane %v3971, 3
      %v3984 = vrot.slane %v3973, 3
      %v3985 = vsel %vm807, %v3983, %v3984
      %v3986 = vrot.slane %v3972, 3
      %v3987 = vrot.slane %v3974, 3
      %v3988 = vsel %vm807, %v3986, %v3987
      %v3989 = vrot.slane %v3975, 3
      %v3990 = vsel %vm807, %v3984, %v3989
      %v3991 = vrot.slane %v3976, 3
      %v3992 = vsel %vm807, %v3987, %v3991
      %v3997 = vadd.f32 %v3782, %v3985
      %v3998 = vadd.f32 %v3783, %v3988
      %v3999 = vadd.f32 %v3784, %v3990
      %v4000 = vadd.f32 %v3785, %v3992
      %s4001 = scalar_lea.vmem %s1, 179
      %v4002 = vld [vmem:[%s4001] ss:$8 sm:$0x3]
      %v4004 = vlaneseq
      %v4005 = vshrl.u32 %v4004, 7
      %v4006 = vsub.s32 0, %v4005
      %v4007 = vrot.slane %v4002, %v4006
      %v4008 = vlaneseq
      %v4009 = vshrl.u32 %v4008, 7
      %v4010 = vsub.s32 1, %v4009
      %v4011 = vrot.slane %v4002, %v4010
      %v4014 = vmul.f32 %v3419, %v4007
      %v4015 = vmul.f32 %v3420, %v4011
      %v4016 = vmul.f32 %v3410, %v4007
      %v4017 = vmul.f32 %v3412, %v4011
      %v4018 = vmul.f32 %v3421, %v4007
      %v4019 = vmul.f32 %v3422, %v4011
      %v4026 = vrot.slane %v4014, 3
      %v4027 = vrot.slane %v4016, 3
      %v4028 = vsel %vm807, %v4026, %v4027
      %v4029 = vrot.slane %v4015, 3
      %v4030 = vrot.slane %v4017, 3
      %v4031 = vsel %vm807, %v4029, %v4030
      %v4032 = vrot.slane %v4018, 3
      %v4033 = vsel %vm807, %v4027, %v4032
      %v4034 = vrot.slane %v4019, 3
      %v4035 = vsel %vm807, %v4030, %v4034
      %v4040 = vadd.f32 %v3825, %v4028
      %v4041 = vadd.f32 %v3826, %v4031
      %v4042 = vadd.f32 %v3827, %v4033
      %v4043 = vadd.f32 %v3828, %v4035
      %s4044 = scalar_lea.vmem %s1, 180
      %v4045 = vld [vmem:[%s4044] ss:$8 sm:$0x3]
      %v4047 = vlaneseq
      %v4048 = vshrl.u32 %v4047, 7
      %v4049 = vsub.s32 0, %v4048
      %v4050 = vrot.slane %v4045, %v4049
      %v4051 = vlaneseq
      %v4052 = vshrl.u32 %v4051, 7
      %v4053 = vsub.s32 1, %v4052
      %v4054 = vrot.slane %v4045, %v4053
      %v4057 = vmul.f32 %v3419, %v4050
      %v4058 = vmul.f32 %v3420, %v4054
      %v4059 = vmul.f32 %v3410, %v4050
      %v4060 = vmul.f32 %v3412, %v4054
      %v4061 = vmul.f32 %v3421, %v4050
      %v4062 = vmul.f32 %v3422, %v4054
      %v4069 = vrot.slane %v4057, 3
      %v4070 = vrot.slane %v4059, 3
      %v4071 = vsel %vm807, %v4069, %v4070
      %v4072 = vrot.slane %v4058, 3
      %v4073 = vrot.slane %v4060, 3
      %v4074 = vsel %vm807, %v4072, %v4073
      %v4075 = vrot.slane %v4061, 3
      %v4076 = vsel %vm807, %v4070, %v4075
      %v4077 = vrot.slane %v4062, 3
      %v4078 = vsel %vm807, %v4073, %v4077
      %v4083 = vadd.f32 %v3868, %v4071
      %v4084 = vadd.f32 %v3869, %v4074
      %v4085 = vadd.f32 %v3870, %v4076
      %v4086 = vadd.f32 %v3871, %v4078
      %s4087 = scalar_lea.vmem %s1, 181
      %v4088 = vld [vmem:[%s4087] ss:$8 sm:$0x3]
      %v4090 = vlaneseq
      %v4091 = vshrl.u32 %v4090, 7
      %v4092 = vsub.s32 0, %v4091
      %v4093 = vrot.slane %v4088, %v4092
      %v4094 = vlaneseq
      %v4095 = vshrl.u32 %v4094, 7
      %v4096 = vsub.s32 1, %v4095
      %v4097 = vrot.slane %v4088, %v4096
      %v4100 = vmul.f32 %v3419, %v4093
      %v4101 = vmul.f32 %v3420, %v4097
      %v4102 = vmul.f32 %v3410, %v4093
      %v4103 = vmul.f32 %v3412, %v4097
      %v4104 = vmul.f32 %v3421, %v4093
      %v4105 = vmul.f32 %v3422, %v4097
      %v4112 = vrot.slane %v4100, 3
      %v4113 = vrot.slane %v4102, 3
      %v4114 = vsel %vm807, %v4112, %v4113
      %v4115 = vrot.slane %v4101, 3
      %v4116 = vrot.slane %v4103, 3
      %v4117 = vsel %vm807, %v4115, %v4116
      %v4118 = vrot.slane %v4104, 3
      %v4119 = vsel %vm807, %v4113, %v4118
      %v4120 = vrot.slane %v4105, 3
      %v4121 = vsel %vm807, %v4116, %v4120
      %v4126 = vadd.f32 %v3911, %v4114
      %v4127 = vadd.f32 %v3912, %v4117
      %v4128 = vadd.f32 %v3913, %v4119
      %v4129 = vadd.f32 %v3914, %v4121
      %s4130 = scalar_lea.vmem %s1, 182
      %v4131 = vld [vmem:[%s4130] ss:$8 sm:$0x3]
      %v4133 = vlaneseq
      %v4134 = vshrl.u32 %v4133, 7
      %v4135 = vsub.s32 0, %v4134
      %v4136 = vrot.slane %v4131, %v4135
      %v4137 = vlaneseq
      %v4138 = vshrl.u32 %v4137, 7
      %v4139 = vsub.s32 1, %v4138
      %v4140 = vrot.slane %v4131, %v4139
      %v4143 = vmul.f32 %v3419, %v4136
      %v4144 = vmul.f32 %v3420, %v4140
      %v4145 = vmul.f32 %v3410, %v4136
      %v4146 = vmul.f32 %v3412, %v4140
      %v4147 = vmul.f32 %v3421, %v4136
      %v4148 = vmul.f32 %v3422, %v4140
      %v4155 = vrot.slane %v4143, 3
      %v4156 = vrot.slane %v4145, 3
      %v4157 = vsel %vm807, %v4155, %v4156
      %v4158 = vrot.slane %v4144, 3
      %v4159 = vrot.slane %v4146, 3
      %v4160 = vsel %vm807, %v4158, %v4159
      %v4161 = vrot.slane %v4147, 3
      %v4162 = vsel %vm807, %v4156, %v4161
      %v4163 = vrot.slane %v4148, 3
      %v4164 = vsel %vm807, %v4159, %v4163
      %v4169 = vadd.f32 %v3954, %v4157
      %v4170 = vadd.f32 %v3955, %v4160
      %v4171 = vadd.f32 %v3956, %v4162
      %v4172 = vadd.f32 %v3957, %v4164
      %s4173 = scalar_lea.vmem %s1, 183
      %v4174 = vld [vmem:[%s4173] ss:$8 sm:$0x3]
      %v4176 = vlaneseq
      %v4177 = vshrl.u32 %v4176, 7
      %v4178 = vsub.s32 0, %v4177
      %v4179 = vrot.slane %v4174, %v4178
      %v4180 = vlaneseq
      %v4181 = vshrl.u32 %v4180, 7
      %v4182 = vsub.s32 1, %v4181
      %v4183 = vrot.slane %v4174, %v4182
      %v4186 = vmul.f32 %v3419, %v4179
      %v4187 = vmul.f32 %v3420, %v4183
      %v4188 = vmul.f32 %v3410, %v4179
      %v4189 = vmul.f32 %v3412, %v4183
      %v4190 = vmul.f32 %v3421, %v4179
      %v4191 = vmul.f32 %v3422, %v4183
      %v4198 = vrot.slane %v4186, 4
      %v4199 = vrot.slane %v4188, 4
      %v4200 = vsel %vm1023, %v4198, %v4199
      %v4201 = vrot.slane %v4187, 4
      %v4202 = vrot.slane %v4189, 4
      %v4203 = vsel %vm1023, %v4201, %v4202
      %v4204 = vrot.slane %v4190, 4
      %v4205 = vsel %vm1023, %v4199, %v4204
      %v4206 = vrot.slane %v4191, 4
      %v4207 = vsel %vm1023, %v4202, %v4206
      %v4212 = vadd.f32 %v3997, %v4200
      %v4213 = vadd.f32 %v3998, %v4203
      %v4214 = vadd.f32 %v3999, %v4205
      %v4215 = vadd.f32 %v4000, %v4207
      %s4216 = scalar_lea.vmem %s1, 192
      %v4217 = vld [vmem:[%s4216] ss:$8 sm:$0x3]
      %v4219 = vlaneseq
      %v4220 = vshrl.u32 %v4219, 7
      %v4221 = vsub.s32 0, %v4220
      %v4222 = vrot.slane %v4217, %v4221
      %v4223 = vlaneseq
      %v4224 = vshrl.u32 %v4223, 7
      %v4225 = vsub.s32 1, %v4224
      %v4226 = vrot.slane %v4217, %v4225
      %v4229 = vmul.f32 %v3419, %v4222
      %v4230 = vmul.f32 %v3420, %v4226
      %v4231 = vmul.f32 %v3410, %v4222
      %v4232 = vmul.f32 %v3412, %v4226
      %v4233 = vmul.f32 %v3421, %v4222
      %v4234 = vmul.f32 %v3422, %v4226
      %v4241 = vrot.slane %v4229, 4
      %v4242 = vrot.slane %v4231, 4
      %v4243 = vsel %vm1023, %v4241, %v4242
      %v4244 = vrot.slane %v4230, 4
      %v4245 = vrot.slane %v4232, 4
      %v4246 = vsel %vm1023, %v4244, %v4245
      %v4247 = vrot.slane %v4233, 4
      %v4248 = vsel %vm1023, %v4242, %v4247
      %v4249 = vrot.slane %v4234, 4
      %v4250 = vsel %vm1023, %v4245, %v4249
      %v4255 = vadd.f32 %v4040, %v4243
      %v4256 = vadd.f32 %v4041, %v4246
      %v4257 = vadd.f32 %v4042, %v4248
      %v4258 = vadd.f32 %v4043, %v4250
      %s4259 = scalar_lea.vmem %s1, 193
      %v4260 = vld [vmem:[%s4259] ss:$8 sm:$0x3]
      %v4262 = vlaneseq
      %v4263 = vshrl.u32 %v4262, 7
      %v4264 = vsub.s32 0, %v4263
      %v4265 = vrot.slane %v4260, %v4264
      %v4266 = vlaneseq
      %v4267 = vshrl.u32 %v4266, 7
      %v4268 = vsub.s32 1, %v4267
      %v4269 = vrot.slane %v4260, %v4268
      %v4272 = vmul.f32 %v3419, %v4265
      %v4273 = vmul.f32 %v3420, %v4269
      %v4274 = vmul.f32 %v3410, %v4265
      %v4275 = vmul.f32 %v3412, %v4269
      %v4276 = vmul.f32 %v3421, %v4265
      %v4277 = vmul.f32 %v3422, %v4269
      %v4284 = vrot.slane %v4272, 4
      %v4285 = vrot.slane %v4274, 4
      %v4286 = vsel %vm1023, %v4284, %v4285
      %v4287 = vrot.slane %v4273, 4
      %v4288 = vrot.slane %v4275, 4
      %v4289 = vsel %vm1023, %v4287, %v4288
      %v4290 = vrot.slane %v4276, 4
      %v4291 = vsel %vm1023, %v4285, %v4290
      %v4292 = vrot.slane %v4277, 4
      %v4293 = vsel %vm1023, %v4288, %v4292
      %v4298 = vadd.f32 %v4083, %v4286
      %v4299 = vadd.f32 %v4084, %v4289
      %v4300 = vadd.f32 %v4085, %v4291
      %v4301 = vadd.f32 %v4086, %v4293
      %s4302 = scalar_lea.vmem %s1, 194
      %v4303 = vld [vmem:[%s4302] ss:$8 sm:$0x3]
      %v4305 = vlaneseq
      %v4306 = vshrl.u32 %v4305, 7
      %v4307 = vsub.s32 0, %v4306
      %v4308 = vrot.slane %v4303, %v4307
      %v4309 = vlaneseq
      %v4310 = vshrl.u32 %v4309, 7
      %v4311 = vsub.s32 1, %v4310
      %v4312 = vrot.slane %v4303, %v4311
      %v4315 = vmul.f32 %v3419, %v4308
      %v4316 = vmul.f32 %v3420, %v4312
      %v4317 = vmul.f32 %v3410, %v4308
      %v4318 = vmul.f32 %v3412, %v4312
      %v4319 = vmul.f32 %v3421, %v4308
      %v4320 = vmul.f32 %v3422, %v4312
      %v4327 = vrot.slane %v4315, 4
      %v4328 = vrot.slane %v4317, 4
      %v4329 = vsel %vm1023, %v4327, %v4328
      %v4330 = vrot.slane %v4316, 4
      %v4331 = vrot.slane %v4318, 4
      %v4332 = vsel %vm1023, %v4330, %v4331
      %v4333 = vrot.slane %v4319, 4
      %v4334 = vsel %vm1023, %v4328, %v4333
      %v4335 = vrot.slane %v4320, 4
      %v4336 = vsel %vm1023, %v4331, %v4335
      %v4341 = vadd.f32 %v4126, %v4329
      %v4342 = vadd.f32 %v4127, %v4332
      %v4343 = vadd.f32 %v4128, %v4334
      %v4344 = vadd.f32 %v4129, %v4336
      %s4345 = scalar_lea.vmem %s1, 195
      %v4346 = vld [vmem:[%s4345] ss:$8 sm:$0x3]
      %v4348 = vlaneseq
      %v4349 = vshrl.u32 %v4348, 7
      %v4350 = vsub.s32 0, %v4349
      %v4351 = vrot.slane %v4346, %v4350
      %v4352 = vlaneseq
      %v4353 = vshrl.u32 %v4352, 7
      %v4354 = vsub.s32 1, %v4353
      %v4355 = vrot.slane %v4346, %v4354
      %v4358 = vmul.f32 %v3419, %v4351
      %v4359 = vmul.f32 %v3420, %v4355
      %v4360 = vmul.f32 %v3410, %v4351
      %v4361 = vmul.f32 %v3412, %v4355
      %v4362 = vmul.f32 %v3421, %v4351
      %v4363 = vmul.f32 %v3422, %v4355
      %v4370 = vrot.slane %v4358, 4
      %v4371 = vrot.slane %v4360, 4
      %v4372 = vsel %vm1023, %v4370, %v4371
      %v4373 = vrot.slane %v4359, 4
      %v4374 = vrot.slane %v4361, 4
      %v4375 = vsel %vm1023, %v4373, %v4374
      %v4376 = vrot.slane %v4362, 4
      %v4377 = vsel %vm1023, %v4371, %v4376
      %v4378 = vrot.slane %v4363, 4
      %v4379 = vsel %vm1023, %v4374, %v4378
      %v4384 = vadd.f32 %v4169, %v4372
      %v4385 = vadd.f32 %v4170, %v4375
      %v4386 = vadd.f32 %v4171, %v4377
      %v4387 = vadd.f32 %v4172, %v4379
      %4390 = vrot.lane.b32.xlu0 %v4255, 127
      %v4391 = vpop.permute.xlu0 %4390
      %4392 = vrot.lane.b32.xlu0 %v4257, 127
      %v4393 = vpop.permute.xlu0 %4392
      %v4396 = vadd.f32 %v4212, %v4391
      %v4397 = vadd.f32 %v4214, %v4393
      %4400 = vrot.lane.b32.xlu0 %v4298, 126
      %v4401 = vpop.permute.xlu0 %4400
      %4402 = vrot.lane.b32.xlu0 %v4300, 126
      %v4403 = vpop.permute.xlu0 %4402
      %v4406 = vadd.f32 %v4396, %v4401
      %v4407 = vadd.f32 %v4397, %v4403
      %4410 = vrot.lane.b32.xlu0 %v4341, 125
      %v4411 = vpop.permute.xlu0 %4410
      %4412 = vrot.lane.b32.xlu0 %v4343, 125
      %v4413 = vpop.permute.xlu0 %4412
      %v4416 = vadd.f32 %v4406, %v4411
      %v4417 = vadd.f32 %v4407, %v4413
      %4420 = vrot.lane.b32.xlu0 %v4384, 124
      %v4421 = vpop.permute.xlu0 %4420
      %4422 = vrot.lane.b32.xlu0 %v4386, 124
      %v4423 = vpop.permute.xlu0 %4422
      %v4426 = vadd.f32 %v4416, %v4421
      %v4427 = vadd.f32 %v4417, %v4423
      %4430 = vrot.lane.b32.xlu0 %v4256, 127
      %v4431 = vpop.permute.xlu0 %4430
      %4432 = vrot.lane.b32.xlu0 %v4258, 127
      %v4433 = vpop.permute.xlu0 %4432
      %vm4434 = vcmask 1039360
      %v4435 = vsel %vm4434, %v4391, %v4431
      %v4436 = vsel %vm4434, %v4393, %v4433
      %v4441 = vadd.f32 %v4212, %v4435
      %v4442 = vadd.f32 %v4213, %v4431
      %v4443 = vadd.f32 %v4214, %v4436
      %v4444 = vadd.f32 %v4215, %v4433
      %4447 = vrot.lane.b32.xlu0 %v4299, 126
      %v4448 = vpop.permute.xlu0 %4447
      %4449 = vrot.lane.b32.xlu0 %v4301, 126
      %v4450 = vpop.permute.xlu0 %4449
      %vm4451 = vcmask 1031168
      %v4452 = vsel %vm4451, %v4401, %v4448
      %v4453 = vsel %vm4451, %v4403, %v4450
      %v4458 = vadd.f32 %v4441, %v4452
      %v4459 = vadd.f32 %v4442, %v4448
      %v4460 = vadd.f32 %v4443, %v4453
      %v4461 = vadd.f32 %v4444, %v4450
      %4464 = vrot.lane.b32.xlu0 %v4342, 125
      %v4465 = vpop.permute.xlu0 %4464
      %4466 = vrot.lane.b32.xlu0 %v4344, 125
      %v4467 = vpop.permute.xlu0 %4466
      %vm4468 = vcmask 1022976
      %v4469 = vsel %vm4468, %v4411, %v4465
      %v4470 = vsel %vm4468, %v4413, %v4467
      %v4475 = vadd.f32 %v4458, %v4469
      %v4476 = vadd.f32 %v4459, %v4465
      %v4477 = vadd.f32 %v4460, %v4470
      %v4478 = vadd.f32 %v4461, %v4467
      %4481 = vrot.lane.b32.xlu0 %v4385, 124
      %v4482 = vpop.permute.xlu0 %4481
      %4483 = vrot.lane.b32.xlu0 %v4387, 124
      %v4484 = vpop.permute.xlu0 %4483
      %vm4485 = vcmask 1014784
      %v4486 = vsel %vm4485, %v4421, %v4482
      %v4487 = vsel %vm4485, %v4423, %v4484
      %v4492 = vadd.f32 %v4475, %v4486
      %v4493 = vadd.f32 %v4476, %v4482
      %v4494 = vadd.f32 %v4477, %v4487
      %v4495 = vadd.f32 %v4478, %v4484
      %4498 = vrot.lane.b32.xlu0 %v4426, 124
      %v4499 = vpop.permute.xlu0 %4498
      %4500 = vrot.lane.b32.xlu0 %v4427, 124
      %v4501 = vpop.permute.xlu0 %4500
      %4504 = vrot.lane.b32.xlu0 %v4426, 120
      %v4505 = vpop.permute.xlu0 %4504
      %4506 = vrot.lane.b32.xlu0 %v4427, 120
      %v4507 = vpop.permute.xlu0 %4506
      %4510 = vrot.lane.b32.xlu0 %v4426, 116
      %v4511 = vpop.permute.xlu0 %4510
      %4512 = vrot.lane.b32.xlu0 %v4427, 116
      %v4513 = vpop.permute.xlu0 %4512
      %4516 = vrot.lane.b32.xlu0 %v4426, 112
      %v4517 = vpop.permute.xlu0 %4516
      %4518 = vrot.lane.b32.xlu0 %v4427, 112
      %v4519 = vpop.permute.xlu0 %4518
      %4522 = vrot.lane.b32.xlu0 %v4426, 108
      %v4523 = vpop.permute.xlu0 %4522
      %4524 = vrot.lane.b32.xlu0 %v4427, 108
      %v4525 = vpop.permute.xlu0 %4524
      %4532 = vrot.lane.b32.xlu0 %v4492, 104
      %v4533 = vpop.permute.xlu0 %4532
      %4534 = vrot.lane.b32.xlu0 %v4493, 104
      %v4535 = vpop.permute.xlu0 %4534
      %4536 = vrot.lane.b32.xlu0 %v4494, 104
      %v4537 = vpop.permute.xlu0 %4536
      %4538 = vrot.lane.b32.xlu0 %v4495, 104
      %v4539 = vpop.permute.xlu0 %4538
      %vm4540 = vcmask 850944
      %v4541 = vsel %vm4540, %v4533, %v4535
      %v4542 = vsel %vm4540, %v4537, %v4539
      %4545 = vrot.lane.b32.xlu0 %v4493, 100
      %v4546 = vpop.permute.xlu0 %4545
      %4547 = vrot.lane.b32.xlu0 %v4495, 100
      %v4548 = vpop.permute.xlu0 %4547
      %vm4551 = vcmask 130048
      %v4552 = vsel %vm4551, %v4426, %v4499
      %v4553 = vsel %vm4551, %v4427, %v4501
      %vm4554 = vcmask 261120
      %v4555 = vsel %vm4554, %v4552, %v4505
      %v4556 = vsel %vm4554, %v4553, %v4507
      %vm4557 = vcmask 392192
      %v4558 = vsel %vm4557, %v4555, %v4511
      %v4559 = vsel %vm4557, %v4556, %v4513
      %vm4560 = vcmask 523264
      %v4561 = vsel %vm4560, %v4558, %v4517
      %v4562 = vsel %vm4560, %v4559, %v4519
      %v4563 = vsel %vm213, %v4561, %v4523
      %v4564 = vsel %vm213, %v4562, %v4525
      %vm4565 = vcmask 785408
      %v4566 = vsel %vm4565, %v4563, %v4541
      %v4567 = vsel %vm4565, %v4564, %v4542
      %vm4568 = vcmask 916480
      %v4569 = vsel %vm4568, %v4566, %v4546
      %v4570 = vsel %vm4568, %v4567, %v4548
      %4571 = vst [vmem:[%s143] sm:$0xff] %v4569
      %4572 = vst [vmem:[%s143 + $0x8] sm:$0xff] %v4570
      %p4573 = scmp.lt.s32.totalorder %s13, 1
      %s4574 = scalar_select %p4573, %s13, 1
      %s4575 = smul.addr %s4574, 2
      %s4576 = smul.addr %s4575, 8
      %s4577 = scalar_lea.vmem %s2, %s4576
      // Predicated region
      $region29: #{gabor_layer_forward.1} parent=27 // pred_check
        %p4578 = pneg %p78
      $region30: #{gabor_layer_forward.1} parent=27 // pred_check_branch
        %4580 = sbr.rel (%p4578) target = $region32
      $region31: #{gabor_layer_forward.1} parent=27 // pred_region
        _
      $region32: #{gabor_layer_forward.1} parent=27 // pred_fallthru
        _
    $region28: #{gabor_layer_forward.1} parent=5 // pred_fallthru
      _
    %p4581 = scmp.le.s32.totalorder 2, %s8
    // Predicated region
    $region33: #{gabor_layer_forward.1} parent=5 // pred_check
      %p4582 = pneg %p4581
    $region34: #{gabor_layer_forward.1} parent=5 // pred_check_branch
      %4584 = sbr.rel (%p4582) target = $region36
    $region35: #{gabor_layer_forward.1} parent=5 // pred_region
      %s4585 = ssub.s32 %s8, 2
      // Predicated region
      $region37: #{gabor_layer_forward.1} parent=35 // pred_check
        %p4586 = pneg %p84
      $region38: #{gabor_layer_forward.1} parent=35 // pred_check_branch
        %4588 = sbr.rel (%p4586) target = $region40
      $region39: #{gabor_layer_forward.1} parent=35 // pred_region
        %p4589 = scmp.lt.s32.totalorder %s14, 1
        %s4590 = scalar_select %p4589, %s14, 1
        %s4591 = smul.addr %s4590, 2
        %s4592 = smul.addr %s4591, 8
        %s4593 = scalar_lea.vmem %s2, %s4592
      $region40: #{gabor_layer_forward.1} parent=35 // pred_fallthru
        _
    $region36: #{gabor_layer_forward.1} parent=5 // pred_fallthru
      _
  $region6: #{gabor_layer_forward.1} parent=0 // loop_footer
    %s12 = sadd.s32 1, %s8
  $region7: #{gabor_layer_forward.1} parent=0 // loop_footer_branch
    %7 = sbr.rel target = $region3
  $region8: #{gabor_layer_forward.1} parent=0 // loop_exit
    _

</llo_original>
